<compile_context>
chip_gen: v7x
topology: tpu7x:2x2x1
jax: 0.10.0
libtpu: 0.0.40
codegen_flags: <defaults>
</compile_context>

<pallas_src>
import functools

import jax
import jax.numpy as jnp
from jax.experimental import pallas as pl
from jax.experimental.pallas import tpu as pltpu


def _block_kernel(x_ref, w_ref, o_ref, acc_ref, *, tap_offs, Mext, MB, Cin,
                  PWt, OW, count, eps, slope, fold):
    # x_ref  : (1, s*s*Lflat, Cin)  bf16  flattened phase-decomposed input
    # w_ref  : (K*K*Cin, CT)        bf16  conv weight, tap-major rows
    # o_ref  : (1, Mext, CT)        bf16  InstanceNorm + LeakyReLU output
    # acc_ref: (Mext, CT)           f32   VMEM scratch conv accumulator
    n_chunks = -(-Mext // MB)
    for c in range(n_chunks):
        m0 = c * MB
        ml = min(MB, Mext - m0)
        if fold:
            # Fold all K*K taps into the contraction dim: one MXU GEMM with
            # contraction = K*K*Cin (accumulation never leaves the MXU).
            lhs = jnp.concatenate(
                [x_ref[0, off + m0:off + m0 + ml, :] for off in tap_offs],
                axis=-1)                                    # (ml, K*K*Cin) bf16
            acc_ref[m0:m0 + ml, :] = jnp.dot(
                lhs, w_ref[...], preferred_element_type=jnp.float32)
        else:
            # Lane-unaligned Cin: per-tap dots, accumulated in a VMEM f32
            # scratch ref (bf16 operands, no f32 detour).
            for t, off in enumerate(tap_offs):
                piece = x_ref[0, off + m0:off + m0 + ml, :]     # (ml, Cin) bf16
                contrib = jnp.dot(piece, w_ref[t * Cin:(t + 1) * Cin, :],
                                  preferred_element_type=jnp.float32)
                if t == 0:
                    acc_ref[m0:m0 + ml, :] = contrib
                else:
                    acc_ref[m0:m0 + ml, :] += contrib

    acc = acc_ref[...]                                          # (Mext, CT) f32

    # InstanceNorm2d (affine=False): per-channel stats over the OH*OW valid
    # positions only (right-edge "extended" columns are masked out).
    pos = jax.lax.broadcasted_iota(jnp.int32, (Mext, 1), 0)
    valid = (pos % PWt) < OW
    inv_cnt = 1.0 / count
    mean = jnp.sum(jnp.where(valid, acc, 0.0), axis=0, keepdims=True) * inv_cnt
    cen = acc - mean
    var = jnp.sum(jnp.where(valid, cen * cen, 0.0), axis=0,
                  keepdims=True) * inv_cnt                      # biased variance
    yn = cen * jax.lax.rsqrt(var + eps)

    # LeakyReLU(0.2); store bf16 (lane-dense CT-wide tile).
    o_ref[0] = jnp.where(yn >= 0, yn, slope * yn).astype(o_ref.dtype)


def _pick_ct(cout):
    if cout <= 128:
        return 128
    try:
        kind = jax.devices()[0].device_kind.lower()
    except Exception:
        kind = ""
    # v6e / v7x MXU is 256 wide in N; v5e and older are 128.
    if any(t in kind for t in ("v6", "v7", "7x")):
        return 256
    return 128


def block_forward(x, weight, bias, stride):
    """x: (N, Cin, H, W) f32.  weight: (Cout, Cin, 4, 4).  bias: (Cout,) unused.

    Returns (N, Cout, OH, OW) f32 in NCHW to match the PyTorch module.
    """
    del bias  # exactly cancelled by InstanceNorm2d(affine=False) mean-subtract
    N, Cin, H, W = x.shape
    Cout, Cin_w, K, KW = weight.shape
    assert Cin_w == Cin and K == KW == 4
    s = int(stride)
    pad = 1

    Hp, Wp = H + 2 * pad, W + 2 * pad
    OH = (Hp - K) // s + 1
    OW = (Wp - K) // s + 1
    assert OH >= 1 and OW >= 1
    # Valid outputs must never read synthetic zero padding of the phase planes.
    assert (OH - 1) * s + (K - 1) <= Hp - 1 and (OW - 1) * s + (K - 1) <= Wp - 1

    R = (K - 1) // s                  # max intra-phase tap offset
    PHt = OH + R + 1                  # +1 zero row keeps every tap slice in-bounds
    PWt = OW + R                      # R garbage columns per extended-output row
    Lflat = PHt * PWt
    Mext = OH * PWt                   # extended-output rows per batch element
    S2L = s * s * Lflat

    # ---- host prep: NCHW->NHWC, reflect pad, space-to-depth, flatten --------
    x_nhwc = jnp.transpose(x, (0, 2, 3, 1))
    x_p = jnp.pad(x_nhwc, ((0, 0), (pad, pad), (pad, pad), (0, 0)),
                  mode="reflect")
    PH0, PW0 = -(-Hp // s), -(-Wp // s)
    x_p = jnp.pad(x_p, ((0, 0), (0, PH0 * s - Hp), (0, PW0 * s - Wp), (0, 0)))
    xph = x_p.reshape(N, PH0, s, PW0, s, Cin).transpose(0, 2, 4, 1, 3, 5)
    ch, cw = min(PHt, PH0), min(PWt, PW0)
    xph = xph[:, :, :, :ch, :cw, :]
    xph = jnp.pad(xph, ((0, 0), (0, 0), (0, 0),
                        (0, PHt - ch), (0, PWt - cw), (0, 0)))
    xph = xph.reshape(N, S2L, Cin).astype(jnp.bfloat16)

    # ---- weight: (Cout, Cin, K, K) -> (K*K*Cin, Cout_pad) bf16, tap-major ---
    CT = _pick_ct(Cout)
    Cout_pad = -(-Cout // CT) * CT
    n_ct = Cout_pad // CT
    w_flat = jnp.transpose(weight, (2, 3, 1, 0)).reshape(K * K * Cin, Cout)
    w_flat = jnp.pad(w_flat, ((0, 0), (0, Cout_pad - Cout))).astype(jnp.bfloat16)

    # Static row offset in the flat phase buffer for each tap (kh, kw).
    tap_offs = tuple((((kh % s) * s + (kw % s)) * Lflat
                      + (kh // s) * PWt + (kw // s))
                     for kh in range(K) for kw in range(K))

    fold = (Cin % 128 == 0)           # lane-aligned -> single-GEMM tap fold
    mb_cap = max(128, (4 << 20) // (K * K * Cin * 2)) if fold else 2048
    MB = Mext if Mext <= mb_cap else (mb_cap // 8) * 8

    kernel = functools.partial(
        _block_kernel, tap_offs=tap_offs, Mext=Mext, MB=MB, Cin=Cin, PWt=PWt,
        OW=OW, count=float(OH * OW), eps=1e-5, slope=0.2, fold=fold)

    # Keep the larger reusable operand resident across consecutive grid steps:
    # fastest (last) grid axis is the one that operand does NOT depend on.
    x_blk = S2L * Cin * 2
    w_blk = K * K * Cin * CT * 2
    if x_blk >= w_blk:
        grid = (N, n_ct)
        x_map = lambda n, j: (n, 0, 0)
        w_map = lambda n, j: (0, j)
        o_map = lambda n, j: (n, 0, j)
    else:
        grid = (n_ct, N)
        x_map = lambda j, n: (n, 0, 0)
        w_map = lambda j, n: (0, j)
        o_map = lambda j, n: (n, 0, j)

    o_blk = Mext * CT * 2
    lhs_blk = MB * (K * K * Cin if fold else Cin) * 2
    vmem_need = 2 * (x_blk + w_blk + o_blk) + Mext * CT * 4 + lhs_blk + (1 << 20)
    vmem_limit = int(min(vmem_need, 100 << 20)) if vmem_need > (32 << 20) else None

    flops = 2 * N * OH * OW * K * K * Cin * Cout
    bytes_accessed = N * S2L * Cin * 2 + K * K * Cin * Cout_pad * 2 \
        + N * Mext * Cout_pad * 2

    out_flat = pl.pallas_call(
        kernel,
        out_shape=jax.ShapeDtypeStruct((N, Mext, Cout_pad), jnp.bfloat16),
        grid_spec=pltpu.PrefetchScalarGridSpec(
            num_scalar_prefetch=0,
            grid=grid,
            in_specs=[
                pl.BlockSpec((1, S2L, Cin), x_map),
                pl.BlockSpec((K * K * Cin, CT), w_map),
            ],
            out_specs=pl.BlockSpec((1, Mext, CT), o_map),
            scratch_shapes=[pltpu.VMEM((Mext, CT), jnp.float32)],
        ),
        compiler_params=pltpu.CompilerParams(
            dimension_semantics=("parallel", "parallel"),
            vmem_limit_bytes=vmem_limit),
        cost_estimate=pl.CostEstimate(flops=flops, transcendentals=0,
                                      bytes_accessed=bytes_accessed),
    )(xph, w_flat)

    # Drop garbage columns and channel lane-padding; back to NCHW f32 only at
    # the module boundary (stacked Blocks could consume bf16 channels-last).
    out = out_flat.reshape(N, OH, PWt, Cout_pad)[:, :, :OW, :Cout]
    return jnp.transpose(out, (0, 3, 1, 2)).astype(jnp.float32)


def _reference(x, weight, bias, stride):
    """Pure-JAX f32 reference mirroring the PyTorch module."""
    x_p = jnp.pad(x, ((0, 0), (0, 0), (1, 1), (1, 1)), mode="reflect")
    y = jax.lax.conv_general_dilated(
        x_p, weight, window_strides=(stride, stride), padding="VALID",
        dimension_numbers=("NCHW", "OIHW", "NCHW"))
    y = y + bias[None, :, None, None]
    mean = y.mean(axis=(2, 3), keepdims=True)
    var = ((y - mean) ** 2).mean(axis=(2, 3), keepdims=True)
    y = (y - mean) * jax.lax.rsqrt(var + 1e-5)
    return jnp.where(y >= 0, y, 0.2 * y)


if __name__ == "__main__":
    key = jax.random.PRNGKey(0)
    k_x, k_w, k_b = jax.random.split(key, 3)

    N, Cin, H, W = 2, 4, 16, 16
    Cout = 8
    stride = 2

    x = jax.random.normal(k_x, (N, Cin, H, W), dtype=jnp.float32)
    fan_in = Cin * 4 * 4
    bound = 1.0 / (fan_in ** 0.5)
    weight = jax.random.uniform(k_w, (Cout, Cin, 4, 4), jnp.float32, -bound, bound)
    bias = jax.random.uniform(k_b, (Cout,), jnp.float32, -bound, bound)

    fwd = jax.jit(block_forward, static_argnums=(3,))
    out = fwd(x, weight, bias, stride)
    jax.block_until_ready(out)
    assert out.shape == (N, Cout, 8, 8)
    assert bool(jnp.all(jnp.isfinite(out)))

    ref = _reference(x, weight, bias, stride)
    err = float(jnp.max(jnp.abs(out - ref)))
    assert err < 0.1, f"max abs error vs reference too large: {err}"
    print("KERNEL_OK")
</pallas_src>

<mosaic_0001>
module attributes {stable_mosaic.version = 11 : i64} {
  func.func @_block_kernel(%arg0: i32, %arg1: i32, %arg2: memref<1x360x4xbf16, #tpu.memory_space<vmem>>, %arg3: memref<64x128xbf16, #tpu.memory_space<vmem>>, %arg4: memref<1x72x128xbf16, #tpu.memory_space<vmem>>, %arg5: memref<72x128xf32, #tpu.memory_space<vmem>>) attributes {dimension_semantics = [#tpu.dimension_semantics<parallel>, #tpu.dimension_semantics<parallel>], iteration_bounds = array<i64: 1, 2>, scalar_prefetch = 0 : i64, scratch_operands = 1 : i64, tpu.core_type = #tpu.core_type<tc>, window_params = [{transform_indices = @transform_0, window_bounds = array<i64: 1, 360, 4>}, {transform_indices = @transform_1, window_bounds = array<i64: 64, 128>}, {transform_indices = @transform_2, window_bounds = array<i64: 1, 72, 128>}]} {
    %c0 = arith.constant 0 : index
    %c0_0 = arith.constant 0 : index
    %c0_1 = arith.constant 0 : index
    %0 = vector.load %arg2[%c0, %c0_0, %c0_1] : memref<1x360x4xbf16, #tpu.memory_space<vmem>>, vector<1x72x4xbf16>
    %1 = vector.shape_cast %0 : vector<1x72x4xbf16> to vector<72x4xbf16>
    %c0_2 = arith.constant 0 : index
    %c0_3 = arith.constant 0 : index
    %2 = vector.load %arg3[%c0_2, %c0_3] : memref<64x128xbf16, #tpu.memory_space<vmem>>, vector<4x128xbf16>
    %cst = arith.constant dense<0.000000e+00> : vector<72x128xf32>
    %3 = tpu.matmul %1, %2, %cst {dimension_numbers = #tpu.dot_dimension_numbers<[1], [0], [0], [1], [0, 0, 1, 1], [], []>} : vector<72x4xbf16>, vector<4x128xbf16>, vector<72x128xf32> -> vector<72x128xf32>
    %c0_4 = arith.constant 0 : index
    %c0_5 = arith.constant 0 : index
    %4 = vector.load %arg5[%c0_4, %c0_5] : memref<72x128xf32, #tpu.memory_space<vmem>>, vector<72x128xf32>
    tpu.vector_store %arg5[%c0_4, %c0_5], %3 {strides = array<i32>} : memref<72x128xf32, #tpu.memory_space<vmem>>, vector<72x128xf32>,
    %c0_6 = arith.constant 0 : index
    %c90 = arith.constant 90 : index
    %c0_7 = arith.constant 0 : index
    %5 = vector.load %arg2[%c0_6, %c90, %c0_7] : memref<1x360x4xbf16, #tpu.memory_space<vmem>>, vector<1x72x4xbf16>
    %6 = vector.shape_cast %5 : vector<1x72x4xbf16> to vector<72x4xbf16>
    %c4 = arith.constant 4 : index
    %c0_8 = arith.constant 0 : index
    %7 = vector.load %arg3[%c4, %c0_8] : memref<64x128xbf16, #tpu.memory_space<vmem>>, vector<4x128xbf16>
    %cst_9 = arith.constant dense<0.000000e+00> : vector<72x128xf32>
    %8 = tpu.matmul %6, %7, %cst_9 {dimension_numbers = #tpu.dot_dimension_numbers<[1], [0], [0], [1], [0, 0, 1, 1], [], []>} : vector<72x4xbf16>, vector<4x128xbf16>, vector<72x128xf32> -> vector<72x128xf32>
    %c0_10 = arith.constant 0 : index
    %c0_11 = arith.constant 0 : index
    %9 = vector.load %arg5[%c0_10, %c0_11] : memref<72x128xf32, #tpu.memory_space<vmem>>, vector<72x128xf32>
    %10 = arith.addf %9, %8 : vector<72x128xf32>
    %c0_12 = arith.constant 0 : index
    %c0_13 = arith.constant 0 : index
    %11 = vector.load %arg5[%c0_12, %c0_13] : memref<72x128xf32, #tpu.memory_space<vmem>>, vector<72x128xf32>
    tpu.vector_store %arg5[%c0_12, %c0_13], %10 {strides = array<i32>} : memref<72x128xf32, #tpu.memory_space<vmem>>, vector<72x128xf32>,
    %c0_14 = arith.constant 0 : index
    %c1 = arith.constant 1 : index
    %c0_15 = arith.constant 0 : index
    %12 = vector.load %arg2[%c0_14, %c1, %c0_15] : memref<1x360x4xbf16, #tpu.memory_space<vmem>>, vector<1x72x4xbf16>
    %13 = vector.shape_cast %12 : vector<1x72x4xbf16> to vector<72x4xbf16>
    %c8 = arith.constant 8 : index
    %c0_16 = arith.constant 0 : index
    %14 = vector.load %arg3[%c8, %c0_16] : memref<64x128xbf16, #tpu.memory_space<vmem>>, vector<4x128xbf16>
    %cst_17 = arith.constant dense<0.000000e+00> : vector<72x128xf32>
    %15 = tpu.matmul %13, %14, %cst_17 {dimension_numbers = #tpu.dot_dimension_numbers<[1], [0], [0], [1], [0, 0, 1, 1], [], []>} : vector<72x4xbf16>, vector<4x128xbf16>, vector<72x128xf32> -> vector<72x128xf32>
    %c0_18 = arith.constant 0 : index
    %c0_19 = arith.constant 0 : index
    %16 = vector.load %arg5[%c0_18, %c0_19] : memref<72x128xf32, #tpu.memory_space<vmem>>, vector<72x128xf32>
    %17 = arith.addf %16, %15 : vector<72x128xf32>
    %c0_20 = arith.constant 0 : index
    %c0_21 = arith.constant 0 : index
    %18 = vector.load %arg5[%c0_20, %c0_21] : memref<72x128xf32, #tpu.memory_space<vmem>>, vector<72x128xf32>
    tpu.vector_store %arg5[%c0_20, %c0_21], %17 {strides = array<i32>} : memref<72x128xf32, #tpu.memory_space<vmem>>, vector<72x128xf32>,
    %c0_22 = arith.constant 0 : index
    %c91 = arith.constant 91 : index
    %c0_23 = arith.constant 0 : index
    %19 = vector.load %arg2[%c0_22, %c91, %c0_23] : memref<1x360x4xbf16, #tpu.memory_space<vmem>>, vector<1x72x4xbf16>
    %20 = vector.shape_cast %19 : vector<1x72x4xbf16> to vector<72x4xbf16>
    %c12 = arith.constant 12 : index
    %c0_24 = arith.constant 0 : index
    %21 = vector.load %arg3[%c12, %c0_24] : memref<64x128xbf16, #tpu.memory_space<vmem>>, vector<4x128xbf16>
    %cst_25 = arith.constant dense<0.000000e+00> : vector<72x128xf32>
    %22 = tpu.matmul %20, %21, %cst_25 {dimension_numbers = #tpu.dot_dimension_numbers<[1], [0], [0], [1], [0, 0, 1, 1], [], []>} : vector<72x4xbf16>, vector<4x128xbf16>, vector<72x128xf32> -> vector<72x128xf32>
    %c0_26 = arith.constant 0 : index
    %c0_27 = arith.constant 0 : index
    %23 = vector.load %arg5[%c0_26, %c0_27] : memref<72x128xf32, #tpu.memory_space<vmem>>, vector<72x128xf32>
    %24 = arith.addf %23, %22 : vector<72x128xf32>
    %c0_28 = arith.constant 0 : index
    %c0_29 = arith.constant 0 : index
    %25 = vector.load %arg5[%c0_28, %c0_29] : memref<72x128xf32, #tpu.memory_space<vmem>>, vector<72x128xf32>
    tpu.vector_store %arg5[%c0_28, %c0_29], %24 {strides = array<i32>} : memref<72x128xf32, #tpu.memory_space<vmem>>, vector<72x128xf32>,
    %c0_30 = arith.constant 0 : index
    %c180 = arith.constant 180 : index
    %c0_31 = arith.constant 0 : index
    %26 = vector.load %arg2[%c0_30, %c180, %c0_31] : memref<1x360x4xbf16, #tpu.memory_space<vmem>>, vector<1x72x4xbf16>
    %27 = vector.shape_cast %26 : vector<1x72x4xbf16> to vector<72x4xbf16>
    %c16 = arith.constant 16 : index
    %c0_32 = arith.constant 0 : index
    %28 = vector.load %arg3[%c16, %c0_32] : memref<64x128xbf16, #tpu.memory_space<vmem>>, vector<4x128xbf16>
    %cst_33 = arith.constant dense<0.000000e+00> : vector<72x128xf32>
    %29 = tpu.matmul %27, %28, %cst_33 {dimension_numbers = #tpu.dot_dimension_numbers<[1], [0], [0], [1], [0, 0, 1, 1], [], []>} : vector<72x4xbf16>, vector<4x128xbf16>, vector<72x128xf32> -> vector<72x128xf32>
    %c0_34 = arith.constant 0 : index
    %c0_35 = arith.constant 0 : index
    %30 = vector.load %arg5[%c0_34, %c0_35] : memref<72x128xf32, #tpu.memory_space<vmem>>, vector<72x128xf32>
    %31 = arith.addf %30, %29 : vector<72x128xf32>
    %c0_36 = arith.constant 0 : index
    %c0_37 = arith.constant 0 : index
    %32 = vector.load %arg5[%c0_36, %c0_37] : memref<72x128xf32, #tpu.memory_space<vmem>>, vector<72x128xf32>
    tpu.vector_store %arg5[%c0_36, %c0_37], %31 {strides = array<i32>} : memref<72x128xf32, #tpu.memory_space<vmem>>, vector<72x128xf32>,
    %c0_38 = arith.constant 0 : index
    %c270 = arith.constant 270 : index
    %c0_39 = arith.constant 0 : index
    %33 = vector.load %arg2[%c0_38, %c270, %c0_39] : memref<1x360x4xbf16, #tpu.memory_space<vmem>>, vector<1x72x4xbf16>
    %34 = vector.shape_cast %33 : vector<1x72x4xbf16> to vector<72x4xbf16>
    %c20 = arith.constant 20 : index
    %c0_40 = arith.constant 0 : index
    %35 = vector.load %arg3[%c20, %c0_40] : memref<64x128xbf16, #tpu.memory_space<vmem>>, vector<4x128xbf16>
    %cst_41 = arith.constant dense<0.000000e+00> : vector<72x128xf32>
    %36 = tpu.matmul %34, %35, %cst_41 {dimension_numbers = #tpu.dot_dimension_numbers<[1], [0], [0], [1], [0, 0, 1, 1], [], []>} : vector<72x4xbf16>, vector<4x128xbf16>, vector<72x128xf32> -> vector<72x128xf32>
    %c0_42 = arith.constant 0 : index
    %c0_43 = arith.constant 0 : index
    %37 = vector.load %arg5[%c0_42, %c0_43] : memref<72x128xf32, #tpu.memory_space<vmem>>, vector<72x128xf32>
    %38 = arith.addf %37, %36 : vector<72x128xf32>
    %c0_44 = arith.constant 0 : index
    %c0_45 = arith.constant 0 : index
    %39 = vector.load %arg5[%c0_44, %c0_45] : memref<72x128xf32, #tpu.memory_space<vmem>>, vector<72x128xf32>
    tpu.vector_store %arg5[%c0_44, %c0_45], %38 {strides = array<i32>} : memref<72x128xf32, #tpu.memory_space<vmem>>, vector<72x128xf32>,
    %c0_46 = arith.constant 0 : index
    %c181 = arith.constant 181 : index
    %c0_47 = arith.constant 0 : index
    %40 = vector.load %arg2[%c0_46, %c181, %c0_47] : memref<1x360x4xbf16, #tpu.memory_space<vmem>>, vector<1x72x4xbf16>
    %41 = vector.shape_cast %40 : vector<1x72x4xbf16> to vector<72x4xbf16>
    %c24 = arith.constant 24 : index
    %c0_48 = arith.constant 0 : index
    %42 = vector.load %arg3[%c24, %c0_48] : memref<64x128xbf16, #tpu.memory_space<vmem>>, vector<4x128xbf16>
    %cst_49 = arith.constant dense<0.000000e+00> : vector<72x128xf32>
    %43 = tpu.matmul %41, %42, %cst_49 {dimension_numbers = #tpu.dot_dimension_numbers<[1], [0], [0], [1], [0, 0, 1, 1], [], []>} : vector<72x4xbf16>, vector<4x128xbf16>, vector<72x128xf32> -> vector<72x128xf32>
    %c0_50 = arith.constant 0 : index
    %c0_51 = arith.constant 0 : index
    %44 = vector.load %arg5[%c0_50, %c0_51] : memref<72x128xf32, #tpu.memory_space<vmem>>, vector<72x128xf32>
    %45 = arith.addf %44, %43 : vector<72x128xf32>
    %c0_52 = arith.constant 0 : index
    %c0_53 = arith.constant 0 : index
    %46 = vector.load %arg5[%c0_52, %c0_53] : memref<72x128xf32, #tpu.memory_space<vmem>>, vector<72x128xf32>
    tpu.vector_store %arg5[%c0_52, %c0_53], %45 {strides = array<i32>} : memref<72x128xf32, #tpu.memory_space<vmem>>, vector<72x128xf32>,
    %c0_54 = arith.constant 0 : index
    %c271 = arith.constant 271 : index
    %c0_55 = arith.constant 0 : index
    %47 = vector.load %arg2[%c0_54, %c271, %c0_55] : memref<1x360x4xbf16, #tpu.memory_space<vmem>>, vector<1x72x4xbf16>
    %48 = vector.shape_cast %47 : vector<1x72x4xbf16> to vector<72x4xbf16>
    %c28 = arith.constant 28 : index
    %c0_56 = arith.constant 0 : index
    %49 = vector.load %arg3[%c28, %c0_56] : memref<64x128xbf16, #tpu.memory_space<vmem>>, vector<4x128xbf16>
    %cst_57 = arith.constant dense<0.000000e+00> : vector<72x128xf32>
    %50 = tpu.matmul %48, %49, %cst_57 {dimension_numbers = #tpu.dot_dimension_numbers<[1], [0], [0], [1], [0, 0, 1, 1], [], []>} : vector<72x4xbf16>, vector<4x128xbf16>, vector<72x128xf32> -> vector<72x128xf32>
    %c0_58 = arith.constant 0 : index
    %c0_59 = arith.constant 0 : index
    %51 = vector.load %arg5[%c0_58, %c0_59] : memref<72x128xf32, #tpu.memory_space<vmem>>, vector<72x128xf32>
    %52 = arith.addf %51, %50 : vector<72x128xf32>
    %c0_60 = arith.constant 0 : index
    %c0_61 = arith.constant 0 : index
    %53 = vector.load %arg5[%c0_60, %c0_61] : memref<72x128xf32, #tpu.memory_space<vmem>>, vector<72x128xf32>
    tpu.vector_store %arg5[%c0_60, %c0_61], %52 {strides = array<i32>} : memref<72x128xf32, #tpu.memory_space<vmem>>, vector<72x128xf32>,
    %c0_62 = arith.constant 0 : index
    %c9 = arith.constant 9 : index
    %c0_63 = arith.constant 0 : index
    %54 = vector.load %arg2[%c0_62, %c9, %c0_63] : memref<1x360x4xbf16, #tpu.memory_space<vmem>>, vector<1x72x4xbf16>
    %55 = vector.shape_cast %54 : vector<1x72x4xbf16> to vector<72x4xbf16>
    %c32 = arith.constant 32 : index
    %c0_64 = arith.constant 0 : index
    %56 = vector.load %arg3[%c32, %c0_64] : memref<64x128xbf16, #tpu.memory_space<vmem>>, vector<4x128xbf16>
    %cst_65 = arith.constant dense<0.000000e+00> : vector<72x128xf32>
    %57 = tpu.matmul %55, %56, %cst_65 {dimension_numbers = #tpu.dot_dimension_numbers<[1], [0], [0], [1], [0, 0, 1, 1], [], []>} : vector<72x4xbf16>, vector<4x128xbf16>, vector<72x128xf32> -> vector<72x128xf32>
    %c0_66 = arith.constant 0 : index
    %c0_67 = arith.constant 0 : index
    %58 = vector.load %arg5[%c0_66, %c0_67] : memref<72x128xf32, #tpu.memory_space<vmem>>, vector<72x128xf32>
    %59 = arith.addf %58, %57 : vector<72x128xf32>
    %c0_68 = arith.constant 0 : index
    %c0_69 = arith.constant 0 : index
    %60 = vector.load %arg5[%c0_68, %c0_69] : memref<72x128xf32, #tpu.memory_space<vmem>>, vector<72x128xf32>
    tpu.vector_store %arg5[%c0_68, %c0_69], %59 {strides = array<i32>} : memref<72x128xf32, #tpu.memory_space<vmem>>, vector<72x128xf32>,
    %c0_70 = arith.constant 0 : index
    %c99 = arith.constant 99 : index
    %c0_71 = arith.constant 0 : index
    %61 = vector.load %arg2[%c0_70, %c99, %c0_71] : memref<1x360x4xbf16, #tpu.memory_space<vmem>>, vector<1x72x4xbf16>
    %62 = vector.shape_cast %61 : vector<1x72x4xbf16> to vector<72x4xbf16>
    %c36 = arith.constant 36 : index
    %c0_72 = arith.constant 0 : index
    %63 = vector.load %arg3[%c36, %c0_72] : memref<64x128xbf16, #tpu.memory_space<vmem>>, vector<4x128xbf16>
    %cst_73 = arith.constant dense<0.000000e+00> : vector<72x128xf32>
    %64 = tpu.matmul %62, %63, %cst_73 {dimension_numbers = #tpu.dot_dimension_numbers<[1], [0], [0], [1], [0, 0, 1, 1], [], []>} : vector<72x4xbf16>, vector<4x128xbf16>, vector<72x128xf32> -> vector<72x128xf32>
    %c0_74 = arith.constant 0 : index
    %c0_75 = arith.constant 0 : index
    %65 = vector.load %arg5[%c0_74, %c0_75] : memref<72x128xf32, #tpu.memory_space<vmem>>, vector<72x128xf32>
    %66 = arith.addf %65, %64 : vector<72x128xf32>
    %c0_76 = arith.constant 0 : index
    %c0_77 = arith.constant 0 : index
    %67 = vector.load %arg5[%c0_76, %c0_77] : memref<72x128xf32, #tpu.memory_space<vmem>>, vector<72x128xf32>
    tpu.vector_store %arg5[%c0_76, %c0_77], %66 {strides = array<i32>} : memref<72x128xf32, #tpu.memory_space<vmem>>, vector<72x128xf32>,
    %c0_78 = arith.constant 0 : index
    %c10 = arith.constant 10 : index
    %c0_79 = arith.constant 0 : index
    %68 = vector.load %arg2[%c0_78, %c10, %c0_79] : memref<1x360x4xbf16, #tpu.memory_space<vmem>>, vector<1x72x4xbf16>
    %69 = vector.shape_cast %68 : vector<1x72x4xbf16> to vector<72x4xbf16>
    %c40 = arith.constant 40 : index
    %c0_80 = arith.constant 0 : index
    %70 = vector.load %arg3[%c40, %c0_80] : memref<64x128xbf16, #tpu.memory_space<vmem>>, vector<4x128xbf16>
    %cst_81 = arith.constant dense<0.000000e+00> : vector<72x128xf32>
    %71 = tpu.matmul %69, %70, %cst_81 {dimension_numbers = #tpu.dot_dimension_numbers<[1], [0], [0], [1], [0, 0, 1, 1], [], []>} : vector<72x4xbf16>, vector<4x128xbf16>, vector<72x128xf32> -> vector<72x128xf32>
    %c0_82 = arith.constant 0 : index
    %c0_83 = arith.constant 0 : index
    %72 = vector.load %arg5[%c0_82, %c0_83] : memref<72x128xf32, #tpu.memory_space<vmem>>, vector<72x128xf32>
    %73 = arith.addf %72, %71 : vector<72x128xf32>
    %c0_84 = arith.constant 0 : index
    %c0_85 = arith.constant 0 : index
    %74 = vector.load %arg5[%c0_84, %c0_85] : memref<72x128xf32, #tpu.memory_space<vmem>>, vector<72x128xf32>
    tpu.vector_store %arg5[%c0_84, %c0_85], %73 {strides = array<i32>} : memref<72x128xf32, #tpu.memory_space<vmem>>, vector<72x128xf32>,
    %c0_86 = arith.constant 0 : index
    %c100 = arith.constant 100 : index
    %c0_87 = arith.constant 0 : index
    %75 = vector.load %arg2[%c0_86, %c100, %c0_87] : memref<1x360x4xbf16, #tpu.memory_space<vmem>>, vector<1x72x4xbf16>
    %76 = vector.shape_cast %75 : vector<1x72x4xbf16> to vector<72x4xbf16>
    %c44 = arith.constant 44 : index
    %c0_88 = arith.constant 0 : index
    %77 = vector.load %arg3[%c44, %c0_88] : memref<64x128xbf16, #tpu.memory_space<vmem>>, vector<4x128xbf16>
    %cst_89 = arith.constant dense<0.000000e+00> : vector<72x128xf32>
    %78 = tpu.matmul %76, %77, %cst_89 {dimension_numbers = #tpu.dot_dimension_numbers<[1], [0], [0], [1], [0, 0, 1, 1], [], []>} : vector<72x4xbf16>, vector<4x128xbf16>, vector<72x128xf32> -> vector<72x128xf32>
    %c0_90 = arith.constant 0 : index
    %c0_91 = arith.constant 0 : index
    %79 = vector.load %arg5[%c0_90, %c0_91] : memref<72x128xf32, #tpu.memory_space<vmem>>, vector<72x128xf32>
    %80 = arith.addf %79, %78 : vector<72x128xf32>
    %c0_92 = arith.constant 0 : index
    %c0_93 = arith.constant 0 : index
    %81 = vector.load %arg5[%c0_92, %c0_93] : memref<72x128xf32, #tpu.memory_space<vmem>>, vector<72x128xf32>
    tpu.vector_store %arg5[%c0_92, %c0_93], %80 {strides = array<i32>} : memref<72x128xf32, #tpu.memory_space<vmem>>, vector<72x128xf32>,
    %c0_94 = arith.constant 0 : index
    %c189 = arith.constant 189 : index
    %c0_95 = arith.constant 0 : index
    %82 = vector.load %arg2[%c0_94, %c189, %c0_95] : memref<1x360x4xbf16, #tpu.memory_space<vmem>>, vector<1x72x4xbf16>
    %83 = vector.shape_cast %82 : vector<1x72x4xbf16> to vector<72x4xbf16>
    %c48 = arith.constant 48 : index
    %c0_96 = arith.constant 0 : index
    %84 = vector.load %arg3[%c48, %c0_96] : memref<64x128xbf16, #tpu.memory_space<vmem>>, vector<4x128xbf16>
    %cst_97 = arith.constant dense<0.000000e+00> : vector<72x128xf32>
    %85 = tpu.matmul %83, %84, %cst_97 {dimension_numbers = #tpu.dot_dimension_numbers<[1], [0], [0], [1], [0, 0, 1, 1], [], []>} : vector<72x4xbf16>, vector<4x128xbf16>, vector<72x128xf32> -> vector<72x128xf32>
    %c0_98 = arith.constant 0 : index
    %c0_99 = arith.constant 0 : index
    %86 = vector.load %arg5[%c0_98, %c0_99] : memref<72x128xf32, #tpu.memory_space<vmem>>, vector<72x128xf32>
    %87 = arith.addf %86, %85 : vector<72x128xf32>
    %c0_100 = arith.constant 0 : index
    %c0_101 = arith.constant 0 : index
    %88 = vector.load %arg5[%c0_100, %c0_101] : memref<72x128xf32, #tpu.memory_space<vmem>>, vector<72x128xf32>
    tpu.vector_store %arg5[%c0_100, %c0_101], %87 {strides = array<i32>} : memref<72x128xf32, #tpu.memory_space<vmem>>, vector<72x128xf32>,
    %c0_102 = arith.constant 0 : index
    %c279 = arith.constant 279 : index
    %c0_103 = arith.constant 0 : index
    %89 = vector.load %arg2[%c0_102, %c279, %c0_103] : memref<1x360x4xbf16, #tpu.memory_space<vmem>>, vector<1x72x4xbf16>
    %90 = vector.shape_cast %89 : vector<1x72x4xbf16> to vector<72x4xbf16>
    %c52 = arith.constant 52 : index
    %c0_104 = arith.constant 0 : index
    %91 = vector.load %arg3[%c52, %c0_104] : memref<64x128xbf16, #tpu.memory_space<vmem>>, vector<4x128xbf16>
    %cst_105 = arith.constant dense<0.000000e+00> : vector<72x128xf32>
    %92 = tpu.matmul %90, %91, %cst_105 {dimension_numbers = #tpu.dot_dimension_numbers<[1], [0], [0], [1], [0, 0, 1, 1], [], []>} : vector<72x4xbf16>, vector<4x128xbf16>, vector<72x128xf32> -> vector<72x128xf32>
    %c0_106 = arith.constant 0 : index
    %c0_107 = arith.constant 0 : index
    %93 = vector.load %arg5[%c0_106, %c0_107] : memref<72x128xf32, #tpu.memory_space<vmem>>, vector<72x128xf32>
    %94 = arith.addf %93, %92 : vector<72x128xf32>
    %c0_108 = arith.constant 0 : index
    %c0_109 = arith.constant 0 : index
    %95 = vector.load %arg5[%c0_108, %c0_109] : memref<72x128xf32, #tpu.memory_space<vmem>>, vector<72x128xf32>
    tpu.vector_store %arg5[%c0_108, %c0_109], %94 {strides = array<i32>} : memref<72x128xf32, #tpu.memory_space<vmem>>, vector<72x128xf32>,
    %c0_110 = arith.constant 0 : index
    %c190 = arith.constant 190 : index
    %c0_111 = arith.constant 0 : index
    %96 = vector.load %arg2[%c0_110, %c190, %c0_111] : memref<1x360x4xbf16, #tpu.memory_space<vmem>>, vector<1x72x4xbf16>
    %97 = vector.shape_cast %96 : vector<1x72x4xbf16> to vector<72x4xbf16>
    %c56 = arith.constant 56 : index
    %c0_112 = arith.constant 0 : index
    %98 = vector.load %arg3[%c56, %c0_112] : memref<64x128xbf16, #tpu.memory_space<vmem>>, vector<4x128xbf16>
    %cst_113 = arith.constant dense<0.000000e+00> : vector<72x128xf32>
    %99 = tpu.matmul %97, %98, %cst_113 {dimension_numbers = #tpu.dot_dimension_numbers<[1], [0], [0], [1], [0, 0, 1, 1], [], []>} : vector<72x4xbf16>, vector<4x128xbf16>, vector<72x128xf32> -> vector<72x128xf32>
    %c0_114 = arith.constant 0 : index
    %c0_115 = arith.constant 0 : index
    %100 = vector.load %arg5[%c0_114, %c0_115] : memref<72x128xf32, #tpu.memory_space<vmem>>, vector<72x128xf32>
    %101 = arith.addf %100, %99 : vector<72x128xf32>
    %c0_116 = arith.constant 0 : index
    %c0_117 = arith.constant 0 : index
    %102 = vector.load %arg5[%c0_116, %c0_117] : memref<72x128xf32, #tpu.memory_space<vmem>>, vector<72x128xf32>
    tpu.vector_store %arg5[%c0_116, %c0_117], %101 {strides = array<i32>} : memref<72x128xf32, #tpu.memory_space<vmem>>, vector<72x128xf32>,
    %c0_118 = arith.constant 0 : index
    %c280 = arith.constant 280 : index
    %c0_119 = arith.constant 0 : index
    %103 = vector.load %arg2[%c0_118, %c280, %c0_119] : memref<1x360x4xbf16, #tpu.memory_space<vmem>>, vector<1x72x4xbf16>
    %104 = vector.shape_cast %103 : vector<1x72x4xbf16> to vector<72x4xbf16>
    %c60 = arith.constant 60 : index
    %c0_120 = arith.constant 0 : index
    %105 = vector.load %arg3[%c60, %c0_120] : memref<64x128xbf16, #tpu.memory_space<vmem>>, vector<4x128xbf16>
    %cst_121 = arith.constant dense<0.000000e+00> : vector<72x128xf32>
    %106 = tpu.matmul %104, %105, %cst_121 {dimension_numbers = #tpu.dot_dimension_numbers<[1], [0], [0], [1], [0, 0, 1, 1], [], []>} : vector<72x4xbf16>, vector<4x128xbf16>, vector<72x128xf32> -> vector<72x128xf32>
    %c0_122 = arith.constant 0 : index
    %c0_123 = arith.constant 0 : index
    %107 = vector.load %arg5[%c0_122, %c0_123] : memref<72x128xf32, #tpu.memory_space<vmem>>, vector<72x128xf32>
    %108 = arith.addf %107, %106 : vector<72x128xf32>
    %c0_124 = arith.constant 0 : index
    %c0_125 = arith.constant 0 : index
    %109 = vector.load %arg5[%c0_124, %c0_125] : memref<72x128xf32, #tpu.memory_space<vmem>>, vector<72x128xf32>
    tpu.vector_store %arg5[%c0_124, %c0_125], %108 {strides = array<i32>} : memref<72x128xf32, #tpu.memory_space<vmem>>, vector<72x128xf32>,
    %c0_126 = arith.constant 0 : index
    %c0_127 = arith.constant 0 : index
    %110 = vector.load %arg5[%c0_126, %c0_127] : memref<72x128xf32, #tpu.memory_space<vmem>>, vector<72x128xf32>
    %111 = tpu.iota {dimensions = array<i32: 0>} : vector<72x1xi32>
    %c9_i32 = arith.constant 9 : i32
    %c0_i32 = arith.constant 0 : i32
    %112 = arith.cmpi eq, %c9_i32, %c0_i32 : i32
    %c1_i32 = arith.constant 1 : i32
    %113 = arith.select %112, %c1_i32, %c9_i32 : i32
    %114 = vector.broadcast %113 : i32 to vector<72x1xi32>
    %115 = arith.remsi %111, %114 : vector<72x1xi32>
    %c0_i32_128 = arith.constant 0 : i32
    %116 = vector.broadcast %c0_i32_128 : i32 to vector<72x1xi32>
    %117 = arith.cmpi ne, %115, %116 : vector<72x1xi32>
    %c0_i32_129 = arith.constant 0 : i32
    %118 = vector.broadcast %c0_i32_129 : i32 to vector<72x1xi32>
    %119 = arith.cmpi slt, %115, %118 : vector<72x1xi32>
    %c0_i32_130 = arith.constant 0 : i32
    %120 = arith.cmpi slt, %113, %c0_i32_130 : i32
    %121 = vector.broadcast %120 : i1 to vector<72x1xi1>
    %122 = vector.broadcast %121 : vector<72x1xi1> to vector<72x1xi1>
    %123 = arith.xori %119, %122 : vector<72x1xi1>
    %124 = arith.andi %123, %117 : vector<72x1xi1>
    %125 = vector.broadcast %113 : i32 to vector<72x1xi32>
    %126 = arith.addi %115, %125 : vector<72x1xi32>
    %127 = arith.select %124, %126, %115 : vector<72x1xi1>, vector<72x1xi32>
    %c8_i32 = arith.constant 8 : i32
    %128 = vector.broadcast %c8_i32 : i32 to vector<72x1xi32>
    %129 = arith.cmpi slt, %127, %128 : vector<72x1xi32>
    %cst_131 = arith.constant 0.000000e+00 : f32
    %130 = vector.shape_cast %129 : vector<72x1xi1> to vector<72x1xi1>
    %131 = vector.broadcast %130 : vector<72x1xi1> to vector<72x128xi1>
    %132 = vector.broadcast %cst_131 : f32 to vector<72x128xf32>
    %133 = arith.select %131, %110, %132 : vector<72x128xi1>, vector<72x128xf32>
    %cst_132 = arith.constant dense<0.000000e+00> : vector<128xf32>
    %134 = vector.multi_reduction <add>, %133, %cst_132 [0] : vector<72x128xf32> to vector<128xf32>
    %135 = vector.shape_cast %134 : vector<128xf32> to vector<1x128xf32>
    %cst_133 = arith.constant 1.562500e-02 : f32
    %136 = vector.broadcast %cst_133 : f32 to vector<1x128xf32>
    %137 = arith.mulf %135, %136 : vector<1x128xf32>
    %138 = vector.broadcast %137 : vector<1x128xf32> to vector<72x128xf32>
    %139 = arith.subf %110, %138 : vector<72x128xf32>
    %140 = arith.mulf %139, %139 : vector<72x128xf32>
    %cst_134 = arith.constant 0.000000e+00 : f32
    %141 = vector.shape_cast %129 : vector<72x1xi1> to vector<72x1xi1>
    %142 = vector.broadcast %141 : vector<72x1xi1> to vector<72x128xi1>
    %143 = vector.broadcast %cst_134 : f32 to vector<72x128xf32>
    %144 = arith.select %142, %140, %143 : vector<72x128xi1>, vector<72x128xf32>
    %cst_135 = arith.constant dense<0.000000e+00> : vector<128xf32>
    %145 = vector.multi_reduction <add>, %144, %cst_135 [0] : vector<72x128xf32> to vector<128xf32>
    %146 = vector.shape_cast %145 : vector<128xf32> to vector<1x128xf32>
    %cst_136 = arith.constant 1.562500e-02 : f32
    %147 = vector.broadcast %cst_136 : f32 to vector<1x128xf32>
    %148 = arith.mulf %146, %147 : vector<1x128xf32>
    %cst_137 = arith.constant 9.99999974E-6 : f32
    %149 = vector.broadcast %cst_137 : f32 to vector<1x128xf32>
    %150 = arith.addf %148, %149 : vector<1x128xf32>
    %151 = math.rsqrt %150 : vector<1x128xf32>
    %152 = vector.broadcast %151 : vector<1x128xf32> to vector<72x128xf32>
    %153 = arith.mulf %139, %152 : vector<72x128xf32>
    %cst_138 = arith.constant 0.000000e+00 : f32
    %154 = vector.broadcast %cst_138 : f32 to vector<72x128xf32>
    %155 = arith.cmpf oge, %153, %154 : vector<72x128xf32>
    %cst_139 = arith.constant 2.000000e-01 : f32
    %156 = vector.broadcast %cst_139 : f32 to vector<72x128xf32>
    %157 = arith.mulf %156, %153 : vector<72x128xf32>
    %158 = arith.select %155, %153, %157 : vector<72x128xi1>, vector<72x128xf32>
    %159 = arith.truncf %158 : vector<72x128xf32> to vector<72x128xbf16>
    %c0_140 = arith.constant 0 : index
    %c0_141 = arith.constant 0 : index
    %c0_142 = arith.constant 0 : index
    %160 = vector.load %arg4[%c0_140, %c0_141, %c0_142] : memref<1x72x128xbf16, #tpu.memory_space<vmem>>, vector<1x72x128xbf16>
    %161 = vector.shape_cast %160 : vector<1x72x128xbf16> to vector<72x128xbf16>
    %162 = vector.shape_cast %159 : vector<72x128xbf16> to vector<1x72x128xbf16>
    tpu.vector_store %arg4[%c0_140, %c0_141, %c0_142], %162 {strides = array<i32>} : memref<1x72x128xbf16, #tpu.memory_space<vmem>>, vector<1x72x128xbf16>,
    return
  }
  func.func @transform_0(%arg0: i32, %arg1: i32) -> (i32, i32, i32) {
    %c0_i32 = arith.constant 0 : i32
    %c0_i32_0 = arith.constant 0 : i32
    %c0_i32_1 = arith.constant 0 : i32
    return %arg1, %c0_i32, %c0_i32_0 : i32, i32, i32
  }
  func.func @transform_1(%arg0: i32, %arg1: i32) -> (i32, i32) {
    %c0_i32 = arith.constant 0 : i32
    %c0_i32_0 = arith.constant 0 : i32
    return %c0_i32, %arg0 : i32, i32
  }
  func.func @transform_2(%arg0: i32, %arg1: i32) -> (i32, i32, i32) {
    %c0_i32 = arith.constant 0 : i32
    %c0_i32_0 = arith.constant 0 : i32
    return %arg1, %c0_i32, %arg0 : i32, i32, i32
  }
}

</mosaic_0001>

<llo_original>
// kernel: block_forward.1
$region0: #{block_forward.1}
  #allocation0 [shape = 'u32[]', space=smem, size = 0x4, offset = 0x4, fixed_abs, tag = 'smem constant byte address 0x4 - core index']
  #allocation1 [shape = 'u32[144,128]{1,0:T(1,128)}', space=vmem, size = 0x12000, scoped, tag = 'internal scratch']
  #allocation2 [shape = 'f32[72,128]{1,0:T(8,128)}', space=vmem, size = 0x9000, scoped, tag = 'scratch operand']
  %s0 = inlined_call_operand.vmem [shape: bf16[2,360,4], index: 0, kind: input, shape index: {}]
  %s1 = inlined_call_operand.vmem [shape: bf16[64,128], index: 1, kind: input, shape index: {}]
  %s2 = inlined_call_operand.vmem [shape: bf16[2,72,128], index: 2, kind: output, shape index: {}]
  %s3 = sld [smem:[#allocation0]]
  $region41: #{block_forward.1} parent=0
    _
  %s5 = ssub.s32 1, %s3
  %s6 = scalar_select 0, %s5, %s3
  loop: start=0, step=1, limit=4
  $region2: #{block_forward.1} parent=0 // loop_pre_header
    _
  $region3: #{block_forward.1} parent=0 // loop_header
    %s8 = sphi 0, %s12
    %p9 = scmp.ge.s32.totalorder %s8, 4
    %s15 = sphi 0, %s27
    %s16 = sphi 0, %s23
    %s17 = sphi 0, %s15
    %s18 = sphi 0, %s16
    %s19 = sphi 0, %s17
    %s20 = sphi 0, %s18
    %s30 = sphi 0, %s32
    %s33 = sphi 0, %s30
    %s34 = sphi 0, %s33
    %s50 = sphi 0, %s34
    %s56 = sphi 0, %s58
    %s59 = sphi 0, %s56
    %s60 = sphi 0, %s59
    %s76 = sphi 0, %s60
    %s84 = sphi 0, %s86
    %s87 = sphi 0, %s84
    %s88 = sphi 0, %s87
    %s104 = sphi 0, %s88
  $region4: #{block_forward.1} parent=0 // loop_header_branch
    %11 = sbr.rel (%p9) target = $region8
  $region5: #{block_forward.1} parent=0 // loop_body
    %s13 = ssub.s32 %s8, 1
    %s14 = ssub.s32 %s8, 2
    %s21 = sadd.s32 1, %s16
    %p22 = scmp.ge.s32.totalorder %s21, 2
    %s23 = scalar_select %p22, 0, %s21
    %s24 = sadd.s32 1, %s15
    %s25 = scalar_select %p22, %s24, %s15
    %p26 = scmp.ge.s32.totalorder %s25, 1
    %s27 = scalar_select %p26, 0, %s25
    %s28 = ssub.s32 %s16, %s23
    %p29 = scmp.eq.s32.totalorder %s28, 0
    %s31 = sadd.s32 %s30, 1
    %s32 = scalar_select %p29, %s30, %s31
    %p35 = pneg %p29
    %p36 = scmp.eq.s32.totalorder %s8, 1
    %p37 = por %p35, %p36
    %p38 = scmp.ne.s32.totalorder %s30, %s33
    %p39 = scmp.eq.s32.totalorder %s8, 0
    %p40 = por %p38, %p39
    %p41 = scmp.ne.s32.totalorder %s30, %s33
    %p42 = scmp.eq.s32.totalorder %s13, 1
    %p43 = por %p41, %p42
    %p44 = scmp.ne.s32.totalorder %s33, %s34
    %p45 = scmp.eq.s32.totalorder %s13, 0
    %p46 = por %p44, %p45
    %p47 = scmp.ne.s32.totalorder %s33, %s34
    %p48 = scmp.eq.s32.totalorder %s14, 1
    %p49 = por %p47, %p48
    %p51 = scmp.ne.s32.totalorder %s34, %s50
    %p52 = scmp.eq.s32.totalorder %s14, 0
    %p53 = por %p51, %p52
    %s54 = ssub.s32 %s15, %s27
    %p55 = scmp.eq.s32.totalorder %s54, 0
    %s57 = sadd.s32 %s56, 1
    %s58 = scalar_select %p55, %s56, %s57
    %p61 = pneg %p55
    %p62 = scmp.eq.s32.totalorder %s8, 1
    %p63 = por %p61, %p62
    %p64 = scmp.ne.s32.totalorder %s56, %s59
    %p65 = scmp.eq.s32.totalorder %s8, 0
    %p66 = por %p64, %p65
    %p67 = scmp.ne.s32.totalorder %s56, %s59
    %p68 = scmp.eq.s32.totalorder %s13, 1
    %p69 = por %p67, %p68
    %p70 = scmp.ne.s32.totalorder %s59, %s60
    %p71 = scmp.eq.s32.totalorder %s13, 0
    %p72 = por %p70, %p71
    %p73 = scmp.ne.s32.totalorder %s59, %s60
    %p74 = scmp.eq.s32.totalorder %s14, 1
    %p75 = por %p73, %p74
    %p77 = scmp.ne.s32.totalorder %s60, %s76
    %p78 = scmp.eq.s32.totalorder %s14, 0
    %p79 = por %p77, %p78
    %s80 = ssub.s32 %s16, %s23
    %s81 = ssub.s32 %s15, %s27
    %s82 = sor.u32 %s80, %s81
    %p83 = scmp.eq.s32.totalorder %s82, 0
    %s85 = sadd.s32 %s84, 1
    %s86 = scalar_select %p83, %s84, %s85
    %p89 = pneg %p83
    %p90 = scmp.eq.s32.totalorder %s8, 1
    %p91 = por %p89, %p90
    %p92 = scmp.ne.s32.totalorder %s84, %s87
    %p93 = scmp.eq.s32.totalorder %s8, 0
    %p94 = por %p92, %p93
    %p95 = scmp.ne.s32.totalorder %s84, %s87
    %p96 = scmp.eq.s32.totalorder %s13, 1
    %p97 = por %p95, %p96
    %p98 = scmp.ne.s32.totalorder %s87, %s88
    %p99 = scmp.eq.s32.totalorder %s13, 0
    %p100 = por %p98, %p99
    %p101 = scmp.ne.s32.totalorder %s87, %s88
    %p102 = scmp.eq.s32.totalorder %s14, 1
    %p103 = por %p101, %p102
    %p105 = scmp.ne.s32.totalorder %s88, %s104
    %p106 = scmp.eq.s32.totalorder %s14, 0
    %p107 = por %p105, %p106
    %p108 = scmp.le.s32.totalorder 1, %s8
    %p109 = scmp.lt.s32.totalorder %s8, 3
    %p110 = pnand %p108, %p109
    %p111 = pneg %p110
    // Predicated region
    $region9: #{block_forward.1} parent=5 // pred_check
      _
    $region10: #{block_forward.1} parent=5 // pred_check_branch
      %113 = sbr.rel (%p110) target = $region12
    $region11: #{block_forward.1} parent=5 // pred_region
      %s114 = ssub.s32 %s8, 1
      // Predicated region
      $region13: #{block_forward.1} parent=11 // pred_check
        %p115 = pneg %p72
      $region14: #{block_forward.1} parent=11 // pred_check_branch
        %117 = sbr.rel (%p115) target = $region16
      $region15: #{block_forward.1} parent=11 // pred_region
        %p118 = scmp.lt.s32.totalorder %s17, 0
        %s119 = scalar_select %p118, %s17, 0
        %s120 = smul.addr %s119, 4
        %s121 = scalar_lea.vmem %s1, %s120
      $region16: #{block_forward.1} parent=11 // pred_fallthru
        _
    $region12: #{block_forward.1} parent=5 // pred_fallthru
      _
    %p122 = scmp.lt.s32.totalorder %s8, 2
    // Predicated region
    $region17: #{block_forward.1} parent=5 // pred_check
      %p123 = pneg %p122
    $region18: #{block_forward.1} parent=5 // pred_check_branch
      %125 = sbr.rel (%p123) target = $region20
    $region19: #{block_forward.1} parent=5 // pred_region
      // Predicated region
      $region21: #{block_forward.1} parent=19 // pred_check
        %p126 = pneg %p40
      $region22: #{block_forward.1} parent=19 // pred_check_branch
        %128 = sbr.rel (%p126) target = $region24
      $region23: #{block_forward.1} parent=19 // pred_region
        %p129 = scmp.lt.s32.totalorder %s16, 1
        %s130 = scalar_select %p129, %s16, 1
        %s131 = smul.addr %s130, 45
        %s132 = smul.addr %s131, 4
        %s133 = scalar_lea.vmem %s0, %s132
      $region24: #{block_forward.1} parent=19 // pred_fallthru
        _
    $region20: #{block_forward.1} parent=5 // pred_fallthru
      _
    %p134 = scmp.le.s32.totalorder 1, %s8
    %p135 = scmp.lt.s32.totalorder %s8, 3
    %p136 = pnand %p134, %p135
    %p137 = pneg %p136
    // Predicated region
    $region25: #{block_forward.1} parent=5 // pred_check
      _
    $region26: #{block_forward.1} parent=5 // pred_check_branch
      %139 = sbr.rel (%p136) target = $region28
    $region27: #{block_forward.1} parent=5 // pred_region
      %s140 = ssub.s32 %s8, 1
      %p141 = scmp.lt.s32.totalorder %s18, 1
      %s142 = scalar_select %p141, %s18, 1
      %s143 = smul.addr %s142, 45
      %s144 = smul.addr %s143, 4
      %s145 = scalar_lea.vmem %s0, %s144
      %p146 = pneg %p46
      %p147 = pneg %p43
      %p148 = scmp.lt.s32.totalorder %s17, 0
      %s149 = scalar_select %p148, %s17, 0
      %s150 = smul.addr %s149, 4
      %s151 = scalar_lea.vmem %s1, %s150
      %p152 = pneg %p72
      %p153 = pneg %p69
      %p154 = pneg %p100
      %p155 = pneg %p97
      %p156 = scmp.lt.s32.totalorder %s18, 1
      %s157 = scalar_select %p156, %s18, 1
      %p158 = scmp.lt.s32.totalorder %s17, 0
      %s159 = scalar_select %p158, %s17, 0
      %s160 = smul.addr %s157, 9
      %s161 = sadd.s32 %s159, %s160
      %s162 = smul.addr %s161, 4
      %s163 = scalar_lea.vmem %s2, %s162
      %p164 = scmp.lt.s32.totalorder %s18, 1
      %s165 = scalar_select %p164, %s18, 1
      %s166 = smul.addr %s165, 45
      %s167 = smul.addr %s166, 4
      %s168 = scalar_lea.vmem %s0, %s167
      %p169 = scmp.lt.s32.totalorder %s17, 0
      %s170 = scalar_select %p169, %s17, 0
      %s171 = smul.addr %s170, 4
      %s172 = scalar_lea.vmem %s1, %s171
      %p173 = scmp.lt.s32.totalorder %s18, 1
      %s174 = scalar_select %p173, %s18, 1
      %p175 = scmp.lt.s32.totalorder %s17, 0
      %s176 = scalar_select %p175, %s17, 0
      %s177 = smul.addr %s174, 9
      %s178 = sadd.s32 %s176, %s177
      %s179 = smul.addr %s178, 4
      %s180 = scalar_lea.vmem %s2, %s179
      %v182 = vld [vmem:[%s168] sm:$0xf]
      %v183 = vld [vmem:[%s168 + $0x4] sm:$0xf]
      %v184 = vld [vmem:[%s168 + $0x8] sm:$0xf]
      %v185 = vld [vmem:[%s168 + $0xc] sm:$0xf]
      %v186 = vld [vmem:[%s168 + $0x10] sm:$0xf]
      %v187 = vld [vmem:[%s168 + $0x14] sm:$0xf]
      %v188 = vld [vmem:[%s168 + $0x18] sm:$0xf]
      %v189 = vld [vmem:[%s168 + $0x1c] sm:$0xf]
      %v190 = vld [vmem:[%s168 + $0x20] sm:$0xf]
      %v191 = vld [vmem:[%s172] sm:$0x3]
      %v201 = vunpack.c.l.b16 %v182
      %v202 = vunpack.c.l.b16 %v183
      %v203 = vunpack.c.l.b16 %v184
      %v204 = vunpack.c.l.b16 %v185
      %v205 = vunpack.c.l.b16 %v186
      %v206 = vunpack.c.l.b16 %v187
      %v207 = vunpack.c.l.b16 %v188
      %v208 = vunpack.c.l.b16 %v189
      %v209 = vunpack.c.l.b16 %v190
      %v210 = vpack.c.b16 %v202, %v201
      %v211 = vpack.c.b16 %v204, %v203
      %v212 = vpack.c.b16 %v206, %v205
      %v213 = vpack.c.b16 %v208, %v207
      %v214 = vpack.c.b16 %v209, %v209
      %vm215 = vcmask 31744
      %v217 = vsel %vm215, %v210, 0
      %v220 = vsel %vm215, %v211, 0
      %v223 = vsel %vm215, %v212, 0
      %v226 = vsel %vm215, %v213, 0
      %v229 = vsel %vm215, %v214, 0
      %vm231 = vcmask 1041408
      %v233 = vsel %vm231, %v191, 0
      %235 = vmatprep.subr.bf16.mxu0 0
      %236 = vmatpush1.bf16.msra.mxu0 %v233
      %237 = vmatprep.subr.bf16.mxu0 0
      %238 = vmatpush1.bf16.msra.mxu0 0
      %239 = vmatprep.subr.bf16.mxu0 0
      %240 = vmatpush1.bf16.msra.mxu0 0
      %241 = vmatprep.subr.bf16.mxu0 0
      %242 = vmatpush1.bf16.msra.mxu0 0
      %243 = vmatprep.subr.bf16.mxu0 0
      %244 = vmatpush1.bf16.msra.mxu0 0
      %245 = vmatprep.subr.bf16.mxu0 0
      %246 = vmatpush1.bf16.msra.mxu0 0
      %247 = vmatprep.subr.bf16.mxu0 0
      %248 = vmatpush1.bf16.msra.mxu0 0
      %249 = vmatprep.subr.bf16.mxu0 0
      %250 = vmatpush1.bf16.msra.mxu0 0
      %251 = vmatprep.subr.bf16.mxu0 0
      %252 = vmatpush1.bf16.msra.mxu0 0
      %253 = vmatprep.subr.bf16.mxu0 0
      %254 = vmatpush1.bf16.msra.mxu0 0
      %255 = vmatprep.subr.bf16.mxu0 0
      %256 = vmatpush1.bf16.msra.mxu0 0
      %257 = vmatprep.subr.bf16.mxu0 0
      %258 = vmatpush1.bf16.msra.mxu0 0
      %259 = vmatprep.subr.bf16.mxu0 0
      %260 = vmatpush1.bf16.msra.mxu0 0
      %261 = vmatprep.subr.bf16.mxu0 0
      %262 = vmatpush1.bf16.msra.mxu0 0
      %263 = vmatprep.subr.bf16.mxu0 0
      %264 = vmatpush1.bf16.msra.mxu0 0
      %265 = vmatprep.subr.bf16.mxu0 0
      %266 = vmatpush1.bf16.msra.mxu0 0
      %267 = vmatprep.mubr.bf16.mxu0 0
      %268 = vmatmul.mubr.bf16.gmra.mrb[0].mxu0 %v217
      %v269 = vpop.f32.mrb[0].mxu0
      %v270 = vadd.f32 0.0, %v269
      %v271 = vpop.f32.mrb[0].mxu0
      %v272 = vpop.f32.mrb[0].mxu0
      %v273 = vadd.f32 0.0, %v272
      %v274 = vpop.f32.mrb[0].mxu0
      %275 = vmatprep.mubr.bf16.mxu0 0
      %276 = vmatmul.mubr.bf16.gmra.mrb[0].mxu0 %v220
      %v277 = vpop.f32.mrb[0].mxu0
      %v278 = vadd.f32 0.0, %v277
      %v279 = vpop.f32.mrb[0].mxu0
      %v280 = vpop.f32.mrb[0].mxu0
      %v281 = vadd.f32 0.0, %v280
      %v282 = vpop.f32.mrb[0].mxu0
      %283 = vmatprep.mubr.bf16.mxu0 0
      %284 = vmatmul.mubr.bf16.gmra.mrb[0].mxu0 %v223
      %v285 = vpop.f32.mrb[0].mxu0
      %v286 = vadd.f32 0.0, %v285
      %v287 = vpop.f32.mrb[0].mxu0
      %v288 = vpop.f32.mrb[0].mxu0
      %v289 = vadd.f32 0.0, %v288
      %v290 = vpop.f32.mrb[0].mxu0
      %291 = vmatprep.mubr.bf16.mxu0 0
      %292 = vmatmul.mubr.bf16.gmra.mrb[0].mxu0 %v226
      %v293 = vpop.f32.mrb[0].mxu0
      %v294 = vadd.f32 0.0, %v293
      %v295 = vpop.f32.mrb[0].mxu0
      %v296 = vpop.f32.mrb[0].mxu0
      %v297 = vadd.f32 0.0, %v296
      %v298 = vpop.f32.mrb[0].mxu0
      %299 = vmatprep.mubr.bf16.mxu0 0
      %300 = vmatmul.mubr.bf16.gmra.mrb[0].mxu0 %v229
      %v301 = vpop.f32.mrb[0].mxu0
      %v302 = vadd.f32 0.0, %v301
      %v303 = vpop.f32.mrb[0].mxu0
      %v304 = vpop.f32.mrb[0].mxu0
      %v305 = vpop.f32.mrb[0].mxu0
      %306 = vdwg.mxu0
      %307 = vst [vmem:[#allocation2] sm:$0xff] %v270
      %308 = vst [vmem:[#allocation2 + $0x8] sm:$0xff] %v273
      %309 = vst [vmem:[#allocation2 + $0x10] sm:$0xff] %v278
      %310 = vst [vmem:[#allocation2 + $0x18] sm:$0xff] %v281
      %311 = vst [vmem:[#allocation2 + $0x20] sm:$0xff] %v286
      %312 = vst [vmem:[#allocation2 + $0x28] sm:$0xff] %v289
      %313 = vst [vmem:[#allocation2 + $0x30] sm:$0xff] %v294
      %314 = vst [vmem:[#allocation2 + $0x38] sm:$0xff] %v297
      %315 = vst [vmem:[#allocation2 + $0x40] sm:$0xff] %v302
      %v316 = vld [vmem:[%s168 + $0x2c] sm:$0xe]
      %v317 = vld [vmem:[%s168 + $0x30] sm:$0xf]
      %v318 = vld [vmem:[%s168 + $0x34] sm:$0xf]
      %v319 = vld [vmem:[%s168 + $0x38] sm:$0xf]
      %v320 = vld [vmem:[%s168 + $0x3c] sm:$0xf]
      %v321 = vld [vmem:[%s168 + $0x40] sm:$0xf]
      %v322 = vld [vmem:[%s168 + $0x44] sm:$0xf]
      %v323 = vld [vmem:[%s168 + $0x48] sm:$0xf]
      %v324 = vld [vmem:[%s168 + $0x4c] sm:$0xf]
      %v325 = vld [vmem:[%s168 + $0x50] sm:$0x1]
      %v326 = vld [vmem:[%s172] sm:$0xc]
      %v337 = vunpack.c.l.b16 %v316
      %v338 = vunpack.c.l.b16 %v317
      %v339 = vunpack.c.l.b16 %v318
      %v340 = vunpack.c.l.b16 %v319
      %v341 = vunpack.c.l.b16 %v320
      %v342 = vunpack.c.l.b16 %v321
      %v343 = vunpack.c.l.b16 %v322
      %v344 = vunpack.c.l.b16 %v323
      %v345 = vunpack.c.l.b16 %v324
      %v346 = vunpack.c.l.b16 %v325
      %v347 = vpack.c.b16 %v338, %v337
      %v348 = vpack.c.b16 %v340, %v339
      %v349 = vpack.c.b16 %v342, %v341
      %v350 = vpack.c.b16 %v344, %v343
      %v351 = vpack.c.b16 %v346, %v345
      %vm352 = vcmask 1046528
      %v353 = vrot.slane %v347, 1
      %v354 = vrot.slane %v348, 1
      %v355 = vsel %vm352, %v353, %v354
      %v356 = vrot.slane %v349, 1
      %v357 = vsel %vm352, %v354, %v356
      %v358 = vrot.slane %v350, 1
      %v359 = vsel %vm352, %v356, %v358
      %v360 = vrot.slane %v351, 1
      %v361 = vsel %vm352, %v358, %v360
      %v363 = vunpack.c.l.b16 %v326
      %v364 = vpack.c.b16 %v363, %v363
      %v365 = vrot.slane %v364, 2
      %v367 = vsel %vm215, %v355, 0
      %v370 = vsel %vm215, %v357, 0
      %v373 = vsel %vm215, %v359, 0
      %v376 = vsel %vm215, %v361, 0
      %v379 = vsel %vm215, %v360, 0
      %v382 = vsel %vm231, %v365, 0
      %384 = vmatprep.subr.bf16.mxu0 0
      %385 = vmatpush1.bf16.msra.mxu0 %v382
      %386 = vmatprep.subr.bf16.mxu0 0
      %387 = vmatpush1.bf16.msra.mxu0 0
      %388 = vmatprep.subr.bf16.mxu0 0
      %389 = vmatpush1.bf16.msra.mxu0 0
      %390 = vmatprep.subr.bf16.mxu0 0
      %391 = vmatpush1.bf16.msra.mxu0 0
      %392 = vmatprep.subr.bf16.mxu0 0
      %393 = vmatpush1.bf16.msra.mxu0 0
      %394 = vmatprep.subr.bf16.mxu0 0
      %395 = vmatpush1.bf16.msra.mxu0 0
      %396 = vmatprep.subr.bf16.mxu0 0
      %397 = vmatpush1.bf16.msra.mxu0 0
      %398 = vmatprep.subr.bf16.mxu0 0
      %399 = vmatpush1.bf16.msra.mxu0 0
      %400 = vmatprep.subr.bf16.mxu0 0
      %401 = vmatpush1.bf16.msra.mxu0 0
      %402 = vmatprep.subr.bf16.mxu0 0
      %403 = vmatpush1.bf16.msra.mxu0 0
      %404 = vmatprep.subr.bf16.mxu0 0
      %405 = vmatpush1.bf16.msra.mxu0 0
      %406 = vmatprep.subr.bf16.mxu0 0
      %407 = vmatpush1.bf16.msra.mxu0 0
      %408 = vmatprep.subr.bf16.mxu0 0
      %409 = vmatpush1.bf16.msra.mxu0 0
      %410 = vmatprep.subr.bf16.mxu0 0
      %411 = vmatpush1.bf16.msra.mxu0 0
      %412 = vmatprep.subr.bf16.mxu0 0
      %413 = vmatpush1.bf16.msra.mxu0 0
      %414 = vmatprep.subr.bf16.mxu0 0
      %415 = vmatpush1.bf16.msra.mxu0 0
      %416 = vmatprep.mubr.bf16.mxu0 0
      %417 = vmatmul.mubr.bf16.gmra.mrb[0].mxu0 %v367
      %v418 = vpop.f32.mrb[0].mxu0
      %v419 = vadd.f32 0.0, %v418
      %v420 = vpop.f32.mrb[0].mxu0
      %v421 = vpop.f32.mrb[0].mxu0
      %v422 = vadd.f32 0.0, %v421
      %v423 = vpop.f32.mrb[0].mxu0
      %424 = vmatprep.mubr.bf16.mxu0 0
      %425 = vmatmul.mubr.bf16.gmra.mrb[0].mxu0 %v370
      %v426 = vpop.f32.mrb[0].mxu0
      %v427 = vadd.f32 0.0, %v426
      %v428 = vpop.f32.mrb[0].mxu0
      %v429 = vpop.f32.mrb[0].mxu0
      %v430 = vadd.f32 0.0, %v429
      %v431 = vpop.f32.mrb[0].mxu0
      %432 = vmatprep.mubr.bf16.mxu0 0
      %433 = vmatmul.mubr.bf16.gmra.mrb[0].mxu0 %v373
      %v434 = vpop.f32.mrb[0].mxu0
      %v435 = vadd.f32 0.0, %v434
      %v436 = vpop.f32.mrb[0].mxu0
      %v437 = vpop.f32.mrb[0].mxu0
      %v438 = vadd.f32 0.0, %v437
      %v439 = vpop.f32.mrb[0].mxu0
      %440 = vmatprep.mubr.bf16.mxu0 0
      %441 = vmatmul.mubr.bf16.gmra.mrb[0].mxu0 %v376
      %v442 = vpop.f32.mrb[0].mxu0
      %v443 = vadd.f32 0.0, %v442
      %v444 = vpop.f32.mrb[0].mxu0
      %v445 = vpop.f32.mrb[0].mxu0
      %v446 = vadd.f32 0.0, %v445
      %v447 = vpop.f32.mrb[0].mxu0
      %448 = vmatprep.mubr.bf16.mxu0 0
      %449 = vmatmul.mubr.bf16.gmra.mrb[0].mxu0 %v379
      %v450 = vpop.f32.mrb[0].mxu0
      %v451 = vadd.f32 0.0, %v450
      %v452 = vpop.f32.mrb[0].mxu0
      %v453 = vpop.f32.mrb[0].mxu0
      %v454 = vpop.f32.mrb[0].mxu0
      %455 = vdwg.mxu0
      %v456 = vld [vmem:[#allocation2] sm:$0xff]
      %v457 = vld [vmem:[#allocation2 + $0x8] sm:$0xff]
      %v458 = vld [vmem:[#allocation2 + $0x10] sm:$0xff]
      %v459 = vld [vmem:[#allocation2 + $0x18] sm:$0xff]
      %v460 = vld [vmem:[#allocation2 + $0x20] sm:$0xff]
      %v461 = vld [vmem:[#allocation2 + $0x28] sm:$0xff]
      %v462 = vld [vmem:[#allocation2 + $0x30] sm:$0xff]
      %v463 = vld [vmem:[#allocation2 + $0x38] sm:$0xff]
      %v464 = vld [vmem:[#allocation2 + $0x40] sm:$0xff]
      %v465 = vadd.f32 %v456, %v419
      %v466 = vadd.f32 %v457, %v422
      %v467 = vadd.f32 %v458, %v427
      %v468 = vadd.f32 %v459, %v430
      %v469 = vadd.f32 %v460, %v435
      %v470 = vadd.f32 %v461, %v438
      %v471 = vadd.f32 %v462, %v443
      %v472 = vadd.f32 %v463, %v446
      %v473 = vadd.f32 %v464, %v451
      %474 = vst [vmem:[#allocation2] sm:$0xff] %v465
      %475 = vst [vmem:[#allocation2 + $0x8] sm:$0xff] %v466
      %476 = vst [vmem:[#allocation2 + $0x10] sm:$0xff] %v467
      %477 = vst [vmem:[#allocation2 + $0x18] sm:$0xff] %v468
      %478 = vst [vmem:[#allocation2 + $0x20] sm:$0xff] %v469
      %479 = vst [vmem:[#allocation2 + $0x28] sm:$0xff] %v470
      %480 = vst [vmem:[#allocation2 + $0x30] sm:$0xff] %v471
      %481 = vst [vmem:[#allocation2 + $0x38] sm:$0xff] %v472
      %482 = vst [vmem:[#allocation2 + $0x40] sm:$0xff] %v473
      %v483 = vld [vmem:[%s168] sm:$0xf]
      %v484 = vld [vmem:[%s168 + $0x4] sm:$0xf]
      %v485 = vld [vmem:[%s168 + $0x8] sm:$0xf]
      %v486 = vld [vmem:[%s168 + $0xc] sm:$0xf]
      %v487 = vld [vmem:[%s168 + $0x10] sm:$0xf]
      %v488 = vld [vmem:[%s168 + $0x14] sm:$0xf]
      %v489 = vld [vmem:[%s168 + $0x18] sm:$0xf]
      %v490 = vld [vmem:[%s168 + $0x1c] sm:$0xf]
      %v491 = vld [vmem:[%s168 + $0x20] sm:$0xf]
      %v492 = vld [vmem:[%s168 + $0x24] sm:$0x1]
      %v493 = vld [vmem:[%s172 + $0x4] sm:$0x3]
      %v504 = vunpack.c.l.b16 %v483
      %v505 = vunpack.c.l.b16 %v484
      %v506 = vunpack.c.l.b16 %v485
      %v507 = vunpack.c.l.b16 %v486
      %v508 = vunpack.c.l.b16 %v487
      %v509 = vunpack.c.l.b16 %v488
      %v510 = vunpack.c.l.b16 %v489
      %v511 = vunpack.c.l.b16 %v490
      %v512 = vunpack.c.l.b16 %v491
      %v513 = vunpack.c.l.b16 %v492
      %v514 = vpack.c.b16 %v505, %v504
      %v515 = vpack.c.b16 %v507, %v506
      %v516 = vpack.c.b16 %v509, %v508
      %v517 = vpack.c.b16 %v511, %v510
      %v518 = vpack.c.b16 %v513, %v512
      %vm519 = vsmask.f32 7424
      %v521 = vshrl.u32 %v514, 16
      %v523 = vshll.u32 %v514, 16
      %v525 = vrot.slane %v523, 1
      %v526 = vor.u32 %v521, %v525
      %v528 = vshll.u32 %v515, 16
      %v530 = vrot.slane %v528, 1
      %v531 = vsel %vm519, %v526, %v530
      %v532 = vshrl.u32 %v515, 16
      %v534 = vor.u32 %v532, %v530
      %v536 = vshll.u32 %v516, 16
      %v538 = vrot.slane %v536, 1
      %v539 = vsel %vm519, %v534, %v538
      %v540 = vshrl.u32 %v516, 16
      %v542 = vor.u32 %v540, %v538
      %v544 = vshll.u32 %v517, 16
      %v546 = vrot.slane %v544, 1
      %v547 = vsel %vm519, %v542, %v546
      %v548 = vshrl.u32 %v517, 16
      %v550 = vor.u32 %v548, %v546
      %v552 = vshll.u32 %v518, 16
      %v554 = vrot.slane %v552, 1
      %v555 = vsel %vm519, %v550, %v554
      %v556 = vshrl.u32 %v518, 16
      %v558 = vor.u32 %v556, %v554
      %v560 = vsel %vm215, %v531, 0
      %v563 = vsel %vm215, %v539, 0
      %v566 = vsel %vm215, %v547, 0
      %v569 = vsel %vm215, %v555, 0
      %v572 = vsel %vm215, %v558, 0
      %v575 = vsel %vm231, %v493, 0
      %577 = vmatprep.subr.bf16.mxu0 0
      %578 = vmatpush1.bf16.msra.mxu0 %v575
      %579 = vmatprep.subr.bf16.mxu0 0
      %580 = vmatpush1.bf16.msra.mxu0 0
      %581 = vmatprep.subr.bf16.mxu0 0
      %582 = vmatpush1.bf16.msra.mxu0 0
      %583 = vmatprep.subr.bf16.mxu0 0
      %584 = vmatpush1.bf16.msra.mxu0 0
      %585 = vmatprep.subr.bf16.mxu0 0
      %586 = vmatpush1.bf16.msra.mxu0 0
      %587 = vmatprep.subr.bf16.mxu0 0
      %588 = vmatpush1.bf16.msra.mxu0 0
      %589 = vmatprep.subr.bf16.mxu0 0
      %590 = vmatpush1.bf16.msra.mxu0 0
      %591 = vmatprep.subr.bf16.mxu0 0
      %592 = vmatpush1.bf16.msra.mxu0 0
      %593 = vmatprep.subr.bf16.mxu0 0
      %594 = vmatpush1.bf16.msra.mxu0 0
      %595 = vmatprep.subr.bf16.mxu0 0
      %596 = vmatpush1.bf16.msra.mxu0 0
      %597 = vmatprep.subr.bf16.mxu0 0
      %598 = vmatpush1.bf16.msra.mxu0 0
      %599 = vmatprep.subr.bf16.mxu0 0
      %600 = vmatpush1.bf16.msra.mxu0 0
      %601 = vmatprep.subr.bf16.mxu0 0
      %602 = vmatpush1.bf16.msra.mxu0 0
      %603 = vmatprep.subr.bf16.mxu0 0
      %604 = vmatpush1.bf16.msra.mxu0 0
      %605 = vmatprep.subr.bf16.mxu0 0
      %606 = vmatpush1.bf16.msra.mxu0 0
      %607 = vmatprep.subr.bf16.mxu0 0
      %608 = vmatpush1.bf16.msra.mxu0 0
      %609 = vmatprep.mubr.bf16.mxu0 0
      %610 = vmatmul.mubr.bf16.gmra.mrb[0].mxu0 %v560
      %v611 = vpop.f32.mrb[0].mxu0
      %v612 = vadd.f32 0.0, %v611
      %v613 = vpop.f32.mrb[0].mxu0
      %v614 = vpop.f32.mrb[0].mxu0
      %v615 = vadd.f32 0.0, %v614
      %v616 = vpop.f32.mrb[0].mxu0
      %617 = vmatprep.mubr.bf16.mxu0 0
      %618 = vmatmul.mubr.bf16.gmra.mrb[0].mxu0 %v563
      %v619 = vpop.f32.mrb[0].mxu0
      %v620 = vadd.f32 0.0, %v619
      %v621 = vpop.f32.mrb[0].mxu0
      %v622 = vpop.f32.mrb[0].mxu0
      %v623 = vadd.f32 0.0, %v622
      %v624 = vpop.f32.mrb[0].mxu0
      %625 = vmatprep.mubr.bf16.mxu0 0
      %626 = vmatmul.mubr.bf16.gmra.mrb[0].mxu0 %v566
      %v627 = vpop.f32.mrb[0].mxu0
      %v628 = vadd.f32 0.0, %v627
      %v629 = vpop.f32.mrb[0].mxu0
      %v630 = vpop.f32.mrb[0].mxu0
      %v631 = vadd.f32 0.0, %v630
      %v632 = vpop.f32.mrb[0].mxu0
      %633 = vmatprep.mubr.bf16.mxu0 0
      %634 = vmatmul.mubr.bf16.gmra.mrb[0].mxu0 %v569
      %v635 = vpop.f32.mrb[0].mxu0
      %v636 = vadd.f32 0.0, %v635
      %v637 = vpop.f32.mrb[0].mxu0
      %v638 = vpop.f32.mrb[0].mxu0
      %v639 = vadd.f32 0.0, %v638
      %v640 = vpop.f32.mrb[0].mxu0
      %641 = vmatprep.mubr.bf16.mxu0 0
      %642 = vmatmul.mubr.bf16.gmra.mrb[0].mxu0 %v572
      %v643 = vpop.f32.mrb[0].mxu0
      %v644 = vadd.f32 0.0, %v643
      %v645 = vpop.f32.mrb[0].mxu0
      %v646 = vpop.f32.mrb[0].mxu0
      %v647 = vpop.f32.mrb[0].mxu0
      %648 = vdwg.mxu0
      %v649 = vld [vmem:[#allocation2] sm:$0xff]
      %v650 = vld [vmem:[#allocation2 + $0x8] sm:$0xff]
      %v651 = vld [vmem:[#allocation2 + $0x10] sm:$0xff]
      %v652 = vld [vmem:[#allocation2 + $0x18] sm:$0xff]
      %v653 = vld [vmem:[#allocation2 + $0x20] sm:$0xff]
      %v654 = vld [vmem:[#allocation2 + $0x28] sm:$0xff]
      %v655 = vld [vmem:[#allocation2 + $0x30] sm:$0xff]
      %v656 = vld [vmem:[#allocation2 + $0x38] sm:$0xff]
      %v657 = vld [vmem:[#allocation2 + $0x40] sm:$0xff]
      %v658 = vadd.f32 %v649, %v612
      %v659 = vadd.f32 %v650, %v615
      %v660 = vadd.f32 %v651, %v620
      %v661 = vadd.f32 %v652, %v623
      %v662 = vadd.f32 %v653, %v628
      %v663 = vadd.f32 %v654, %v631
      %v664 = vadd.f32 %v655, %v636
      %v665 = vadd.f32 %v656, %v639
      %v666 = vadd.f32 %v657, %v644
      %667 = vst [vmem:[#allocation2] sm:$0xff] %v658
      %668 = vst [vmem:[#allocation2 + $0x8] sm:$0xff] %v659
      %669 = vst [vmem:[#allocation2 + $0x10] sm:$0xff] %v660
      %670 = vst [vmem:[#allocation2 + $0x18] sm:$0xff] %v661
      %671 = vst [vmem:[#allocation2 + $0x20] sm:$0xff] %v662
      %672 = vst [vmem:[#allocation2 + $0x28] sm:$0xff] %v663
      %673 = vst [vmem:[#allocation2 + $0x30] sm:$0xff] %v664
      %674 = vst [vmem:[#allocation2 + $0x38] sm:$0xff] %v665
      %675 = vst [vmem:[#allocation2 + $0x40] sm:$0xff] %v666
      %v676 = vld [vmem:[%s168 + $0x2c] sm:$0xe]
      %v677 = vld [vmem:[%s168 + $0x30] sm:$0xf]
      %v678 = vld [vmem:[%s168 + $0x34] sm:$0xf]
      %v679 = vld [vmem:[%s168 + $0x38] sm:$0xf]
      %v680 = vld [vmem:[%s168 + $0x3c] sm:$0xf]
      %v681 = vld [vmem:[%s168 + $0x40] sm:$0xf]
      %v682 = vld [vmem:[%s168 + $0x44] sm:$0xf]
      %v683 = vld [vmem:[%s168 + $0x48] sm:$0xf]
      %v684 = vld [vmem:[%s168 + $0x4c] sm:$0xf]
      %v685 = vld [vmem:[%s168 + $0x50] sm:$0x3]
      %v686 = vld [vmem:[%s172 + $0x4] sm:$0xc]
      %v697 = vunpack.c.l.b16 %v676
      %v698 = vunpack.c.l.b16 %v677
      %v699 = vunpack.c.l.b16 %v678
      %v700 = vunpack.c.l.b16 %v679
      %v701 = vunpack.c.l.b16 %v680
      %v702 = vunpack.c.l.b16 %v681
      %v703 = vunpack.c.l.b16 %v682
      %v704 = vunpack.c.l.b16 %v683
      %v705 = vunpack.c.l.b16 %v684
      %v706 = vunpack.c.l.b16 %v685
      %v707 = vpack.c.b16 %v698, %v697
      %v708 = vpack.c.b16 %v700, %v699
      %v709 = vpack.c.b16 %v702, %v701
      %v710 = vpack.c.b16 %v704, %v703
      %v711 = vpack.c.b16 %v706, %v705
      %vm712 = vsmask.f32 6400
      %v714 = vshrl.u32 %v707, 16
      %v716 = vrot.slane %v714, 1
      %v717 = vshll.u32 %v707, 16
      %v719 = vrot.slane %v717, 2
      %v720 = vor.u32 %v716, %v719
      %v722 = vshrl.u32 %v708, 16
      %v724 = vrot.slane %v722, 1
      %v725 = vshll.u32 %v708, 16
      %v727 = vrot.slane %v725, 2
      %v728 = vor.u32 %v724, %v727
      %v729 = vsel %vm712, %v720, %v728
      %v731 = vshrl.u32 %v709, 16
      %v733 = vrot.slane %v731, 1
      %v734 = vshll.u32 %v709, 16
      %v736 = vrot.slane %v734, 2
      %v737 = vor.u32 %v733, %v736
      %v738 = vsel %vm712, %v728, %v737
      %v740 = vshrl.u32 %v710, 16
      %v742 = vrot.slane %v740, 1
      %v743 = vshll.u32 %v710, 16
      %v745 = vrot.slane %v743, 2
      %v746 = vor.u32 %v742, %v745
      %v747 = vsel %vm712, %v737, %v746
      %v749 = vshrl.u32 %v711, 16
      %v751 = vrot.slane %v749, 1
      %v752 = vshll.u32 %v711, 16
      %v754 = vrot.slane %v752, 2
      %v755 = vor.u32 %v751, %v754
      %v756 = vsel %vm712, %v746, %v755
      %v758 = vunpack.c.l.b16 %v686
      %v759 = vpack.c.b16 %v758, %v758
      %v760 = vrot.slane %v759, 2
      %v762 = vsel %vm215, %v729, 0
      %v765 = vsel %vm215, %v738, 0
      %v768 = vsel %vm215, %v747, 0
      %v771 = vsel %vm215, %v756, 0
      %v774 = vsel %vm215, %v755, 0
      %v777 = vsel %vm231, %v760, 0
      %779 = vmatprep.subr.bf16.mxu0 0
      %780 = vmatpush1.bf16.msra.mxu0 %v777
      %781 = vmatprep.subr.bf16.mxu0 0
      %782 = vmatpush1.bf16.msra.mxu0 0
      %783 = vmatprep.subr.bf16.mxu0 0
      %784 = vmatpush1.bf16.msra.mxu0 0
      %785 = vmatprep.subr.bf16.mxu0 0
      %786 = vmatpush1.bf16.msra.mxu0 0
      %787 = vmatprep.subr.bf16.mxu0 0
      %788 = vmatpush1.bf16.msra.mxu0 0
      %789 = vmatprep.subr.bf16.mxu0 0
      %790 = vmatpush1.bf16.msra.mxu0 0
      %791 = vmatprep.subr.bf16.mxu0 0
      %792 = vmatpush1.bf16.msra.mxu0 0
      %793 = vmatprep.subr.bf16.mxu0 0
      %794 = vmatpush1.bf16.msra.mxu0 0
      %795 = vmatprep.subr.bf16.mxu0 0
      %796 = vmatpush1.bf16.msra.mxu0 0
      %797 = vmatprep.subr.bf16.mxu0 0
      %798 = vmatpush1.bf16.msra.mxu0 0
      %799 = vmatprep.subr.bf16.mxu0 0
      %800 = vmatpush1.bf16.msra.mxu0 0
      %801 = vmatprep.subr.bf16.mxu0 0
      %802 = vmatpush1.bf16.msra.mxu0 0
      %803 = vmatprep.subr.bf16.mxu0 0
      %804 = vmatpush1.bf16.msra.mxu0 0
      %805 = vmatprep.subr.bf16.mxu0 0
      %806 = vmatpush1.bf16.msra.mxu0 0
      %807 = vmatprep.subr.bf16.mxu0 0
      %808 = vmatpush1.bf16.msra.mxu0 0
      %809 = vmatprep.subr.bf16.mxu0 0
      %810 = vmatpush1.bf16.msra.mxu0 0
      %811 = vmatprep.mubr.bf16.mxu0 0
      %812 = vmatmul.mubr.bf16.gmra.mrb[0].mxu0 %v762
      %v813 = vpop.f32.mrb[0].mxu0
      %v814 = vadd.f32 0.0, %v813
      %v815 = vpop.f32.mrb[0].mxu0
      %v816 = vpop.f32.mrb[0].mxu0
      %v817 = vadd.f32 0.0, %v816
      %v818 = vpop.f32.mrb[0].mxu0
      %819 = vmatprep.mubr.bf16.mxu0 0
      %820 = vmatmul.mubr.bf16.gmra.mrb[0].mxu0 %v765
      %v821 = vpop.f32.mrb[0].mxu0
      %v822 = vadd.f32 0.0, %v821
      %v823 = vpop.f32.mrb[0].mxu0
      %v824 = vpop.f32.mrb[0].mxu0
      %v825 = vadd.f32 0.0, %v824
      %v826 = vpop.f32.mrb[0].mxu0
      %827 = vmatprep.mubr.bf16.mxu0 0
      %828 = vmatmul.mubr.bf16.gmra.mrb[0].mxu0 %v768
      %v829 = vpop.f32.mrb[0].mxu0
      %v830 = vadd.f32 0.0, %v829
      %v831 = vpop.f32.mrb[0].mxu0
      %v832 = vpop.f32.mrb[0].mxu0
      %v833 = vadd.f32 0.0, %v832
      %v834 = vpop.f32.mrb[0].mxu0
      %835 = vmatprep.mubr.bf16.mxu0 0
      %836 = vmatmul.mubr.bf16.gmra.mrb[0].mxu0 %v771
      %v837 = vpop.f32.mrb[0].mxu0
      %v838 = vadd.f32 0.0, %v837
      %v839 = vpop.f32.mrb[0].mxu0
      %v840 = vpop.f32.mrb[0].mxu0
      %v841 = vadd.f32 0.0, %v840
      %v842 = vpop.f32.mrb[0].mxu0
      %843 = vmatprep.mubr.bf16.mxu0 0
      %844 = vmatmul.mubr.bf16.gmra.mrb[0].mxu0 %v774
      %v845 = vpop.f32.mrb[0].mxu0
      %v846 = vadd.f32 0.0, %v845
      %v847 = vpop.f32.mrb[0].mxu0
      %v848 = vpop.f32.mrb[0].mxu0
      %v849 = vpop.f32.mrb[0].mxu0
      %850 = vdwg.mxu0
      %v851 = vld [vmem:[#allocation2] sm:$0xff]
      %v852 = vld [vmem:[#allocation2 + $0x8] sm:$0xff]
      %v853 = vld [vmem:[#allocation2 + $0x10] sm:$0xff]
      %v854 = vld [vmem:[#allocation2 + $0x18] sm:$0xff]
      %v855 = vld [vmem:[#allocation2 + $0x20] sm:$0xff]
      %v856 = vld [vmem:[#allocation2 + $0x28] sm:$0xff]
      %v857 = vld [vmem:[#allocation2 + $0x30] sm:$0xff]
      %v858 = vld [vmem:[#allocation2 + $0x38] sm:$0xff]
      %v859 = vld [vmem:[#allocation2 + $0x40] sm:$0xff]
      %v860 = vadd.f32 %v851, %v814
      %v861 = vadd.f32 %v852, %v817
      %v862 = vadd.f32 %v853, %v822
      %v863 = vadd.f32 %v854, %v825
      %v864 = vadd.f32 %v855, %v830
      %v865 = vadd.f32 %v856, %v833
      %v866 = vadd.f32 %v857, %v838
      %v867 = vadd.f32 %v858, %v841
      %v868 = vadd.f32 %v859, %v846
      %869 = vst [vmem:[#allocation2] sm:$0xff] %v860
      %870 = vst [vmem:[#allocation2 + $0x8] sm:$0xff] %v861
      %871 = vst [vmem:[#allocation2 + $0x10] sm:$0xff] %v862
      %872 = vst [vmem:[#allocation2 + $0x18] sm:$0xff] %v863
      %873 = vst [vmem:[#allocation2 + $0x20] sm:$0xff] %v864
      %874 = vst [vmem:[#allocation2 + $0x28] sm:$0xff] %v865
      %875 = vst [vmem:[#allocation2 + $0x30] sm:$0xff] %v866
      %876 = vst [vmem:[#allocation2 + $0x38] sm:$0xff] %v867
      %877 = vst [vmem:[#allocation2 + $0x40] sm:$0xff] %v868
      %v878 = vld [vmem:[%s168 + $0x58] sm:$0xc]
      %v879 = vld [vmem:[%s168 + $0x5c] sm:$0xf]
      %v880 = vld [vmem:[%s168 + $0x60] sm:$0xf]
      %v881 = vld [vmem:[%s168 + $0x64] sm:$0xf]
      %v882 = vld [vmem:[%s168 + $0x68] sm:$0xf]
      %v883 = vld [vmem:[%s168 + $0x6c] sm:$0xf]
      %v884 = vld [vmem:[%s168 + $0x70] sm:$0xf]
      %v885 = vld [vmem:[%s168 + $0x74] sm:$0xf]
      %v886 = vld [vmem:[%s168 + $0x78] sm:$0xf]
      %v887 = vld [vmem:[%s168 + $0x7c] sm:$0x3]
      %v888 = vld [vmem:[%s172 + $0x8] sm:$0x3]
      %v899 = vunpack.c.l.b16 %v878
      %v900 = vunpack.c.l.b16 %v879
      %v901 = vunpack.c.l.b16 %v880
      %v902 = vunpack.c.l.b16 %v881
      %v903 = vunpack.c.l.b16 %v882
      %v904 = vunpack.c.l.b16 %v883
      %v905 = vunpack.c.l.b16 %v884
      %v906 = vunpack.c.l.b16 %v885
      %v907 = vunpack.c.l.b16 %v886
      %v908 = vunpack.c.l.b16 %v887
      %v909 = vpack.c.b16 %v900, %v899
      %v910 = vpack.c.b16 %v902, %v901
      %v911 = vpack.c.b16 %v904, %v903
      %v912 = vpack.c.b16 %v906, %v905
      %v913 = vpack.c.b16 %v908, %v907
      %vm914 = vcmask 1045504
      %v915 = vrot.slane %v909, 2
      %v916 = vrot.slane %v910, 2
      %v917 = vsel %vm914, %v915, %v916
      %v918 = vrot.slane %v911, 2
      %v919 = vsel %vm914, %v916, %v918
      %v920 = vrot.slane %v912, 2
      %v921 = vsel %vm914, %v918, %v920
      %v922 = vrot.slane %v913, 2
      %v923 = vsel %vm914, %v920, %v922
      %v925 = vsel %vm215, %v917, 0
      %v928 = vsel %vm215, %v919, 0
      %v931 = vsel %vm215, %v921, 0
      %v934 = vsel %vm215, %v923, 0
      %v937 = vsel %vm215, %v922, 0
      %v940 = vsel %vm231, %v888, 0
      %942 = vmatprep.subr.bf16.mxu0 0
      %943 = vmatpush1.bf16.msra.mxu0 %v940
      %944 = vmatprep.subr.bf16.mxu0 0
      %945 = vmatpush1.bf16.msra.mxu0 0
      %946 = vmatprep.subr.bf16.mxu0 0
      %947 = vmatpush1.bf16.msra.mxu0 0
      %948 = vmatprep.subr.bf16.mxu0 0
      %949 = vmatpush1.bf16.msra.mxu0 0
      %950 = vmatprep.subr.bf16.mxu0 0
      %951 = vmatpush1.bf16.msra.mxu0 0
      %952 = vmatprep.subr.bf16.mxu0 0
      %953 = vmatpush1.bf16.msra.mxu0 0
      %954 = vmatprep.subr.bf16.mxu0 0
      %955 = vmatpush1.bf16.msra.mxu0 0
      %956 = vmatprep.subr.bf16.mxu0 0
      %957 = vmatpush1.bf16.msra.mxu0 0
      %958 = vmatprep.subr.bf16.mxu0 0
      %959 = vmatpush1.bf16.msra.mxu0 0
      %960 = vmatprep.subr.bf16.mxu0 0
      %961 = vmatpush1.bf16.msra.mxu0 0
      %962 = vmatprep.subr.bf16.mxu0 0
      %963 = vmatpush1.bf16.msra.mxu0 0
      %964 = vmatprep.subr.bf16.mxu0 0
      %965 = vmatpush1.bf16.msra.mxu0 0
      %966 = vmatprep.subr.bf16.mxu0 0
      %967 = vmatpush1.bf16.msra.mxu0 0
      %968 = vmatprep.subr.bf16.mxu0 0
      %969 = vmatpush1.bf16.msra.mxu0 0
      %970 = vmatprep.subr.bf16.mxu0 0
      %971 = vmatpush1.bf16.msra.mxu0 0
      %972 = vmatprep.subr.bf16.mxu0 0
      %973 = vmatpush1.bf16.msra.mxu0 0
      %974 = vmatprep.mubr.bf16.mxu0 0
      %975 = vmatmul.mubr.bf16.gmra.mrb[0].mxu0 %v925
      %v976 = vpop.f32.mrb[0].mxu0
      %v977 = vadd.f32 0.0, %v976
      %v978 = vpop.f32.mrb[0].mxu0
      %v979 = vpop.f32.mrb[0].mxu0
      %v980 = vadd.f32 0.0, %v979
      %v981 = vpop.f32.mrb[0].mxu0
      %982 = vmatprep.mubr.bf16.mxu0 0
      %983 = vmatmul.mubr.bf16.gmra.mrb[0].mxu0 %v928
      %v984 = vpop.f32.mrb[0].mxu0
      %v985 = vadd.f32 0.0, %v984
      %v986 = vpop.f32.mrb[0].mxu0
      %v987 = vpop.f32.mrb[0].mxu0
      %v988 = vadd.f32 0.0, %v987
      %v989 = vpop.f32.mrb[0].mxu0
      %990 = vmatprep.mubr.bf16.mxu0 0
      %991 = vmatmul.mubr.bf16.gmra.mrb[0].mxu0 %v931
      %v992 = vpop.f32.mrb[0].mxu0
      %v993 = vadd.f32 0.0, %v992
      %v994 = vpop.f32.mrb[0].mxu0
      %v995 = vpop.f32.mrb[0].mxu0
      %v996 = vadd.f32 0.0, %v995
      %v997 = vpop.f32.mrb[0].mxu0
      %998 = vmatprep.mubr.bf16.mxu0 0
      %999 = vmatmul.mubr.bf16.gmra.mrb[0].mxu0 %v934
      %v1000 = vpop.f32.mrb[0].mxu0
      %v1001 = vadd.f32 0.0, %v1000
      %v1002 = vpop.f32.mrb[0].mxu0
      %v1003 = vpop.f32.mrb[0].mxu0
      %v1004 = vadd.f32 0.0, %v1003
      %v1005 = vpop.f32.mrb[0].mxu0
      %1006 = vmatprep.mubr.bf16.mxu0 0
      %1007 = vmatmul.mubr.bf16.gmra.mrb[0].mxu0 %v937
      %v1008 = vpop.f32.mrb[0].mxu0
      %v1009 = vadd.f32 0.0, %v1008
      %v1010 = vpop.f32.mrb[0].mxu0
      %v1011 = vpop.f32.mrb[0].mxu0
      %v1012 = vpop.f32.mrb[0].mxu0
      %1013 = vdwg.mxu0
      %v1014 = vld [vmem:[#allocation2] sm:$0xff]
      %v1015 = vld [vmem:[#allocation2 + $0x8] sm:$0xff]
      %v1016 = vld [vmem:[#allocation2 + $0x10] sm:$0xff]
      %v1017 = vld [vmem:[#allocation2 + $0x18] sm:$0xff]
      %v1018 = vld [vmem:[#allocation2 + $0x20] sm:$0xff]
      %v1019 = vld [vmem:[#allocation2 + $0x28] sm:$0xff]
      %v1020 = vld [vmem:[#allocation2 + $0x30] sm:$0xff]
      %v1021 = vld [vmem:[#allocation2 + $0x38] sm:$0xff]
      %v1022 = vld [vmem:[#allocation2 + $0x40] sm:$0xff]
      %v1023 = vadd.f32 %v1014, %v977
      %v1024 = vadd.f32 %v1015, %v980
      %v1025 = vadd.f32 %v1016, %v985
      %v1026 = vadd.f32 %v1017, %v988
      %v1027 = vadd.f32 %v1018, %v993
      %v1028 = vadd.f32 %v1019, %v996
      %v1029 = vadd.f32 %v1020, %v1001
      %v1030 = vadd.f32 %v1021, %v1004
      %v1031 = vadd.f32 %v1022, %v1009
      %1032 = vst [vmem:[#allocation2] sm:$0xff] %v1023
      %1033 = vst [vmem:[#allocation2 + $0x8] sm:$0xff] %v1024
      %1034 = vst [vmem:[#allocation2 + $0x10] sm:$0xff] %v1025
      %1035 = vst [vmem:[#allocation2 + $0x18] sm:$0xff] %v1026
      %1036 = vst [vmem:[#allocation2 + $0x20] sm:$0xff] %v1027
      %1037 = vst [vmem:[#allocation2 + $0x28] sm:$0xff] %v1028
      %1038 = vst [vmem:[#allocation2 + $0x30] sm:$0xff] %v1029
      %1039 = vst [vmem:[#allocation2 + $0x38] sm:$0xff] %v1030
      %1040 = vst [vmem:[#allocation2 + $0x40] sm:$0xff] %v1031
      %v1041 = vld [vmem:[%s168 + $0x84] sm:$0x8]
      %v1042 = vld [vmem:[%s168 + $0x88] sm:$0xf]
      %v1043 = vld [vmem:[%s168 + $0x8c] sm:$0xf]
      %v1044 = vld [vmem:[%s168 + $0x90] sm:$0xf]
      %v1045 = vld [vmem:[%s168 + $0x94] sm:$0xf]
      %v1046 = vld [vmem:[%s168 + $0x98] sm:$0xf]
      %v1047 = vld [vmem:[%s168 + $0x9c] sm:$0xf]
      %v1048 = vld [vmem:[%s168 + $0xa0] sm:$0xf]
      %v1049 = vld [vmem:[%s168 + $0xa4] sm:$0xf]
      %v1050 = vld [vmem:[%s168 + $0xa8] sm:$0x7]
      %v1051 = vld [vmem:[%s172 + $0x8] sm:$0xc]
      %v1062 = vunpack.c.l.b16 %v1041
      %v1063 = vunpack.c.l.b16 %v1042
      %v1064 = vunpack.c.l.b16 %v1043
      %v1065 = vunpack.c.l.b16 %v1044
      %v1066 = vunpack.c.l.b16 %v1045
      %v1067 = vunpack.c.l.b16 %v1046
      %v1068 = vunpack.c.l.b16 %v1047
      %v1069 = vunpack.c.l.b16 %v1048
      %v1070 = vunpack.c.l.b16 %v1049
      %v1071 = vunpack.c.l.b16 %v1050
      %v1072 = vpack.c.b16 %v1063, %v1062
      %v1073 = vpack.c.b16 %v1065, %v1064
      %v1074 = vpack.c.b16 %v1067, %v1066
      %v1075 = vpack.c.b16 %v1069, %v1068
      %v1076 = vpack.c.b16 %v1071, %v1070
      %vm1077 = vcmask 1044480
      %v1078 = vrot.slane %v1072, 3
      %v1079 = vrot.slane %v1073, 3
      %v1080 = vsel %vm1077, %v1078, %v1079
      %v1081 = vrot.slane %v1074, 3
      %v1082 = vsel %vm1077, %v1079, %v1081
      %v1083 = vrot.slane %v1075, 3
      %v1084 = vsel %vm1077, %v1081, %v1083
      %v1085 = vrot.slane %v1076, 3
      %v1086 = vsel %vm1077, %v1083, %v1085
      %v1088 = vunpack.c.l.b16 %v1051
      %v1089 = vpack.c.b16 %v1088, %v1088
      %v1090 = vrot.slane %v1089, 2
      %v1092 = vsel %vm215, %v1080, 0
      %v1095 = vsel %vm215, %v1082, 0
      %v1098 = vsel %vm215, %v1084, 0
      %v1101 = vsel %vm215, %v1086, 0
      %v1104 = vsel %vm215, %v1085, 0
      %v1107 = vsel %vm231, %v1090, 0
      %1109 = vmatprep.subr.bf16.mxu0 0
      %1110 = vmatpush1.bf16.msra.mxu0 %v1107
      %1111 = vmatprep.subr.bf16.mxu0 0
      %1112 = vmatpush1.bf16.msra.mxu0 0
      %1113 = vmatprep.subr.bf16.mxu0 0
      %1114 = vmatpush1.bf16.msra.mxu0 0
      %1115 = vmatprep.subr.bf16.mxu0 0
      %1116 = vmatpush1.bf16.msra.mxu0 0
      %1117 = vmatprep.subr.bf16.mxu0 0
      %1118 = vmatpush1.bf16.msra.mxu0 0
      %1119 = vmatprep.subr.bf16.mxu0 0
      %1120 = vmatpush1.bf16.msra.mxu0 0
      %1121 = vmatprep.subr.bf16.mxu0 0
      %1122 = vmatpush1.bf16.msra.mxu0 0
      %1123 = vmatprep.subr.bf16.mxu0 0
      %1124 = vmatpush1.bf16.msra.mxu0 0
      %1125 = vmatprep.subr.bf16.mxu0 0
      %1126 = vmatpush1.bf16.msra.mxu0 0
      %1127 = vmatprep.subr.bf16.mxu0 0
      %1128 = vmatpush1.bf16.msra.mxu0 0
      %1129 = vmatprep.subr.bf16.mxu0 0
      %1130 = vmatpush1.bf16.msra.mxu0 0
      %1131 = vmatprep.subr.bf16.mxu0 0
      %1132 = vmatpush1.bf16.msra.mxu0 0
      %1133 = vmatprep.subr.bf16.mxu0 0
      %1134 = vmatpush1.bf16.msra.mxu0 0
      %1135 = vmatprep.subr.bf16.mxu0 0
      %1136 = vmatpush1.bf16.msra.mxu0 0
      %1137 = vmatprep.subr.bf16.mxu0 0
      %1138 = vmatpush1.bf16.msra.mxu0 0
      %1139 = vmatprep.subr.bf16.mxu0 0
      %1140 = vmatpush1.bf16.msra.mxu0 0
      %1141 = vmatprep.mubr.bf16.mxu0 0
      %1142 = vmatmul.mubr.bf16.gmra.mrb[0].mxu0 %v1092
      %v1143 = vpop.f32.mrb[0].mxu0
      %v1144 = vadd.f32 0.0, %v1143
      %v1145 = vpop.f32.mrb[0].mxu0
      %v1146 = vpop.f32.mrb[0].mxu0
      %v1147 = vadd.f32 0.0, %v1146
      %v1148 = vpop.f32.mrb[0].mxu0
      %1149 = vmatprep.mubr.bf16.mxu0 0
      %1150 = vmatmul.mubr.bf16.gmra.mrb[0].mxu0 %v1095
      %v1151 = vpop.f32.mrb[0].mxu0
      %v1152 = vadd.f32 0.0, %v1151
      %v1153 = vpop.f32.mrb[0].mxu0
      %v1154 = vpop.f32.mrb[0].mxu0
      %v1155 = vadd.f32 0.0, %v1154
      %v1156 = vpop.f32.mrb[0].mxu0
      %1157 = vmatprep.mubr.bf16.mxu0 0
      %1158 = vmatmul.mubr.bf16.gmra.mrb[0].mxu0 %v1098
      %v1159 = vpop.f32.mrb[0].mxu0
      %v1160 = vadd.f32 0.0, %v1159
      %v1161 = vpop.f32.mrb[0].mxu0
      %v1162 = vpop.f32.mrb[0].mxu0
      %v1163 = vadd.f32 0.0, %v1162
      %v1164 = vpop.f32.mrb[0].mxu0
      %1165 = vmatprep.mubr.bf16.mxu0 0
      %1166 = vmatmul.mubr.bf16.gmra.mrb[0].mxu0 %v1101
      %v1167 = vpop.f32.mrb[0].mxu0
      %v1168 = vadd.f32 0.0, %v1167
      %v1169 = vpop.f32.mrb[0].mxu0
      %v1170 = vpop.f32.mrb[0].mxu0
      %v1171 = vadd.f32 0.0, %v1170
      %v1172 = vpop.f32.mrb[0].mxu0
      %1173 = vmatprep.mubr.bf16.mxu0 0
      %1174 = vmatmul.mubr.bf16.gmra.mrb[0].mxu0 %v1104
      %v1175 = vpop.f32.mrb[0].mxu0
      %v1176 = vadd.f32 0.0, %v1175
      %v1177 = vpop.f32.mrb[0].mxu0
      %v1178 = vpop.f32.mrb[0].mxu0
      %v1179 = vpop.f32.mrb[0].mxu0
      %1180 = vdwg.mxu0
      %v1181 = vld [vmem:[#allocation2] sm:$0xff]
      %v1182 = vld [vmem:[#allocation2 + $0x8] sm:$0xff]
      %v1183 = vld [vmem:[#allocation2 + $0x10] sm:$0xff]
      %v1184 = vld [vmem:[#allocation2 + $0x18] sm:$0xff]
      %v1185 = vld [vmem:[#allocation2 + $0x20] sm:$0xff]
      %v1186 = vld [vmem:[#allocation2 + $0x28] sm:$0xff]
      %v1187 = vld [vmem:[#allocation2 + $0x30] sm:$0xff]
      %v1188 = vld [vmem:[#allocation2 + $0x38] sm:$0xff]
      %v1189 = vld [vmem:[#allocation2 + $0x40] sm:$0xff]
      %v1190 = vadd.f32 %v1181, %v1144
      %v1191 = vadd.f32 %v1182, %v1147
      %v1192 = vadd.f32 %v1183, %v1152
      %v1193 = vadd.f32 %v1184, %v1155
      %v1194 = vadd.f32 %v1185, %v1160
      %v1195 = vadd.f32 %v1186, %v1163
      %v1196 = vadd.f32 %v1187, %v1168
      %v1197 = vadd.f32 %v1188, %v1171
      %v1198 = vadd.f32 %v1189, %v1176
      %1199 = vst [vmem:[#allocation2] sm:$0xff] %v1190
      %1200 = vst [vmem:[#allocation2 + $0x8] sm:$0xff] %v1191
      %1201 = vst [vmem:[#allocation2 + $0x10] sm:$0xff] %v1192
      %1202 = vst [vmem:[#allocation2 + $0x18] sm:$0xff] %v1193
      %1203 = vst [vmem:[#allocation2 + $0x20] sm:$0xff] %v1194
      %1204 = vst [vmem:[#allocation2 + $0x28] sm:$0xff] %v1195
      %1205 = vst [vmem:[#allocation2 + $0x30] sm:$0xff] %v1196
      %1206 = vst [vmem:[#allocation2 + $0x38] sm:$0xff] %v1197
      %1207 = vst [vmem:[#allocation2 + $0x40] sm:$0xff] %v1198
      %v1208 = vld [vmem:[%s168 + $0x58] sm:$0xc]
      %v1209 = vld [vmem:[%s168 + $0x5c] sm:$0xf]
      %v1210 = vld [vmem:[%s168 + $0x60] sm:$0xf]
      %v1211 = vld [vmem:[%s168 + $0x64] sm:$0xf]
      %v1212 = vld [vmem:[%s168 + $0x68] sm:$0xf]
      %v1213 = vld [vmem:[%s168 + $0x6c] sm:$0xf]
      %v1214 = vld [vmem:[%s168 + $0x70] sm:$0xf]
      %v1215 = vld [vmem:[%s168 + $0x74] sm:$0xf]
      %v1216 = vld [vmem:[%s168 + $0x78] sm:$0xf]
      %v1217 = vld [vmem:[%s168 + $0x7c] sm:$0x7]
      %v1218 = vld [vmem:[%s172 + $0xc] sm:$0x3]
      %v1229 = vunpack.c.l.b16 %v1208
      %v1230 = vunpack.c.l.b16 %v1209
      %v1231 = vunpack.c.l.b16 %v1210
      %v1232 = vunpack.c.l.b16 %v1211
      %v1233 = vunpack.c.l.b16 %v1212
      %v1234 = vunpack.c.l.b16 %v1213
      %v1235 = vunpack.c.l.b16 %v1214
      %v1236 = vunpack.c.l.b16 %v1215
      %v1237 = vunpack.c.l.b16 %v1216
      %v1238 = vunpack.c.l.b16 %v1217
      %v1239 = vpack.c.b16 %v1230, %v1229
      %v1240 = vpack.c.b16 %v1232, %v1231
      %v1241 = vpack.c.b16 %v1234, %v1233
      %v1242 = vpack.c.b16 %v1236, %v1235
      %v1243 = vpack.c.b16 %v1238, %v1237
      %vm1244 = vsmask.f32 5376
      %v1246 = vshrl.u32 %v1239, 16
      %v1248 = vrot.slane %v1246, 2
      %v1249 = vshll.u32 %v1239, 16
      %v1251 = vrot.slane %v1249, 3
      %v1252 = vor.u32 %v1248, %v1251
      %v1254 = vshrl.u32 %v1240, 16
      %v1256 = vrot.slane %v1254, 2
      %v1257 = vshll.u32 %v1240, 16
      %v1259 = vrot.slane %v1257, 3
      %v1260 = vor.u32 %v1256, %v1259
      %v1261 = vsel %vm1244, %v1252, %v1260
      %v1263 = vshrl.u32 %v1241, 16
      %v1265 = vrot.slane %v1263, 2
      %v1266 = vshll.u32 %v1241, 16
      %v1268 = vrot.slane %v1266, 3
      %v1269 = vor.u32 %v1265, %v1268
      %v1270 = vsel %vm1244, %v1260, %v1269
      %v1272 = vshrl.u32 %v1242, 16
      %v1274 = vrot.slane %v1272, 2
      %v1275 = vshll.u32 %v1242, 16
      %v1277 = vrot.slane %v1275, 3
      %v1278 = vor.u32 %v1274, %v1277
      %v1279 = vsel %vm1244, %v1269, %v1278
      %v1281 = vshrl.u32 %v1243, 16
      %v1283 = vrot.slane %v1281, 2
      %v1284 = vshll.u32 %v1243, 16
      %v1286 = vrot.slane %v1284, 3
      %v1287 = vor.u32 %v1283, %v1286
      %v1288 = vsel %vm1244, %v1278, %v1287
      %v1290 = vsel %vm215, %v1261, 0
      %v1293 = vsel %vm215, %v1270, 0
      %v1296 = vsel %vm215, %v1279, 0
      %v1299 = vsel %vm215, %v1288, 0
      %v1302 = vsel %vm215, %v1287, 0
      %v1305 = vsel %vm231, %v1218, 0
      %1307 = vmatprep.subr.bf16.mxu0 0
      %1308 = vmatpush1.bf16.msra.mxu0 %v1305
      %1309 = vmatprep.subr.bf16.mxu0 0
      %1310 = vmatpush1.bf16.msra.mxu0 0
      %1311 = vmatprep.subr.bf16.mxu0 0
      %1312 = vmatpush1.bf16.msra.mxu0 0
      %1313 = vmatprep.subr.bf16.mxu0 0
      %1314 = vmatpush1.bf16.msra.mxu0 0
      %1315 = vmatprep.subr.bf16.mxu0 0
      %1316 = vmatpush1.bf16.msra.mxu0 0
      %1317 = vmatprep.subr.bf16.mxu0 0
      %1318 = vmatpush1.bf16.msra.mxu0 0
      %1319 = vmatprep.subr.bf16.mxu0 0
      %1320 = vmatpush1.bf16.msra.mxu0 0
      %1321 = vmatprep.subr.bf16.mxu0 0
      %1322 = vmatpush1.bf16.msra.mxu0 0
      %1323 = vmatprep.subr.bf16.mxu0 0
      %1324 = vmatpush1.bf16.msra.mxu0 0
      %1325 = vmatprep.subr.bf16.mxu0 0
      %1326 = vmatpush1.bf16.msra.mxu0 0
      %1327 = vmatprep.subr.bf16.mxu0 0
      %1328 = vmatpush1.bf16.msra.mxu0 0
      %1329 = vmatprep.subr.bf16.mxu0 0
      %1330 = vmatpush1.bf16.msra.mxu0 0
      %1331 = vmatprep.subr.bf16.mxu0 0
      %1332 = vmatpush1.bf16.msra.mxu0 0
      %1333 = vmatprep.subr.bf16.mxu0 0
      %1334 = vmatpush1.bf16.msra.mxu0 0
      %1335 = vmatprep.subr.bf16.mxu0 0
      %1336 = vmatpush1.bf16.msra.mxu0 0
      %1337 = vmatprep.subr.bf16.mxu0 0
      %1338 = vmatpush1.bf16.msra.mxu0 0
      %1339 = vmatprep.mubr.bf16.mxu0 0
      %1340 = vmatmul.mubr.bf16.gmra.mrb[0].mxu0 %v1290
      %v1341 = vpop.f32.mrb[0].mxu0
      %v1342 = vadd.f32 0.0, %v1341
      %v1343 = vpop.f32.mrb[0].mxu0
      %v1344 = vpop.f32.mrb[0].mxu0
      %v1345 = vadd.f32 0.0, %v1344
      %v1346 = vpop.f32.mrb[0].mxu0
      %1347 = vmatprep.mubr.bf16.mxu0 0
      %1348 = vmatmul.mubr.bf16.gmra.mrb[0].mxu0 %v1293
      %v1349 = vpop.f32.mrb[0].mxu0
      %v1350 = vadd.f32 0.0, %v1349
      %v1351 = vpop.f32.mrb[0].mxu0
      %v1352 = vpop.f32.mrb[0].mxu0
      %v1353 = vadd.f32 0.0, %v1352
      %v1354 = vpop.f32.mrb[0].mxu0
      %1355 = vmatprep.mubr.bf16.mxu0 0
      %1356 = vmatmul.mubr.bf16.gmra.mrb[0].mxu0 %v1296
      %v1357 = vpop.f32.mrb[0].mxu0
      %v1358 = vadd.f32 0.0, %v1357
      %v1359 = vpop.f32.mrb[0].mxu0
      %v1360 = vpop.f32.mrb[0].mxu0
      %v1361 = vadd.f32 0.0, %v1360
      %v1362 = vpop.f32.mrb[0].mxu0
      %1363 = vmatprep.mubr.bf16.mxu0 0
      %1364 = vmatmul.mubr.bf16.gmra.mrb[0].mxu0 %v1299
      %v1365 = vpop.f32.mrb[0].mxu0
      %v1366 = vadd.f32 0.0, %v1365
      %v1367 = vpop.f32.mrb[0].mxu0
      %v1368 = vpop.f32.mrb[0].mxu0
      %v1369 = vadd.f32 0.0, %v1368
      %v1370 = vpop.f32.mrb[0].mxu0
      %1371 = vmatprep.mubr.bf16.mxu0 0
      %1372 = vmatmul.mubr.bf16.gmra.mrb[0].mxu0 %v1302
      %v1373 = vpop.f32.mrb[0].mxu0
      %v1374 = vadd.f32 0.0, %v1373
      %v1375 = vpop.f32.mrb[0].mxu0
      %v1376 = vpop.f32.mrb[0].mxu0
      %v1377 = vpop.f32.mrb[0].mxu0
      %1378 = vdwg.mxu0
      %v1379 = vld [vmem:[#allocation2] sm:$0xff]
      %v1380 = vld [vmem:[#allocation2 + $0x8] sm:$0xff]
      %v1381 = vld [vmem:[#allocation2 + $0x10] sm:$0xff]
      %v1382 = vld [vmem:[#allocation2 + $0x18] sm:$0xff]
      %v1383 = vld [vmem:[#allocation2 + $0x20] sm:$0xff]
      %v1384 = vld [vmem:[#allocation2 + $0x28] sm:$0xff]
      %v1385 = vld [vmem:[#allocation2 + $0x30] sm:$0xff]
      %v1386 = vld [vmem:[#allocation2 + $0x38] sm:$0xff]
      %v1387 = vld [vmem:[#allocation2 + $0x40] sm:$0xff]
      %v1388 = vadd.f32 %v1379, %v1342
      %v1389 = vadd.f32 %v1380, %v1345
      %v1390 = vadd.f32 %v1381, %v1350
      %v1391 = vadd.f32 %v1382, %v1353
      %v1392 = vadd.f32 %v1383, %v1358
      %v1393 = vadd.f32 %v1384, %v1361
      %v1394 = vadd.f32 %v1385, %v1366
      %v1395 = vadd.f32 %v1386, %v1369
      %v1396 = vadd.f32 %v1387, %v1374
      %1397 = vst [vmem:[#allocation2] sm:$0xff] %v1388
      %1398 = vst [vmem:[#allocation2 + $0x8] sm:$0xff] %v1389
      %1399 = vst [vmem:[#allocation2 + $0x10] sm:$0xff] %v1390
      %1400 = vst [vmem:[#allocation2 + $0x18] sm:$0xff] %v1391
      %1401 = vst [vmem:[#allocation2 + $0x20] sm:$0xff] %v1392
      %1402 = vst [vmem:[#allocation2 + $0x28] sm:$0xff] %v1393
      %1403 = vst [vmem:[#allocation2 + $0x30] sm:$0xff] %v1394
      %1404 = vst [vmem:[#allocation2 + $0x38] sm:$0xff] %v1395
      %1405 = vst [vmem:[#allocation2 + $0x40] sm:$0xff] %v1396
      %v1406 = vld [vmem:[%s168 + $0x84] sm:$0x8]
      %v1407 = vld [vmem:[%s168 + $0x88] sm:$0xf]
      %v1408 = vld [vmem:[%s168 + $0x8c] sm:$0xf]
      %v1409 = vld [vmem:[%s168 + $0x90] sm:$0xf]
      %v1410 = vld [vmem:[%s168 + $0x94] sm:$0xf]
      %v1411 = vld [vmem:[%s168 + $0x98] sm:$0xf]
      %v1412 = vld [vmem:[%s168 + $0x9c] sm:$0xf]
      %v1413 = vld [vmem:[%s168 + $0xa0] sm:$0xf]
      %v1414 = vld [vmem:[%s168 + $0xa4] sm:$0xf]
      %v1415 = vld [vmem:[%s168 + $0xa8] sm:$0xf]
      %v1416 = vld [vmem:[%s172 + $0xc] sm:$0xc]
      %v1427 = vunpack.c.l.b16 %v1406
      %v1428 = vunpack.c.l.b16 %v1407
      %v1429 = vunpack.c.l.b16 %v1408
      %v1430 = vunpack.c.l.b16 %v1409
      %v1431 = vunpack.c.l.b16 %v1410
      %v1432 = vunpack.c.l.b16 %v1411
      %v1433 = vunpack.c.l.b16 %v1412
      %v1434 = vunpack.c.l.b16 %v1413
      %v1435 = vunpack.c.l.b16 %v1414
      %v1436 = vunpack.c.l.b16 %v1415
      %v1437 = vpack.c.b16 %v1428, %v1427
      %v1438 = vpack.c.b16 %v1430, %v1429
      %v1439 = vpack.c.b16 %v1432, %v1431
      %v1440 = vpack.c.b16 %v1434, %v1433
      %v1441 = vpack.c.b16 %v1436, %v1435
      %vm1442 = vsmask.f32 4352
      %v1444 = vshrl.u32 %v1437, 16
      %v1446 = vrot.slane %v1444, 3
      %v1447 = vshll.u32 %v1437, 16
      %v1449 = vrot.slane %v1447, 4
      %v1450 = vor.u32 %v1446, %v1449
      %v1452 = vshrl.u32 %v1438, 16
      %v1454 = vrot.slane %v1452, 3
      %v1455 = vshll.u32 %v1438, 16
      %v1457 = vrot.slane %v1455, 4
      %v1458 = vor.u32 %v1454, %v1457
      %v1459 = vsel %vm1442, %v1450, %v1458
      %v1461 = vshrl.u32 %v1439, 16
      %v1463 = vrot.slane %v1461, 3
      %v1464 = vshll.u32 %v1439, 16
      %v1466 = vrot.slane %v1464, 4
      %v1467 = vor.u32 %v1463, %v1466
      %v1468 = vsel %vm1442, %v1458, %v1467
      %v1470 = vshrl.u32 %v1440, 16
      %v1472 = vrot.slane %v1470, 3
      %v1473 = vshll.u32 %v1440, 16
      %v1475 = vrot.slane %v1473, 4
      %v1476 = vor.u32 %v1472, %v1475
      %v1477 = vsel %vm1442, %v1467, %v1476
      %v1479 = vshrl.u32 %v1441, 16
      %v1481 = vrot.slane %v1479, 3
      %v1482 = vshll.u32 %v1441, 16
      %v1484 = vrot.slane %v1482, 4
      %v1485 = vor.u32 %v1481, %v1484
      %v1486 = vsel %vm1442, %v1476, %v1485
      %v1488 = vunpack.c.l.b16 %v1416
      %v1489 = vpack.c.b16 %v1488, %v1488
      %v1490 = vrot.slane %v1489, 2
      %v1492 = vsel %vm215, %v1459, 0
      %v1495 = vsel %vm215, %v1468, 0
      %v1498 = vsel %vm215, %v1477, 0
      %v1501 = vsel %vm215, %v1486, 0
      %v1504 = vsel %vm215, %v1485, 0
      %v1507 = vsel %vm231, %v1490, 0
      %1509 = vmatprep.subr.bf16.mxu0 0
      %1510 = vmatpush1.bf16.msra.mxu0 %v1507
      %1511 = vmatprep.subr.bf16.mxu0 0
      %1512 = vmatpush1.bf16.msra.mxu0 0
      %1513 = vmatprep.subr.bf16.mxu0 0
      %1514 = vmatpush1.bf16.msra.mxu0 0
      %1515 = vmatprep.subr.bf16.mxu0 0
      %1516 = vmatpush1.bf16.msra.mxu0 0
      %1517 = vmatprep.subr.bf16.mxu0 0
      %1518 = vmatpush1.bf16.msra.mxu0 0
      %1519 = vmatprep.subr.bf16.mxu0 0
      %1520 = vmatpush1.bf16.msra.mxu0 0
      %1521 = vmatprep.subr.bf16.mxu0 0
      %1522 = vmatpush1.bf16.msra.mxu0 0
      %1523 = vmatprep.subr.bf16.mxu0 0
      %1524 = vmatpush1.bf16.msra.mxu0 0
      %1525 = vmatprep.subr.bf16.mxu0 0
      %1526 = vmatpush1.bf16.msra.mxu0 0
      %1527 = vmatprep.subr.bf16.mxu0 0
      %1528 = vmatpush1.bf16.msra.mxu0 0
      %1529 = vmatprep.subr.bf16.mxu0 0
      %1530 = vmatpush1.bf16.msra.mxu0 0
      %1531 = vmatprep.subr.bf16.mxu0 0
      %1532 = vmatpush1.bf16.msra.mxu0 0
      %1533 = vmatprep.subr.bf16.mxu0 0
      %1534 = vmatpush1.bf16.msra.mxu0 0
      %1535 = vmatprep.subr.bf16.mxu0 0
      %1536 = vmatpush1.bf16.msra.mxu0 0
      %1537 = vmatprep.subr.bf16.mxu0 0
      %1538 = vmatpush1.bf16.msra.mxu0 0
      %1539 = vmatprep.subr.bf16.mxu0 0
      %1540 = vmatpush1.bf16.msra.mxu0 0
      %1541 = vmatprep.mubr.bf16.mxu0 0
      %1542 = vmatmul.mubr.bf16.gmra.mrb[0].mxu0 %v1492
      %v1543 = vpop.f32.mrb[0].mxu0
      %v1544 = vadd.f32 0.0, %v1543
      %v1545 = vpop.f32.mrb[0].mxu0
      %v1546 = vpop.f32.mrb[0].mxu0
      %v1547 = vadd.f32 0.0, %v1546
      %v1548 = vpop.f32.mrb[0].mxu0
      %1549 = vmatprep.mubr.bf16.mxu0 0
      %1550 = vmatmul.mubr.bf16.gmra.mrb[0].mxu0 %v1495
      %v1551 = vpop.f32.mrb[0].mxu0
      %v1552 = vadd.f32 0.0, %v1551
      %v1553 = vpop.f32.mrb[0].mxu0
      %v1554 = vpop.f32.mrb[0].mxu0
      %v1555 = vadd.f32 0.0, %v1554
      %v1556 = vpop.f32.mrb[0].mxu0
      %1557 = vmatprep.mubr.bf16.mxu0 0
      %1558 = vmatmul.mubr.bf16.gmra.mrb[0].mxu0 %v1498
      %v1559 = vpop.f32.mrb[0].mxu0
      %v1560 = vadd.f32 0.0, %v1559
      %v1561 = vpop.f32.mrb[0].mxu0
      %v1562 = vpop.f32.mrb[0].mxu0
      %v1563 = vadd.f32 0.0, %v1562
      %v1564 = vpop.f32.mrb[0].mxu0
      %1565 = vmatprep.mubr.bf16.mxu0 0
      %1566 = vmatmul.mubr.bf16.gmra.mrb[0].mxu0 %v1501
      %v1567 = vpop.f32.mrb[0].mxu0
      %v1568 = vadd.f32 0.0, %v1567
      %v1569 = vpop.f32.mrb[0].mxu0
      %v1570 = vpop.f32.mrb[0].mxu0
      %v1571 = vadd.f32 0.0, %v1570
      %v1572 = vpop.f32.mrb[0].mxu0
      %1573 = vmatprep.mubr.bf16.mxu0 0
      %1574 = vmatmul.mubr.bf16.gmra.mrb[0].mxu0 %v1504
      %v1575 = vpop.f32.mrb[0].mxu0
      %v1576 = vadd.f32 0.0, %v1575
      %v1577 = vpop.f32.mrb[0].mxu0
      %v1578 = vpop.f32.mrb[0].mxu0
      %v1579 = vpop.f32.mrb[0].mxu0
      %1580 = vdwg.mxu0
      %v1581 = vld [vmem:[#allocation2] sm:$0xff]
      %v1582 = vld [vmem:[#allocation2 + $0x8] sm:$0xff]
      %v1583 = vld [vmem:[#allocation2 + $0x10] sm:$0xff]
      %v1584 = vld [vmem:[#allocation2 + $0x18] sm:$0xff]
      %v1585 = vld [vmem:[#allocation2 + $0x20] sm:$0xff]
      %v1586 = vld [vmem:[#allocation2 + $0x28] sm:$0xff]
      %v1587 = vld [vmem:[#allocation2 + $0x30] sm:$0xff]
      %v1588 = vld [vmem:[#allocation2 + $0x38] sm:$0xff]
      %v1589 = vld [vmem:[#allocation2 + $0x40] sm:$0xff]
      %v1590 = vadd.f32 %v1581, %v1544
      %v1591 = vadd.f32 %v1582, %v1547
      %v1592 = vadd.f32 %v1583, %v1552
      %v1593 = vadd.f32 %v1584, %v1555
      %v1594 = vadd.f32 %v1585, %v1560
      %v1595 = vadd.f32 %v1586, %v1563
      %v1596 = vadd.f32 %v1587, %v1568
      %v1597 = vadd.f32 %v1588, %v1571
      %v1598 = vadd.f32 %v1589, %v1576
      %1599 = vst [vmem:[#allocation2] sm:$0xff] %v1590
      %1600 = vst [vmem:[#allocation2 + $0x8] sm:$0xff] %v1591
      %1601 = vst [vmem:[#allocation2 + $0x10] sm:$0xff] %v1592
      %1602 = vst [vmem:[#allocation2 + $0x18] sm:$0xff] %v1593
      %1603 = vst [vmem:[#allocation2 + $0x20] sm:$0xff] %v1594
      %1604 = vst [vmem:[#allocation2 + $0x28] sm:$0xff] %v1595
      %1605 = vst [vmem:[#allocation2 + $0x30] sm:$0xff] %v1596
      %1606 = vst [vmem:[#allocation2 + $0x38] sm:$0xff] %v1597
      %1607 = vst [vmem:[#allocation2 + $0x40] sm:$0xff] %v1598
      %v1608 = vld [vmem:[%s168 + $0x4] sm:$0xf]
      %v1609 = vld [vmem:[%s168 + $0x8] sm:$0xf]
      %v1610 = vld [vmem:[%s168 + $0xc] sm:$0xf]
      %v1611 = vld [vmem:[%s168 + $0x10] sm:$0xf]
      %v1612 = vld [vmem:[%s168 + $0x14] sm:$0xf]
      %v1613 = vld [vmem:[%s168 + $0x18] sm:$0xf]
      %v1614 = vld [vmem:[%s168 + $0x1c] sm:$0xf]
      %v1615 = vld [vmem:[%s168 + $0x20] sm:$0xf]
      %v1616 = vld [vmem:[%s168 + $0x24] sm:$0xf]
      %v1617 = vld [vmem:[%s168 + $0x28] sm:$0x1]
      %v1618 = vld [vmem:[%s172 + $0x10] sm:$0x3]
      %v1629 = vunpack.c.l.b16 %v1608
      %v1630 = vunpack.c.l.b16 %v1609
      %v1631 = vunpack.c.l.b16 %v1610
      %v1632 = vunpack.c.l.b16 %v1611
      %v1633 = vunpack.c.l.b16 %v1612
      %v1634 = vunpack.c.l.b16 %v1613
      %v1635 = vunpack.c.l.b16 %v1614
      %v1636 = vunpack.c.l.b16 %v1615
      %v1637 = vunpack.c.l.b16 %v1616
      %v1638 = vunpack.c.l.b16 %v1617
      %v1639 = vpack.c.b16 %v1630, %v1629
      %v1640 = vpack.c.b16 %v1632, %v1631
      %v1641 = vpack.c.b16 %v1634, %v1633
      %v1642 = vpack.c.b16 %v1636, %v1635
      %v1643 = vpack.c.b16 %v1638, %v1637
      %v1645 = vshrl.u32 %v1639, 16
      %v1647 = vshll.u32 %v1639, 16
      %v1649 = vrot.slane %v1647, 1
      %v1650 = vor.u32 %v1645, %v1649
      %v1652 = vshll.u32 %v1640, 16
      %v1654 = vrot.slane %v1652, 1
      %v1655 = vsel %vm519, %v1650, %v1654
      %v1656 = vshrl.u32 %v1640, 16
      %v1658 = vor.u32 %v1656, %v1654
      %v1660 = vshll.u32 %v1641, 16
      %v1662 = vrot.slane %v1660, 1
      %v1663 = vsel %vm519, %v1658, %v1662
      %v1664 = vshrl.u32 %v1641, 16
      %v1666 = vor.u32 %v1664, %v1662
      %v1668 = vshll.u32 %v1642, 16
      %v1670 = vrot.slane %v1668, 1
      %v1671 = vsel %vm519, %v1666, %v1670
      %v1672 = vshrl.u32 %v1642, 16
      %v1674 = vor.u32 %v1672, %v1670
      %v1676 = vshll.u32 %v1643, 16
      %v1678 = vrot.slane %v1676, 1
      %v1679 = vsel %vm519, %v1674, %v1678
      %v1680 = vshrl.u32 %v1643, 16
      %v1682 = vor.u32 %v1680, %v1678
      %v1684 = vsel %vm215, %v1655, 0
      %v1687 = vsel %vm215, %v1663, 0
      %v1690 = vsel %vm215, %v1671, 0
      %v1693 = vsel %vm215, %v1679, 0
      %v1696 = vsel %vm215, %v1682, 0
      %v1699 = vsel %vm231, %v1618, 0
      %1701 = vmatprep.subr.bf16.mxu0 0
      %1702 = vmatpush1.bf16.msra.mxu0 %v1699
      %1703 = vmatprep.subr.bf16.mxu0 0
      %1704 = vmatpush1.bf16.msra.mxu0 0
      %1705 = vmatprep.subr.bf16.mxu0 0
      %1706 = vmatpush1.bf16.msra.mxu0 0
      %1707 = vmatprep.subr.bf16.mxu0 0
      %1708 = vmatpush1.bf16.msra.mxu0 0
      %1709 = vmatprep.subr.bf16.mxu0 0
      %1710 = vmatpush1.bf16.msra.mxu0 0
      %1711 = vmatprep.subr.bf16.mxu0 0
      %1712 = vmatpush1.bf16.msra.mxu0 0
      %1713 = vmatprep.subr.bf16.mxu0 0
      %1714 = vmatpush1.bf16.msra.mxu0 0
      %1715 = vmatprep.subr.bf16.mxu0 0
      %1716 = vmatpush1.bf16.msra.mxu0 0
      %1717 = vmatprep.subr.bf16.mxu0 0
      %1718 = vmatpush1.bf16.msra.mxu0 0
      %1719 = vmatprep.subr.bf16.mxu0 0
      %1720 = vmatpush1.bf16.msra.mxu0 0
      %1721 = vmatprep.subr.bf16.mxu0 0
      %1722 = vmatpush1.bf16.msra.mxu0 0
      %1723 = vmatprep.subr.bf16.mxu0 0
      %1724 = vmatpush1.bf16.msra.mxu0 0
      %1725 = vmatprep.subr.bf16.mxu0 0
      %1726 = vmatpush1.bf16.msra.mxu0 0
      %1727 = vmatprep.subr.bf16.mxu0 0
      %1728 = vmatpush1.bf16.msra.mxu0 0
      %1729 = vmatprep.subr.bf16.mxu0 0
      %1730 = vmatpush1.bf16.msra.mxu0 0
      %1731 = vmatprep.subr.bf16.mxu0 0
      %1732 = vmatpush1.bf16.msra.mxu0 0
      %1733 = vmatprep.mubr.bf16.mxu0 0
      %1734 = vmatmul.mubr.bf16.gmra.mrb[0].mxu0 %v1684
      %v1735 = vpop.f32.mrb[0].mxu0
      %v1736 = vadd.f32 0.0, %v1735
      %v1737 = vpop.f32.mrb[0].mxu0
      %v1738 = vpop.f32.mrb[0].mxu0
      %v1739 = vadd.f32 0.0, %v1738
      %v1740 = vpop.f32.mrb[0].mxu0
      %1741 = vmatprep.mubr.bf16.mxu0 0
      %1742 = vmatmul.mubr.bf16.gmra.mrb[0].mxu0 %v1687
      %v1743 = vpop.f32.mrb[0].mxu0
      %v1744 = vadd.f32 0.0, %v1743
      %v1745 = vpop.f32.mrb[0].mxu0
      %v1746 = vpop.f32.mrb[0].mxu0
      %v1747 = vadd.f32 0.0, %v1746
      %v1748 = vpop.f32.mrb[0].mxu0
      %1749 = vmatprep.mubr.bf16.mxu0 0
      %1750 = vmatmul.mubr.bf16.gmra.mrb[0].mxu0 %v1690
      %v1751 = vpop.f32.mrb[0].mxu0
      %v1752 = vadd.f32 0.0, %v1751
      %v1753 = vpop.f32.mrb[0].mxu0
      %v1754 = vpop.f32.mrb[0].mxu0
      %v1755 = vadd.f32 0.0, %v1754
      %v1756 = vpop.f32.mrb[0].mxu0
      %1757 = vmatprep.mubr.bf16.mxu0 0
      %1758 = vmatmul.mubr.bf16.gmra.mrb[0].mxu0 %v1693
      %v1759 = vpop.f32.mrb[0].mxu0
      %v1760 = vadd.f32 0.0, %v1759
      %v1761 = vpop.f32.mrb[0].mxu0
      %v1762 = vpop.f32.mrb[0].mxu0
      %v1763 = vadd.f32 0.0, %v1762
      %v1764 = vpop.f32.mrb[0].mxu0
      %1765 = vmatprep.mubr.bf16.mxu0 0
      %1766 = vmatmul.mubr.bf16.gmra.mrb[0].mxu0 %v1696
      %v1767 = vpop.f32.mrb[0].mxu0
      %v1768 = vadd.f32 0.0, %v1767
      %v1769 = vpop.f32.mrb[0].mxu0
      %v1770 = vpop.f32.mrb[0].mxu0
      %v1771 = vpop.f32.mrb[0].mxu0
      %1772 = vdwg.mxu0
      %v1773 = vld [vmem:[#allocation2] sm:$0xff]
      %v1774 = vld [vmem:[#allocation2 + $0x8] sm:$0xff]
      %v1775 = vld [vmem:[#allocation2 + $0x10] sm:$0xff]
      %v1776 = vld [vmem:[#allocation2 + $0x18] sm:$0xff]
      %v1777 = vld [vmem:[#allocation2 + $0x20] sm:$0xff]
      %v1778 = vld [vmem:[#allocation2 + $0x28] sm:$0xff]
      %v1779 = vld [vmem:[#allocation2 + $0x30] sm:$0xff]
      %v1780 = vld [vmem:[#allocation2 + $0x38] sm:$0xff]
      %v1781 = vld [vmem:[#allocation2 + $0x40] sm:$0xff]
      %v1782 = vadd.f32 %v1773, %v1736
      %v1783 = vadd.f32 %v1774, %v1739
      %v1784 = vadd.f32 %v1775, %v1744
      %v1785 = vadd.f32 %v1776, %v1747
      %v1786 = vadd.f32 %v1777, %v1752
      %v1787 = vadd.f32 %v1778, %v1755
      %v1788 = vadd.f32 %v1779, %v1760
      %v1789 = vadd.f32 %v1780, %v1763
      %v1790 = vadd.f32 %v1781, %v1768
      %1791 = vst [vmem:[#allocation2] sm:$0xff] %v1782
      %1792 = vst [vmem:[#allocation2 + $0x8] sm:$0xff] %v1783
      %1793 = vst [vmem:[#allocation2 + $0x10] sm:$0xff] %v1784
      %1794 = vst [vmem:[#allocation2 + $0x18] sm:$0xff] %v1785
      %1795 = vst [vmem:[#allocation2 + $0x20] sm:$0xff] %v1786
      %1796 = vst [vmem:[#allocation2 + $0x28] sm:$0xff] %v1787
      %1797 = vst [vmem:[#allocation2 + $0x30] sm:$0xff] %v1788
      %1798 = vst [vmem:[#allocation2 + $0x38] sm:$0xff] %v1789
      %1799 = vst [vmem:[#allocation2 + $0x40] sm:$0xff] %v1790
      %v1800 = vld [vmem:[%s168 + $0x30] sm:$0xe]
      %v1801 = vld [vmem:[%s168 + $0x34] sm:$0xf]
      %v1802 = vld [vmem:[%s168 + $0x38] sm:$0xf]
      %v1803 = vld [vmem:[%s168 + $0x3c] sm:$0xf]
      %v1804 = vld [vmem:[%s168 + $0x40] sm:$0xf]
      %v1805 = vld [vmem:[%s168 + $0x44] sm:$0xf]
      %v1806 = vld [vmem:[%s168 + $0x48] sm:$0xf]
      %v1807 = vld [vmem:[%s168 + $0x4c] sm:$0xf]
      %v1808 = vld [vmem:[%s168 + $0x50] sm:$0xf]
      %v1809 = vld [vmem:[%s168 + $0x54] sm:$0x3]
      %v1810 = vld [vmem:[%s172 + $0x10] sm:$0xc]
      %v1821 = vunpack.c.l.b16 %v1800
      %v1822 = vunpack.c.l.b16 %v1801
      %v1823 = vunpack.c.l.b16 %v1802
      %v1824 = vunpack.c.l.b16 %v1803
      %v1825 = vunpack.c.l.b16 %v1804
      %v1826 = vunpack.c.l.b16 %v1805
      %v1827 = vunpack.c.l.b16 %v1806
      %v1828 = vunpack.c.l.b16 %v1807
      %v1829 = vunpack.c.l.b16 %v1808
      %v1830 = vunpack.c.l.b16 %v1809
      %v1831 = vpack.c.b16 %v1822, %v1821
      %v1832 = vpack.c.b16 %v1824, %v1823
      %v1833 = vpack.c.b16 %v1826, %v1825
      %v1834 = vpack.c.b16 %v1828, %v1827
      %v1835 = vpack.c.b16 %v1830, %v1829
      %v1837 = vshrl.u32 %v1831, 16
      %v1839 = vrot.slane %v1837, 1
      %v1840 = vshll.u32 %v1831, 16
      %v1842 = vrot.slane %v1840, 2
      %v1843 = vor.u32 %v1839, %v1842
      %v1845 = vshrl.u32 %v1832, 16
      %v1847 = vrot.slane %v1845, 1
      %v1848 = vshll.u32 %v1832, 16
      %v1850 = vrot.slane %v1848, 2
      %v1851 = vor.u32 %v1847, %v1850
      %v1852 = vsel %vm712, %v1843, %v1851
      %v1854 = vshrl.u32 %v1833, 16
      %v1856 = vrot.slane %v1854, 1
      %v1857 = vshll.u32 %v1833, 16
      %v1859 = vrot.slane %v1857, 2
      %v1860 = vor.u32 %v1856, %v1859
      %v1861 = vsel %vm712, %v1851, %v1860
      %v1863 = vshrl.u32 %v1834, 16
      %v1865 = vrot.slane %v1863, 1
      %v1866 = vshll.u32 %v1834, 16
      %v1868 = vrot.slane %v1866, 2
      %v1869 = vor.u32 %v1865, %v1868
      %v1870 = vsel %vm712, %v1860, %v1869
      %v1872 = vshrl.u32 %v1835, 16
      %v1874 = vrot.slane %v1872, 1
      %v1875 = vshll.u32 %v1835, 16
      %v1877 = vrot.slane %v1875, 2
      %v1878 = vor.u32 %v1874, %v1877
      %v1879 = vsel %vm712, %v1869, %v1878
      %v1881 = vunpack.c.l.b16 %v1810
      %v1882 = vpack.c.b16 %v1881, %v1881
      %v1883 = vrot.slane %v1882, 2
      %v1885 = vsel %vm215, %v1852, 0
      %v1888 = vsel %vm215, %v1861, 0
      %v1891 = vsel %vm215, %v1870, 0
      %v1894 = vsel %vm215, %v1879, 0
      %v1897 = vsel %vm215, %v1878, 0
      %v1900 = vsel %vm231, %v1883, 0
      %1902 = vmatprep.subr.bf16.mxu0 0
      %1903 = vmatpush1.bf16.msra.mxu0 %v1900
      %1904 = vmatprep.subr.bf16.mxu0 0
      %1905 = vmatpush1.bf16.msra.mxu0 0
      %1906 = vmatprep.subr.bf16.mxu0 0
      %1907 = vmatpush1.bf16.msra.mxu0 0
      %1908 = vmatprep.subr.bf16.mxu0 0
      %1909 = vmatpush1.bf16.msra.mxu0 0
      %1910 = vmatprep.subr.bf16.mxu0 0
      %1911 = vmatpush1.bf16.msra.mxu0 0
      %1912 = vmatprep.subr.bf16.mxu0 0
      %1913 = vmatpush1.bf16.msra.mxu0 0
      %1914 = vmatprep.subr.bf16.mxu0 0
      %1915 = vmatpush1.bf16.msra.mxu0 0
      %1916 = vmatprep.subr.bf16.mxu0 0
      %1917 = vmatpush1.bf16.msra.mxu0 0
      %1918 = vmatprep.subr.bf16.mxu0 0
      %1919 = vmatpush1.bf16.msra.mxu0 0
      %1920 = vmatprep.subr.bf16.mxu0 0
      %1921 = vmatpush1.bf16.msra.mxu0 0
      %1922 = vmatprep.subr.bf16.mxu0 0
      %1923 = vmatpush1.bf16.msra.mxu0 0
      %1924 = vmatprep.subr.bf16.mxu0 0
      %1925 = vmatpush1.bf16.msra.mxu0 0
      %1926 = vmatprep.subr.bf16.mxu0 0
      %1927 = vmatpush1.bf16.msra.mxu0 0
      %1928 = vmatprep.subr.bf16.mxu0 0
      %1929 = vmatpush1.bf16.msra.mxu0 0
      %1930 = vmatprep.subr.bf16.mxu0 0
      %1931 = vmatpush1.bf16.msra.mxu0 0
      %1932 = vmatprep.subr.bf16.mxu0 0
      %1933 = vmatpush1.bf16.msra.mxu0 0
      %1934 = vmatprep.mubr.bf16.mxu0 0
      %1935 = vmatmul.mubr.bf16.gmra.mrb[0].mxu0 %v1885
      %v1936 = vpop.f32.mrb[0].mxu0
      %v1937 = vadd.f32 0.0, %v1936
      %v1938 = vpop.f32.mrb[0].mxu0
      %v1939 = vpop.f32.mrb[0].mxu0
      %v1940 = vadd.f32 0.0, %v1939
      %v1941 = vpop.f32.mrb[0].mxu0
      %1942 = vmatprep.mubr.bf16.mxu0 0
      %1943 = vmatmul.mubr.bf16.gmra.mrb[0].mxu0 %v1888
      %v1944 = vpop.f32.mrb[0].mxu0
      %v1945 = vadd.f32 0.0, %v1944
      %v1946 = vpop.f32.mrb[0].mxu0
      %v1947 = vpop.f32.mrb[0].mxu0
      %v1948 = vadd.f32 0.0, %v1947
      %v1949 = vpop.f32.mrb[0].mxu0
      %1950 = vmatprep.mubr.bf16.mxu0 0
      %1951 = vmatmul.mubr.bf16.gmra.mrb[0].mxu0 %v1891
      %v1952 = vpop.f32.mrb[0].mxu0
      %v1953 = vadd.f32 0.0, %v1952
      %v1954 = vpop.f32.mrb[0].mxu0
      %v1955 = vpop.f32.mrb[0].mxu0
      %v1956 = vadd.f32 0.0, %v1955
      %v1957 = vpop.f32.mrb[0].mxu0
      %1958 = vmatprep.mubr.bf16.mxu0 0
      %1959 = vmatmul.mubr.bf16.gmra.mrb[0].mxu0 %v1894
      %v1960 = vpop.f32.mrb[0].mxu0
      %v1961 = vadd.f32 0.0, %v1960
      %v1962 = vpop.f32.mrb[0].mxu0
      %v1963 = vpop.f32.mrb[0].mxu0
      %v1964 = vadd.f32 0.0, %v1963
      %v1965 = vpop.f32.mrb[0].mxu0
      %1966 = vmatprep.mubr.bf16.mxu0 0
      %1967 = vmatmul.mubr.bf16.gmra.mrb[0].mxu0 %v1897
      %v1968 = vpop.f32.mrb[0].mxu0
      %v1969 = vadd.f32 0.0, %v1968
      %v1970 = vpop.f32.mrb[0].mxu0
      %v1971 = vpop.f32.mrb[0].mxu0
      %v1972 = vpop.f32.mrb[0].mxu0
      %1973 = vdwg.mxu0
      %v1974 = vld [vmem:[#allocation2] sm:$0xff]
      %v1975 = vld [vmem:[#allocation2 + $0x8] sm:$0xff]
      %v1976 = vld [vmem:[#allocation2 + $0x10] sm:$0xff]
      %v1977 = vld [vmem:[#allocation2 + $0x18] sm:$0xff]
      %v1978 = vld [vmem:[#allocation2 + $0x20] sm:$0xff]
      %v1979 = vld [vmem:[#allocation2 + $0x28] sm:$0xff]
      %v1980 = vld [vmem:[#allocation2 + $0x30] sm:$0xff]
      %v1981 = vld [vmem:[#allocation2 + $0x38] sm:$0xff]
      %v1982 = vld [vmem:[#allocation2 + $0x40] sm:$0xff]
      %v1983 = vadd.f32 %v1974, %v1937
      %v1984 = vadd.f32 %v1975, %v1940
      %v1985 = vadd.f32 %v1976, %v1945
      %v1986 = vadd.f32 %v1977, %v1948
      %v1987 = vadd.f32 %v1978, %v1953
      %v1988 = vadd.f32 %v1979, %v1956
      %v1989 = vadd.f32 %v1980, %v1961
      %v1990 = vadd.f32 %v1981, %v1964
      %v1991 = vadd.f32 %v1982, %v1969
      %1992 = vst [vmem:[#allocation2] sm:$0xff] %v1983
      %1993 = vst [vmem:[#allocation2 + $0x8] sm:$0xff] %v1984
      %1994 = vst [vmem:[#allocation2 + $0x10] sm:$0xff] %v1985
      %1995 = vst [vmem:[#allocation2 + $0x18] sm:$0xff] %v1986
      %1996 = vst [vmem:[#allocation2 + $0x20] sm:$0xff] %v1987
      %1997 = vst [vmem:[#allocation2 + $0x28] sm:$0xff] %v1988
      %1998 = vst [vmem:[#allocation2 + $0x30] sm:$0xff] %v1989
      %1999 = vst [vmem:[#allocation2 + $0x38] sm:$0xff] %v1990
      %2000 = vst [vmem:[#allocation2 + $0x40] sm:$0xff] %v1991
      %v2001 = vld [vmem:[%s168 + $0x4] sm:$0xe]
      %v2002 = vld [vmem:[%s168 + $0x8] sm:$0xf]
      %v2003 = vld [vmem:[%s168 + $0xc] sm:$0xf]
      %v2004 = vld [vmem:[%s168 + $0x10] sm:$0xf]
      %v2005 = vld [vmem:[%s168 + $0x14] sm:$0xf]
      %v2006 = vld [vmem:[%s168 + $0x18] sm:$0xf]
      %v2007 = vld [vmem:[%s168 + $0x1c] sm:$0xf]
      %v2008 = vld [vmem:[%s168 + $0x20] sm:$0xf]
      %v2009 = vld [vmem:[%s168 + $0x24] sm:$0xf]
      %v2010 = vld [vmem:[%s168 + $0x28] sm:$0x1]
      %v2011 = vld [vmem:[%s172 + $0x14] sm:$0x3]
      %v2022 = vunpack.c.l.b16 %v2001
      %v2023 = vunpack.c.l.b16 %v2002
      %v2024 = vunpack.c.l.b16 %v2003
      %v2025 = vunpack.c.l.b16 %v2004
      %v2026 = vunpack.c.l.b16 %v2005
      %v2027 = vunpack.c.l.b16 %v2006
      %v2028 = vunpack.c.l.b16 %v2007
      %v2029 = vunpack.c.l.b16 %v2008
      %v2030 = vunpack.c.l.b16 %v2009
      %v2031 = vunpack.c.l.b16 %v2010
      %v2032 = vpack.c.b16 %v2023, %v2022
      %v2033 = vpack.c.b16 %v2025, %v2024
      %v2034 = vpack.c.b16 %v2027, %v2026
      %v2035 = vpack.c.b16 %v2029, %v2028
      %v2036 = vpack.c.b16 %v2031, %v2030
      %v2037 = vrot.slane %v2032, 1
      %v2038 = vrot.slane %v2033, 1
      %v2039 = vsel %vm352, %v2037, %v2038
      %v2040 = vrot.slane %v2034, 1
      %v2041 = vsel %vm352, %v2038, %v2040
      %v2042 = vrot.slane %v2035, 1
      %v2043 = vsel %vm352, %v2040, %v2042
      %v2044 = vrot.slane %v2036, 1
      %v2045 = vsel %vm352, %v2042, %v2044
      %v2047 = vsel %vm215, %v2039, 0
      %v2050 = vsel %vm215, %v2041, 0
      %v2053 = vsel %vm215, %v2043, 0
      %v2056 = vsel %vm215, %v2045, 0
      %v2059 = vsel %vm215, %v2044, 0
      %v2062 = vsel %vm231, %v2011, 0
      %2064 = vmatprep.subr.bf16.mxu0 0
      %2065 = vmatpush1.bf16.msra.mxu0 %v2062
      %2066 = vmatprep.subr.bf16.mxu0 0
      %2067 = vmatpush1.bf16.msra.mxu0 0
      %2068 = vmatprep.subr.bf16.mxu0 0
      %2069 = vmatpush1.bf16.msra.mxu0 0
      %2070 = vmatprep.subr.bf16.mxu0 0
      %2071 = vmatpush1.bf16.msra.mxu0 0
      %2072 = vmatprep.subr.bf16.mxu0 0
      %2073 = vmatpush1.bf16.msra.mxu0 0
      %2074 = vmatprep.subr.bf16.mxu0 0
      %2075 = vmatpush1.bf16.msra.mxu0 0
      %2076 = vmatprep.subr.bf16.mxu0 0
      %2077 = vmatpush1.bf16.msra.mxu0 0
      %2078 = vmatprep.subr.bf16.mxu0 0
      %2079 = vmatpush1.bf16.msra.mxu0 0
      %2080 = vmatprep.subr.bf16.mxu0 0
      %2081 = vmatpush1.bf16.msra.mxu0 0
      %2082 = vmatprep.subr.bf16.mxu0 0
      %2083 = vmatpush1.bf16.msra.mxu0 0
      %2084 = vmatprep.subr.bf16.mxu0 0
      %2085 = vmatpush1.bf16.msra.mxu0 0
      %2086 = vmatprep.subr.bf16.mxu0 0
      %2087 = vmatpush1.bf16.msra.mxu0 0
      %2088 = vmatprep.subr.bf16.mxu0 0
      %2089 = vmatpush1.bf16.msra.mxu0 0
      %2090 = vmatprep.subr.bf16.mxu0 0
      %2091 = vmatpush1.bf16.msra.mxu0 0
      %2092 = vmatprep.subr.bf16.mxu0 0
      %2093 = vmatpush1.bf16.msra.mxu0 0
      %2094 = vmatprep.subr.bf16.mxu0 0
      %2095 = vmatpush1.bf16.msra.mxu0 0
      %2096 = vmatprep.mubr.bf16.mxu0 0
      %2097 = vmatmul.mubr.bf16.gmra.mrb[0].mxu0 %v2047
      %v2098 = vpop.f32.mrb[0].mxu0
      %v2099 = vadd.f32 0.0, %v2098
      %v2100 = vpop.f32.mrb[0].mxu0
      %v2101 = vpop.f32.mrb[0].mxu0
      %v2102 = vadd.f32 0.0, %v2101
      %v2103 = vpop.f32.mrb[0].mxu0
      %2104 = vmatprep.mubr.bf16.mxu0 0
      %2105 = vmatmul.mubr.bf16.gmra.mrb[0].mxu0 %v2050
      %v2106 = vpop.f32.mrb[0].mxu0
      %v2107 = vadd.f32 0.0, %v2106
      %v2108 = vpop.f32.mrb[0].mxu0
      %v2109 = vpop.f32.mrb[0].mxu0
      %v2110 = vadd.f32 0.0, %v2109
      %v2111 = vpop.f32.mrb[0].mxu0
      %2112 = vmatprep.mubr.bf16.mxu0 0
      %2113 = vmatmul.mubr.bf16.gmra.mrb[0].mxu0 %v2053
      %v2114 = vpop.f32.mrb[0].mxu0
      %v2115 = vadd.f32 0.0, %v2114
      %v2116 = vpop.f32.mrb[0].mxu0
      %v2117 = vpop.f32.mrb[0].mxu0
      %v2118 = vadd.f32 0.0, %v2117
      %v2119 = vpop.f32.mrb[0].mxu0
      %2120 = vmatprep.mubr.bf16.mxu0 0
      %2121 = vmatmul.mubr.bf16.gmra.mrb[0].mxu0 %v2056
      %v2122 = vpop.f32.mrb[0].mxu0
      %v2123 = vadd.f32 0.0, %v2122
      %v2124 = vpop.f32.mrb[0].mxu0
      %v2125 = vpop.f32.mrb[0].mxu0
      %v2126 = vadd.f32 0.0, %v2125
      %v2127 = vpop.f32.mrb[0].mxu0
      %2128 = vmatprep.mubr.bf16.mxu0 0
      %2129 = vmatmul.mubr.bf16.gmra.mrb[0].mxu0 %v2059
      %v2130 = vpop.f32.mrb[0].mxu0
      %v2131 = vadd.f32 0.0, %v2130
      %v2132 = vpop.f32.mrb[0].mxu0
      %v2133 = vpop.f32.mrb[0].mxu0
      %v2134 = vpop.f32.mrb[0].mxu0
      %2135 = vdwg.mxu0
      %v2136 = vld [vmem:[#allocation2] sm:$0xff]
      %v2137 = vld [vmem:[#allocation2 + $0x8] sm:$0xff]
      %v2138 = vld [vmem:[#allocation2 + $0x10] sm:$0xff]
      %v2139 = vld [vmem:[#allocation2 + $0x18] sm:$0xff]
      %v2140 = vld [vmem:[#allocation2 + $0x20] sm:$0xff]
      %v2141 = vld [vmem:[#allocation2 + $0x28] sm:$0xff]
      %v2142 = vld [vmem:[#allocation2 + $0x30] sm:$0xff]
      %v2143 = vld [vmem:[#allocation2 + $0x38] sm:$0xff]
      %v2144 = vld [vmem:[#allocation2 + $0x40] sm:$0xff]
      %v2145 = vadd.f32 %v2136, %v2099
      %v2146 = vadd.f32 %v2137, %v2102
      %v2147 = vadd.f32 %v2138, %v2107
      %v2148 = vadd.f32 %v2139, %v2110
      %v2149 = vadd.f32 %v2140, %v2115
      %v2150 = vadd.f32 %v2141, %v2118
      %v2151 = vadd.f32 %v2142, %v2123
      %v2152 = vadd.f32 %v2143, %v2126
      %v2153 = vadd.f32 %v2144, %v2131
      %2154 = vst [vmem:[#allocation2] sm:$0xff] %v2145
      %2155 = vst [vmem:[#allocation2 + $0x8] sm:$0xff] %v2146
      %2156 = vst [vmem:[#allocation2 + $0x10] sm:$0xff] %v2147
      %2157 = vst [vmem:[#allocation2 + $0x18] sm:$0xff] %v2148
      %2158 = vst [vmem:[#allocation2 + $0x20] sm:$0xff] %v2149
      %2159 = vst [vmem:[#allocation2 + $0x28] sm:$0xff] %v2150
      %2160 = vst [vmem:[#allocation2 + $0x30] sm:$0xff] %v2151
      %2161 = vst [vmem:[#allocation2 + $0x38] sm:$0xff] %v2152
      %2162 = vst [vmem:[#allocation2 + $0x40] sm:$0xff] %v2153
      %v2163 = vld [vmem:[%s168 + $0x30] sm:$0xc]
      %v2164 = vld [vmem:[%s168 + $0x34] sm:$0xf]
      %v2165 = vld [vmem:[%s168 + $0x38] sm:$0xf]
      %v2166 = vld [vmem:[%s168 + $0x3c] sm:$0xf]
      %v2167 = vld [vmem:[%s168 + $0x40] sm:$0xf]
      %v2168 = vld [vmem:[%s168 + $0x44] sm:$0xf]
      %v2169 = vld [vmem:[%s168 + $0x48] sm:$0xf]
      %v2170 = vld [vmem:[%s168 + $0x4c] sm:$0xf]
      %v2171 = vld [vmem:[%s168 + $0x50] sm:$0xf]
      %v2172 = vld [vmem:[%s168 + $0x54] sm:$0x3]
      %v2173 = vld [vmem:[%s172 + $0x14] sm:$0xc]
      %v2184 = vunpack.c.l.b16 %v2163
      %v2185 = vunpack.c.l.b16 %v2164
      %v2186 = vunpack.c.l.b16 %v2165
      %v2187 = vunpack.c.l.b16 %v2166
      %v2188 = vunpack.c.l.b16 %v2167
      %v2189 = vunpack.c.l.b16 %v2168
      %v2190 = vunpack.c.l.b16 %v2169
      %v2191 = vunpack.c.l.b16 %v2170
      %v2192 = vunpack.c.l.b16 %v2171
      %v2193 = vunpack.c.l.b16 %v2172
      %v2194 = vpack.c.b16 %v2185, %v2184
      %v2195 = vpack.c.b16 %v2187, %v2186
      %v2196 = vpack.c.b16 %v2189, %v2188
      %v2197 = vpack.c.b16 %v2191, %v2190
      %v2198 = vpack.c.b16 %v2193, %v2192
      %v2199 = vrot.slane %v2194, 2
      %v2200 = vrot.slane %v2195, 2
      %v2201 = vsel %vm914, %v2199, %v2200
      %v2202 = vrot.slane %v2196, 2
      %v2203 = vsel %vm914, %v2200, %v2202
      %v2204 = vrot.slane %v2197, 2
      %v2205 = vsel %vm914, %v2202, %v2204
      %v2206 = vrot.slane %v2198, 2
      %v2207 = vsel %vm914, %v2204, %v2206
      %v2209 = vunpack.c.l.b16 %v2173
      %v2210 = vpack.c.b16 %v2209, %v2209
      %v2211 = vrot.slane %v2210, 2
      %v2213 = vsel %vm215, %v2201, 0
      %v2216 = vsel %vm215, %v2203, 0
      %v2219 = vsel %vm215, %v2205, 0
      %v2222 = vsel %vm215, %v2207, 0
      %v2225 = vsel %vm215, %v2206, 0
      %v2228 = vsel %vm231, %v2211, 0
      %2230 = vmatprep.subr.bf16.mxu0 0
      %2231 = vmatpush1.bf16.msra.mxu0 %v2228
      %2232 = vmatprep.subr.bf16.mxu0 0
      %2233 = vmatpush1.bf16.msra.mxu0 0
      %2234 = vmatprep.subr.bf16.mxu0 0
      %2235 = vmatpush1.bf16.msra.mxu0 0
      %2236 = vmatprep.subr.bf16.mxu0 0
      %2237 = vmatpush1.bf16.msra.mxu0 0
      %2238 = vmatprep.subr.bf16.mxu0 0
      %2239 = vmatpush1.bf16.msra.mxu0 0
      %2240 = vmatprep.subr.bf16.mxu0 0
      %2241 = vmatpush1.bf16.msra.mxu0 0
      %2242 = vmatprep.subr.bf16.mxu0 0
      %2243 = vmatpush1.bf16.msra.mxu0 0
      %2244 = vmatprep.subr.bf16.mxu0 0
      %2245 = vmatpush1.bf16.msra.mxu0 0
      %2246 = vmatprep.subr.bf16.mxu0 0
      %2247 = vmatpush1.bf16.msra.mxu0 0
      %2248 = vmatprep.subr.bf16.mxu0 0
      %2249 = vmatpush1.bf16.msra.mxu0 0
      %2250 = vmatprep.subr.bf16.mxu0 0
      %2251 = vmatpush1.bf16.msra.mxu0 0
      %2252 = vmatprep.subr.bf16.mxu0 0
      %2253 = vmatpush1.bf16.msra.mxu0 0
      %2254 = vmatprep.subr.bf16.mxu0 0
      %2255 = vmatpush1.bf16.msra.mxu0 0
      %2256 = vmatprep.subr.bf16.mxu0 0
      %2257 = vmatpush1.bf16.msra.mxu0 0
      %2258 = vmatprep.subr.bf16.mxu0 0
      %2259 = vmatpush1.bf16.msra.mxu0 0
      %2260 = vmatprep.subr.bf16.mxu0 0
      %2261 = vmatpush1.bf16.msra.mxu0 0
      %2262 = vmatprep.mubr.bf16.mxu0 0
      %2263 = vmatmul.mubr.bf16.gmra.mrb[0].mxu0 %v2213
      %v2264 = vpop.f32.mrb[0].mxu0
      %v2265 = vadd.f32 0.0, %v2264
      %v2266 = vpop.f32.mrb[0].mxu0
      %v2267 = vpop.f32.mrb[0].mxu0
      %v2268 = vadd.f32 0.0, %v2267
      %v2269 = vpop.f32.mrb[0].mxu0
      %2270 = vmatprep.mubr.bf16.mxu0 0
      %2271 = vmatmul.mubr.bf16.gmra.mrb[0].mxu0 %v2216
      %v2272 = vpop.f32.mrb[0].mxu0
      %v2273 = vadd.f32 0.0, %v2272
      %v2274 = vpop.f32.mrb[0].mxu0
      %v2275 = vpop.f32.mrb[0].mxu0
      %v2276 = vadd.f32 0.0, %v2275
      %v2277 = vpop.f32.mrb[0].mxu0
      %2278 = vmatprep.mubr.bf16.mxu0 0
      %2279 = vmatmul.mubr.bf16.gmra.mrb[0].mxu0 %v2219
      %v2280 = vpop.f32.mrb[0].mxu0
      %v2281 = vadd.f32 0.0, %v2280
      %v2282 = vpop.f32.mrb[0].mxu0
      %v2283 = vpop.f32.mrb[0].mxu0
      %v2284 = vadd.f32 0.0, %v2283
      %v2285 = vpop.f32.mrb[0].mxu0
      %2286 = vmatprep.mubr.bf16.mxu0 0
      %2287 = vmatmul.mubr.bf16.gmra.mrb[0].mxu0 %v2222
      %v2288 = vpop.f32.mrb[0].mxu0
      %v2289 = vadd.f32 0.0, %v2288
      %v2290 = vpop.f32.mrb[0].mxu0
      %v2291 = vpop.f32.mrb[0].mxu0
      %v2292 = vadd.f32 0.0, %v2291
      %v2293 = vpop.f32.mrb[0].mxu0
      %2294 = vmatprep.mubr.bf16.mxu0 0
      %2295 = vmatmul.mubr.bf16.gmra.mrb[0].mxu0 %v2225
      %v2296 = vpop.f32.mrb[0].mxu0
      %v2297 = vadd.f32 0.0, %v2296
      %v2298 = vpop.f32.mrb[0].mxu0
      %v2299 = vpop.f32.mrb[0].mxu0
      %v2300 = vpop.f32.mrb[0].mxu0
      %2301 = vdwg.mxu0
      %v2302 = vld [vmem:[#allocation2] sm:$0xff]
      %v2303 = vld [vmem:[#allocation2 + $0x8] sm:$0xff]
      %v2304 = vld [vmem:[#allocation2 + $0x10] sm:$0xff]
      %v2305 = vld [vmem:[#allocation2 + $0x18] sm:$0xff]
      %v2306 = vld [vmem:[#allocation2 + $0x20] sm:$0xff]
      %v2307 = vld [vmem:[#allocation2 + $0x28] sm:$0xff]
      %v2308 = vld [vmem:[#allocation2 + $0x30] sm:$0xff]
      %v2309 = vld [vmem:[#allocation2 + $0x38] sm:$0xff]
      %v2310 = vld [vmem:[#allocation2 + $0x40] sm:$0xff]
      %v2311 = vadd.f32 %v2302, %v2265
      %v2312 = vadd.f32 %v2303, %v2268
      %v2313 = vadd.f32 %v2304, %v2273
      %v2314 = vadd.f32 %v2305, %v2276
      %v2315 = vadd.f32 %v2306, %v2281
      %v2316 = vadd.f32 %v2307, %v2284
      %v2317 = vadd.f32 %v2308, %v2289
      %v2318 = vadd.f32 %v2309, %v2292
      %v2319 = vadd.f32 %v2310, %v2297
      %2320 = vst [vmem:[#allocation2] sm:$0xff] %v2311
      %2321 = vst [vmem:[#allocation2 + $0x8] sm:$0xff] %v2312
      %2322 = vst [vmem:[#allocation2 + $0x10] sm:$0xff] %v2313
      %2323 = vst [vmem:[#allocation2 + $0x18] sm:$0xff] %v2314
      %2324 = vst [vmem:[#allocation2 + $0x20] sm:$0xff] %v2315
      %2325 = vst [vmem:[#allocation2 + $0x28] sm:$0xff] %v2316
      %2326 = vst [vmem:[#allocation2 + $0x30] sm:$0xff] %v2317
      %2327 = vst [vmem:[#allocation2 + $0x38] sm:$0xff] %v2318
      %2328 = vst [vmem:[#allocation2 + $0x40] sm:$0xff] %v2319
      %v2329 = vld [vmem:[%s168 + $0x5c] sm:$0xc]
      %v2330 = vld [vmem:[%s168 + $0x60] sm:$0xf]
      %v2331 = vld [vmem:[%s168 + $0x64] sm:$0xf]
      %v2332 = vld [vmem:[%s168 + $0x68] sm:$0xf]
      %v2333 = vld [vmem:[%s168 + $0x6c] sm:$0xf]
      %v2334 = vld [vmem:[%s168 + $0x70] sm:$0xf]
      %v2335 = vld [vmem:[%s168 + $0x74] sm:$0xf]
      %v2336 = vld [vmem:[%s168 + $0x78] sm:$0xf]
      %v2337 = vld [vmem:[%s168 + $0x7c] sm:$0xf]
      %v2338 = vld [vmem:[%s168 + $0x80] sm:$0x7]
      %v2339 = vld [vmem:[%s172 + $0x18] sm:$0x3]
      %v2350 = vunpack.c.l.b16 %v2329
      %v2351 = vunpack.c.l.b16 %v2330
      %v2352 = vunpack.c.l.b16 %v2331
      %v2353 = vunpack.c.l.b16 %v2332
      %v2354 = vunpack.c.l.b16 %v2333
      %v2355 = vunpack.c.l.b16 %v2334
      %v2356 = vunpack.c.l.b16 %v2335
      %v2357 = vunpack.c.l.b16 %v2336
      %v2358 = vunpack.c.l.b16 %v2337
      %v2359 = vunpack.c.l.b16 %v2338
      %v2360 = vpack.c.b16 %v2351, %v2350
      %v2361 = vpack.c.b16 %v2353, %v2352
      %v2362 = vpack.c.b16 %v2355, %v2354
      %v2363 = vpack.c.b16 %v2357, %v2356
      %v2364 = vpack.c.b16 %v2359, %v2358
      %v2366 = vshrl.u32 %v2360, 16
      %v2368 = vrot.slane %v2366, 2
      %v2369 = vshll.u32 %v2360, 16
      %v2371 = vrot.slane %v2369, 3
      %v2372 = vor.u32 %v2368, %v2371
      %v2374 = vshrl.u32 %v2361, 16
      %v2376 = vrot.slane %v2374, 2
      %v2377 = vshll.u32 %v2361, 16
      %v2379 = vrot.slane %v2377, 3
      %v2380 = vor.u32 %v2376, %v2379
      %v2381 = vsel %vm1244, %v2372, %v2380
      %v2383 = vshrl.u32 %v2362, 16
      %v2385 = vrot.slane %v2383, 2
      %v2386 = vshll.u32 %v2362, 16
      %v2388 = vrot.slane %v2386, 3
      %v2389 = vor.u32 %v2385, %v2388
      %v2390 = vsel %vm1244, %v2380, %v2389
      %v2392 = vshrl.u32 %v2363, 16
      %v2394 = vrot.slane %v2392, 2
      %v2395 = vshll.u32 %v2363, 16
      %v2397 = vrot.slane %v2395, 3
      %v2398 = vor.u32 %v2394, %v2397
      %v2399 = vsel %vm1244, %v2389, %v2398
      %v2401 = vshrl.u32 %v2364, 16
      %v2403 = vrot.slane %v2401, 2
      %v2404 = vshll.u32 %v2364, 16
      %v2406 = vrot.slane %v2404, 3
      %v2407 = vor.u32 %v2403, %v2406
      %v2408 = vsel %vm1244, %v2398, %v2407
      %v2410 = vsel %vm215, %v2381, 0
      %v2413 = vsel %vm215, %v2390, 0
      %v2416 = vsel %vm215, %v2399, 0
      %v2419 = vsel %vm215, %v2408, 0
      %v2422 = vsel %vm215, %v2407, 0
      %v2425 = vsel %vm231, %v2339, 0
      %2427 = vmatprep.subr.bf16.mxu0 0
      %2428 = vmatpush1.bf16.msra.mxu0 %v2425
      %2429 = vmatprep.subr.bf16.mxu0 0
      %2430 = vmatpush1.bf16.msra.mxu0 0
      %2431 = vmatprep.subr.bf16.mxu0 0
      %2432 = vmatpush1.bf16.msra.mxu0 0
      %2433 = vmatprep.subr.bf16.mxu0 0
      %2434 = vmatpush1.bf16.msra.mxu0 0
      %2435 = vmatprep.subr.bf16.mxu0 0
      %2436 = vmatpush1.bf16.msra.mxu0 0
      %2437 = vmatprep.subr.bf16.mxu0 0
      %2438 = vmatpush1.bf16.msra.mxu0 0
      %2439 = vmatprep.subr.bf16.mxu0 0
      %2440 = vmatpush1.bf16.msra.mxu0 0
      %2441 = vmatprep.subr.bf16.mxu0 0
      %2442 = vmatpush1.bf16.msra.mxu0 0
      %2443 = vmatprep.subr.bf16.mxu0 0
      %2444 = vmatpush1.bf16.msra.mxu0 0
      %2445 = vmatprep.subr.bf16.mxu0 0
      %2446 = vmatpush1.bf16.msra.mxu0 0
      %2447 = vmatprep.subr.bf16.mxu0 0
      %2448 = vmatpush1.bf16.msra.mxu0 0
      %2449 = vmatprep.subr.bf16.mxu0 0
      %2450 = vmatpush1.bf16.msra.mxu0 0
      %2451 = vmatprep.subr.bf16.mxu0 0
      %2452 = vmatpush1.bf16.msra.mxu0 0
      %2453 = vmatprep.subr.bf16.mxu0 0
      %2454 = vmatpush1.bf16.msra.mxu0 0
      %2455 = vmatprep.subr.bf16.mxu0 0
      %2456 = vmatpush1.bf16.msra.mxu0 0
      %2457 = vmatprep.subr.bf16.mxu0 0
      %2458 = vmatpush1.bf16.msra.mxu0 0
      %2459 = vmatprep.mubr.bf16.mxu0 0
      %2460 = vmatmul.mubr.bf16.gmra.mrb[0].mxu0 %v2410
      %v2461 = vpop.f32.mrb[0].mxu0
      %v2462 = vadd.f32 0.0, %v2461
      %v2463 = vpop.f32.mrb[0].mxu0
      %v2464 = vpop.f32.mrb[0].mxu0
      %v2465 = vadd.f32 0.0, %v2464
      %v2466 = vpop.f32.mrb[0].mxu0
      %2467 = vmatprep.mubr.bf16.mxu0 0
      %2468 = vmatmul.mubr.bf16.gmra.mrb[0].mxu0 %v2413
      %v2469 = vpop.f32.mrb[0].mxu0
      %v2470 = vadd.f32 0.0, %v2469
      %v2471 = vpop.f32.mrb[0].mxu0
      %v2472 = vpop.f32.mrb[0].mxu0
      %v2473 = vadd.f32 0.0, %v2472
      %v2474 = vpop.f32.mrb[0].mxu0
      %2475 = vmatprep.mubr.bf16.mxu0 0
      %2476 = vmatmul.mubr.bf16.gmra.mrb[0].mxu0 %v2416
      %v2477 = vpop.f32.mrb[0].mxu0
      %v2478 = vadd.f32 0.0, %v2477
      %v2479 = vpop.f32.mrb[0].mxu0
      %v2480 = vpop.f32.mrb[0].mxu0
      %v2481 = vadd.f32 0.0, %v2480
      %v2482 = vpop.f32.mrb[0].mxu0
      %2483 = vmatprep.mubr.bf16.mxu0 0
      %2484 = vmatmul.mubr.bf16.gmra.mrb[0].mxu0 %v2419
      %v2485 = vpop.f32.mrb[0].mxu0
      %v2486 = vadd.f32 0.0, %v2485
      %v2487 = vpop.f32.mrb[0].mxu0
      %v2488 = vpop.f32.mrb[0].mxu0
      %v2489 = vadd.f32 0.0, %v2488
      %v2490 = vpop.f32.mrb[0].mxu0
      %2491 = vmatprep.mubr.bf16.mxu0 0
      %2492 = vmatmul.mubr.bf16.gmra.mrb[0].mxu0 %v2422
      %v2493 = vpop.f32.mrb[0].mxu0
      %v2494 = vadd.f32 0.0, %v2493
      %v2495 = vpop.f32.mrb[0].mxu0
      %v2496 = vpop.f32.mrb[0].mxu0
      %v2497 = vpop.f32.mrb[0].mxu0
      %2498 = vdwg.mxu0
      %v2499 = vld [vmem:[#allocation2] sm:$0xff]
      %v2500 = vld [vmem:[#allocation2 + $0x8] sm:$0xff]
      %v2501 = vld [vmem:[#allocation2 + $0x10] sm:$0xff]
      %v2502 = vld [vmem:[#allocation2 + $0x18] sm:$0xff]
      %v2503 = vld [vmem:[#allocation2 + $0x20] sm:$0xff]
      %v2504 = vld [vmem:[#allocation2 + $0x28] sm:$0xff]
      %v2505 = vld [vmem:[#allocation2 + $0x30] sm:$0xff]
      %v2506 = vld [vmem:[#allocation2 + $0x38] sm:$0xff]
      %v2507 = vld [vmem:[#allocation2 + $0x40] sm:$0xff]
      %v2508 = vadd.f32 %v2499, %v2462
      %v2509 = vadd.f32 %v2500, %v2465
      %v2510 = vadd.f32 %v2501, %v2470
      %v2511 = vadd.f32 %v2502, %v2473
      %v2512 = vadd.f32 %v2503, %v2478
      %v2513 = vadd.f32 %v2504, %v2481
      %v2514 = vadd.f32 %v2505, %v2486
      %v2515 = vadd.f32 %v2506, %v2489
      %v2516 = vadd.f32 %v2507, %v2494
      %2517 = vst [vmem:[#allocation2] sm:$0xff] %v2508
      %2518 = vst [vmem:[#allocation2 + $0x8] sm:$0xff] %v2509
      %2519 = vst [vmem:[#allocation2 + $0x10] sm:$0xff] %v2510
      %2520 = vst [vmem:[#allocation2 + $0x18] sm:$0xff] %v2511
      %2521 = vst [vmem:[#allocation2 + $0x20] sm:$0xff] %v2512
      %2522 = vst [vmem:[#allocation2 + $0x28] sm:$0xff] %v2513
      %2523 = vst [vmem:[#allocation2 + $0x30] sm:$0xff] %v2514
      %2524 = vst [vmem:[#allocation2 + $0x38] sm:$0xff] %v2515
      %2525 = vst [vmem:[#allocation2 + $0x40] sm:$0xff] %v2516
      %v2526 = vld [vmem:[%s168 + $0x88] sm:$0x8]
      %v2527 = vld [vmem:[%s168 + $0x8c] sm:$0xf]
      %v2528 = vld [vmem:[%s168 + $0x90] sm:$0xf]
      %v2529 = vld [vmem:[%s168 + $0x94] sm:$0xf]
      %v2530 = vld [vmem:[%s168 + $0x98] sm:$0xf]
      %v2531 = vld [vmem:[%s168 + $0x9c] sm:$0xf]
      %v2532 = vld [vmem:[%s168 + $0xa0] sm:$0xf]
      %v2533 = vld [vmem:[%s168 + $0xa4] sm:$0xf]
      %v2534 = vld [vmem:[%s168 + $0xa8] sm:$0xf]
      %v2535 = vld [vmem:[%s168 + $0xac] sm:$0xf]
      %v2536 = vld [vmem:[%s172 + $0x18] sm:$0xc]
      %v2547 = vunpack.c.l.b16 %v2526
      %v2548 = vunpack.c.l.b16 %v2527
      %v2549 = vunpack.c.l.b16 %v2528
      %v2550 = vunpack.c.l.b16 %v2529
      %v2551 = vunpack.c.l.b16 %v2530
      %v2552 = vunpack.c.l.b16 %v2531
      %v2553 = vunpack.c.l.b16 %v2532
      %v2554 = vunpack.c.l.b16 %v2533
      %v2555 = vunpack.c.l.b16 %v2534
      %v2556 = vunpack.c.l.b16 %v2535
      %v2557 = vpack.c.b16 %v2548, %v2547
      %v2558 = vpack.c.b16 %v2550, %v2549
      %v2559 = vpack.c.b16 %v2552, %v2551
      %v2560 = vpack.c.b16 %v2554, %v2553
      %v2561 = vpack.c.b16 %v2556, %v2555
      %v2563 = vshrl.u32 %v2557, 16
      %v2565 = vrot.slane %v2563, 3
      %v2566 = vshll.u32 %v2557, 16
      %v2568 = vrot.slane %v2566, 4
      %v2569 = vor.u32 %v2565, %v2568
      %v2571 = vshrl.u32 %v2558, 16
      %v2573 = vrot.slane %v2571, 3
      %v2574 = vshll.u32 %v2558, 16
      %v2576 = vrot.slane %v2574, 4
      %v2577 = vor.u32 %v2573, %v2576
      %v2578 = vsel %vm1442, %v2569, %v2577
      %v2580 = vshrl.u32 %v2559, 16
      %v2582 = vrot.slane %v2580, 3
      %v2583 = vshll.u32 %v2559, 16
      %v2585 = vrot.slane %v2583, 4
      %v2586 = vor.u32 %v2582, %v2585
      %v2587 = vsel %vm1442, %v2577, %v2586
      %v2589 = vshrl.u32 %v2560, 16
      %v2591 = vrot.slane %v2589, 3
      %v2592 = vshll.u32 %v2560, 16
      %v2594 = vrot.slane %v2592, 4
      %v2595 = vor.u32 %v2591, %v2594
      %v2596 = vsel %vm1442, %v2586, %v2595
      %v2598 = vshrl.u32 %v2561, 16
      %v2600 = vrot.slane %v2598, 3
      %v2601 = vshll.u32 %v2561, 16
      %v2603 = vrot.slane %v2601, 4
      %v2604 = vor.u32 %v2600, %v2603
      %v2605 = vsel %vm1442, %v2595, %v2604
      %v2607 = vunpack.c.l.b16 %v2536
      %v2608 = vpack.c.b16 %v2607, %v2607
      %v2609 = vrot.slane %v2608, 2
      %v2611 = vsel %vm215, %v2578, 0
      %v2614 = vsel %vm215, %v2587, 0
      %v2617 = vsel %vm215, %v2596, 0
      %v2620 = vsel %vm215, %v2605, 0
      %v2623 = vsel %vm215, %v2604, 0
      %v2626 = vsel %vm231, %v2609, 0
      %2628 = vmatprep.subr.bf16.mxu0 0
      %2629 = vmatpush1.bf16.msra.mxu0 %v2626
      %2630 = vmatprep.subr.bf16.mxu0 0
      %2631 = vmatpush1.bf16.msra.mxu0 0
      %2632 = vmatprep.subr.bf16.mxu0 0
      %2633 = vmatpush1.bf16.msra.mxu0 0
      %2634 = vmatprep.subr.bf16.mxu0 0
      %2635 = vmatpush1.bf16.msra.mxu0 0
      %2636 = vmatprep.subr.bf16.mxu0 0
      %2637 = vmatpush1.bf16.msra.mxu0 0
      %2638 = vmatprep.subr.bf16.mxu0 0
      %2639 = vmatpush1.bf16.msra.mxu0 0
      %2640 = vmatprep.subr.bf16.mxu0 0
      %2641 = vmatpush1.bf16.msra.mxu0 0
      %2642 = vmatprep.subr.bf16.mxu0 0
      %2643 = vmatpush1.bf16.msra.mxu0 0
      %2644 = vmatprep.subr.bf16.mxu0 0
      %2645 = vmatpush1.bf16.msra.mxu0 0
      %2646 = vmatprep.subr.bf16.mxu0 0
      %2647 = vmatpush1.bf16.msra.mxu0 0
      %2648 = vmatprep.subr.bf16.mxu0 0
      %2649 = vmatpush1.bf16.msra.mxu0 0
      %2650 = vmatprep.subr.bf16.mxu0 0
      %2651 = vmatpush1.bf16.msra.mxu0 0
      %2652 = vmatprep.subr.bf16.mxu0 0
      %2653 = vmatpush1.bf16.msra.mxu0 0
      %2654 = vmatprep.subr.bf16.mxu0 0
      %2655 = vmatpush1.bf16.msra.mxu0 0
      %2656 = vmatprep.subr.bf16.mxu0 0
      %2657 = vmatpush1.bf16.msra.mxu0 0
      %2658 = vmatprep.subr.bf16.mxu0 0
      %2659 = vmatpush1.bf16.msra.mxu0 0
      %2660 = vmatprep.mubr.bf16.mxu0 0
      %2661 = vmatmul.mubr.bf16.gmra.mrb[0].mxu0 %v2611
      %v2662 = vpop.f32.mrb[0].mxu0
      %v2663 = vadd.f32 0.0, %v2662
      %v2664 = vpop.f32.mrb[0].mxu0
      %v2665 = vpop.f32.mrb[0].mxu0
      %v2666 = vadd.f32 0.0, %v2665
      %v2667 = vpop.f32.mrb[0].mxu0
      %2668 = vmatprep.mubr.bf16.mxu0 0
      %2669 = vmatmul.mubr.bf16.gmra.mrb[0].mxu0 %v2614
      %v2670 = vpop.f32.mrb[0].mxu0
      %v2671 = vadd.f32 0.0, %v2670
      %v2672 = vpop.f32.mrb[0].mxu0
      %v2673 = vpop.f32.mrb[0].mxu0
      %v2674 = vadd.f32 0.0, %v2673
      %v2675 = vpop.f32.mrb[0].mxu0
      %2676 = vmatprep.mubr.bf16.mxu0 0
      %2677 = vmatmul.mubr.bf16.gmra.mrb[0].mxu0 %v2617
      %v2678 = vpop.f32.mrb[0].mxu0
      %v2679 = vadd.f32 0.0, %v2678
      %v2680 = vpop.f32.mrb[0].mxu0
      %v2681 = vpop.f32.mrb[0].mxu0
      %v2682 = vadd.f32 0.0, %v2681
      %v2683 = vpop.f32.mrb[0].mxu0
      %2684 = vmatprep.mubr.bf16.mxu0 0
      %2685 = vmatmul.mubr.bf16.gmra.mrb[0].mxu0 %v2620
      %v2686 = vpop.f32.mrb[0].mxu0
      %v2687 = vadd.f32 0.0, %v2686
      %v2688 = vpop.f32.mrb[0].mxu0
      %v2689 = vpop.f32.mrb[0].mxu0
      %v2690 = vadd.f32 0.0, %v2689
      %v2691 = vpop.f32.mrb[0].mxu0
      %2692 = vmatprep.mubr.bf16.mxu0 0
      %2693 = vmatmul.mubr.bf16.gmra.mrb[0].mxu0 %v2623
      %v2694 = vpop.f32.mrb[0].mxu0
      %v2695 = vadd.f32 0.0, %v2694
      %v2696 = vpop.f32.mrb[0].mxu0
      %v2697 = vpop.f32.mrb[0].mxu0
      %v2698 = vpop.f32.mrb[0].mxu0
      %2699 = vdwg.mxu0
      %v2700 = vld [vmem:[#allocation2] sm:$0xff]
      %v2701 = vld [vmem:[#allocation2 + $0x8] sm:$0xff]
      %v2702 = vld [vmem:[#allocation2 + $0x10] sm:$0xff]
      %v2703 = vld [vmem:[#allocation2 + $0x18] sm:$0xff]
      %v2704 = vld [vmem:[#allocation2 + $0x20] sm:$0xff]
      %v2705 = vld [vmem:[#allocation2 + $0x28] sm:$0xff]
      %v2706 = vld [vmem:[#allocation2 + $0x30] sm:$0xff]
      %v2707 = vld [vmem:[#allocation2 + $0x38] sm:$0xff]
      %v2708 = vld [vmem:[#allocation2 + $0x40] sm:$0xff]
      %v2709 = vadd.f32 %v2700, %v2663
      %v2710 = vadd.f32 %v2701, %v2666
      %v2711 = vadd.f32 %v2702, %v2671
      %v2712 = vadd.f32 %v2703, %v2674
      %v2713 = vadd.f32 %v2704, %v2679
      %v2714 = vadd.f32 %v2705, %v2682
      %v2715 = vadd.f32 %v2706, %v2687
      %v2716 = vadd.f32 %v2707, %v2690
      %v2717 = vadd.f32 %v2708, %v2695
      %2718 = vst [vmem:[#allocation2] sm:$0xff] %v2709
      %2719 = vst [vmem:[#allocation2 + $0x8] sm:$0xff] %v2710
      %2720 = vst [vmem:[#allocation2 + $0x10] sm:$0xff] %v2711
      %2721 = vst [vmem:[#allocation2 + $0x18] sm:$0xff] %v2712
      %2722 = vst [vmem:[#allocation2 + $0x20] sm:$0xff] %v2713
      %2723 = vst [vmem:[#allocation2 + $0x28] sm:$0xff] %v2714
      %2724 = vst [vmem:[#allocation2 + $0x30] sm:$0xff] %v2715
      %2725 = vst [vmem:[#allocation2 + $0x38] sm:$0xff] %v2716
      %2726 = vst [vmem:[#allocation2 + $0x40] sm:$0xff] %v2717
      %v2727 = vld [vmem:[%s168 + $0x5c] sm:$0x8]
      %v2728 = vld [vmem:[%s168 + $0x60] sm:$0xf]
      %v2729 = vld [vmem:[%s168 + $0x64] sm:$0xf]
      %v2730 = vld [vmem:[%s168 + $0x68] sm:$0xf]
      %v2731 = vld [vmem:[%s168 + $0x6c] sm:$0xf]
      %v2732 = vld [vmem:[%s168 + $0x70] sm:$0xf]
      %v2733 = vld [vmem:[%s168 + $0x74] sm:$0xf]
      %v2734 = vld [vmem:[%s168 + $0x78] sm:$0xf]
      %v2735 = vld [vmem:[%s168 + $0x7c] sm:$0xf]
      %v2736 = vld [vmem:[%s168 + $0x80] sm:$0x7]
      %v2737 = vld [vmem:[%s172 + $0x1c] sm:$0x3]
      %v2748 = vunpack.c.l.b16 %v2727
      %v2749 = vunpack.c.l.b16 %v2728
      %v2750 = vunpack.c.l.b16 %v2729
      %v2751 = vunpack.c.l.b16 %v2730
      %v2752 = vunpack.c.l.b16 %v2731
      %v2753 = vunpack.c.l.b16 %v2732
      %v2754 = vunpack.c.l.b16 %v2733
      %v2755 = vunpack.c.l.b16 %v2734
      %v2756 = vunpack.c.l.b16 %v2735
      %v2757 = vunpack.c.l.b16 %v2736
      %v2758 = vpack.c.b16 %v2749, %v2748
      %v2759 = vpack.c.b16 %v2751, %v2750
      %v2760 = vpack.c.b16 %v2753, %v2752
      %v2761 = vpack.c.b16 %v2755, %v2754
      %v2762 = vpack.c.b16 %v2757, %v2756
      %v2763 = vrot.slane %v2758, 3
      %v2764 = vrot.slane %v2759, 3
      %v2765 = vsel %vm1077, %v2763, %v2764
      %v2766 = vrot.slane %v2760, 3
      %v2767 = vsel %vm1077, %v2764, %v2766
      %v2768 = vrot.slane %v2761, 3
      %v2769 = vsel %vm1077, %v2766, %v2768
      %v2770 = vrot.slane %v2762, 3
      %v2771 = vsel %vm1077, %v2768, %v2770
      %v2773 = vsel %vm215, %v2765, 0
      %v2776 = vsel %vm215, %v2767, 0
      %v2779 = vsel %vm215, %v2769, 0
      %v2782 = vsel %vm215, %v2771, 0
      %v2785 = vsel %vm215, %v2770, 0
      %v2788 = vsel %vm231, %v2737, 0
      %2790 = vmatprep.subr.bf16.mxu0 0
      %2791 = vmatpush1.bf16.msra.mxu0 %v2788
      %2792 = vmatprep.subr.bf16.mxu0 0
      %2793 = vmatpush1.bf16.msra.mxu0 0
      %2794 = vmatprep.subr.bf16.mxu0 0
      %2795 = vmatpush1.bf16.msra.mxu0 0
      %2796 = vmatprep.subr.bf16.mxu0 0
      %2797 = vmatpush1.bf16.msra.mxu0 0
      %2798 = vmatprep.subr.bf16.mxu0 0
      %2799 = vmatpush1.bf16.msra.mxu0 0
      %2800 = vmatprep.subr.bf16.mxu0 0
      %2801 = vmatpush1.bf16.msra.mxu0 0
      %2802 = vmatprep.subr.bf16.mxu0 0
      %2803 = vmatpush1.bf16.msra.mxu0 0
      %2804 = vmatprep.subr.bf16.mxu0 0
      %2805 = vmatpush1.bf16.msra.mxu0 0
      %2806 = vmatprep.subr.bf16.mxu0 0
      %2807 = vmatpush1.bf16.msra.mxu0 0
      %2808 = vmatprep.subr.bf16.mxu0 0
      %2809 = vmatpush1.bf16.msra.mxu0 0
      %2810 = vmatprep.subr.bf16.mxu0 0
      %2811 = vmatpush1.bf16.msra.mxu0 0
      %2812 = vmatprep.subr.bf16.mxu0 0
      %2813 = vmatpush1.bf16.msra.mxu0 0
      %2814 = vmatprep.subr.bf16.mxu0 0
      %2815 = vmatpush1.bf16.msra.mxu0 0
      %2816 = vmatprep.subr.bf16.mxu0 0
      %2817 = vmatpush1.bf16.msra.mxu0 0
      %2818 = vmatprep.subr.bf16.mxu0 0
      %2819 = vmatpush1.bf16.msra.mxu0 0
      %2820 = vmatprep.subr.bf16.mxu0 0
      %2821 = vmatpush1.bf16.msra.mxu0 0
      %2822 = vmatprep.mubr.bf16.mxu0 0
      %2823 = vmatmul.mubr.bf16.gmra.mrb[0].mxu0 %v2773
      %v2824 = vpop.f32.mrb[0].mxu0
      %v2825 = vadd.f32 0.0, %v2824
      %v2826 = vpop.f32.mrb[0].mxu0
      %v2827 = vpop.f32.mrb[0].mxu0
      %v2828 = vadd.f32 0.0, %v2827
      %v2829 = vpop.f32.mrb[0].mxu0
      %2830 = vmatprep.mubr.bf16.mxu0 0
      %2831 = vmatmul.mubr.bf16.gmra.mrb[0].mxu0 %v2776
      %v2832 = vpop.f32.mrb[0].mxu0
      %v2833 = vadd.f32 0.0, %v2832
      %v2834 = vpop.f32.mrb[0].mxu0
      %v2835 = vpop.f32.mrb[0].mxu0
      %v2836 = vadd.f32 0.0, %v2835
      %v2837 = vpop.f32.mrb[0].mxu0
      %2838 = vmatprep.mubr.bf16.mxu0 0
      %2839 = vmatmul.mubr.bf16.gmra.mrb[0].mxu0 %v2779
      %v2840 = vpop.f32.mrb[0].mxu0
      %v2841 = vadd.f32 0.0, %v2840
      %v2842 = vpop.f32.mrb[0].mxu0
      %v2843 = vpop.f32.mrb[0].mxu0
      %v2844 = vadd.f32 0.0, %v2843
      %v2845 = vpop.f32.mrb[0].mxu0
      %2846 = vmatprep.mubr.bf16.mxu0 0
      %2847 = vmatmul.mubr.bf16.gmra.mrb[0].mxu0 %v2782
      %v2848 = vpop.f32.mrb[0].mxu0
      %v2849 = vadd.f32 0.0, %v2848
      %v2850 = vpop.f32.mrb[0].mxu0
      %v2851 = vpop.f32.mrb[0].mxu0
      %v2852 = vadd.f32 0.0, %v2851
      %v2853 = vpop.f32.mrb[0].mxu0
      %2854 = vmatprep.mubr.bf16.mxu0 0
      %2855 = vmatmul.mubr.bf16.gmra.mrb[0].mxu0 %v2785
      %v2856 = vpop.f32.mrb[0].mxu0
      %v2857 = vadd.f32 0.0, %v2856
      %v2858 = vpop.f32.mrb[0].mxu0
      %v2859 = vpop.f32.mrb[0].mxu0
      %v2860 = vpop.f32.mrb[0].mxu0
      %2861 = vdwg.mxu0
      %v2862 = vld [vmem:[#allocation2] sm:$0xff]
      %v2863 = vld [vmem:[#allocation2 + $0x8] sm:$0xff]
      %v2864 = vld [vmem:[#allocation2 + $0x10] sm:$0xff]
      %v2865 = vld [vmem:[#allocation2 + $0x18] sm:$0xff]
      %v2866 = vld [vmem:[#allocation2 + $0x20] sm:$0xff]
      %v2867 = vld [vmem:[#allocation2 + $0x28] sm:$0xff]
      %v2868 = vld [vmem:[#allocation2 + $0x30] sm:$0xff]
      %v2869 = vld [vmem:[#allocation2 + $0x38] sm:$0xff]
      %v2870 = vld [vmem:[#allocation2 + $0x40] sm:$0xff]
      %v2871 = vadd.f32 %v2862, %v2825
      %v2872 = vadd.f32 %v2863, %v2828
      %v2873 = vadd.f32 %v2864, %v2833
      %v2874 = vadd.f32 %v2865, %v2836
      %v2875 = vadd.f32 %v2866, %v2841
      %v2876 = vadd.f32 %v2867, %v2844
      %v2877 = vadd.f32 %v2868, %v2849
      %v2878 = vadd.f32 %v2869, %v2852
      %v2879 = vadd.f32 %v2870, %v2857
      %2880 = vst [vmem:[#allocation2] sm:$0xff] %v2871
      %2881 = vst [vmem:[#allocation2 + $0x8] sm:$0xff] %v2872
      %2882 = vst [vmem:[#allocation2 + $0x10] sm:$0xff] %v2873
      %2883 = vst [vmem:[#allocation2 + $0x18] sm:$0xff] %v2874
      %2884 = vst [vmem:[#allocation2 + $0x20] sm:$0xff] %v2875
      %2885 = vst [vmem:[#allocation2 + $0x28] sm:$0xff] %v2876
      %2886 = vst [vmem:[#allocation2 + $0x30] sm:$0xff] %v2877
      %2887 = vst [vmem:[#allocation2 + $0x38] sm:$0xff] %v2878
      %2888 = vst [vmem:[#allocation2 + $0x40] sm:$0xff] %v2879
      %v2889 = vld [vmem:[%s168 + $0x8c] sm:$0xf]
      %v2890 = vld [vmem:[%s168 + $0x90] sm:$0xf]
      %v2891 = vld [vmem:[%s168 + $0x94] sm:$0xf]
      %v2892 = vld [vmem:[%s168 + $0x98] sm:$0xf]
      %v2893 = vld [vmem:[%s168 + $0x9c] sm:$0xf]
      %v2894 = vld [vmem:[%s168 + $0xa0] sm:$0xf]
      %v2895 = vld [vmem:[%s168 + $0xa4] sm:$0xf]
      %v2896 = vld [vmem:[%s168 + $0xa8] sm:$0xf]
      %v2897 = vld [vmem:[%s168 + $0xac] sm:$0xf]
      %v2898 = vld [vmem:[%s172 + $0x1c] sm:$0xc]
      %v2908 = vunpack.c.l.b16 %v2889
      %v2909 = vunpack.c.l.b16 %v2890
      %v2910 = vunpack.c.l.b16 %v2891
      %v2911 = vunpack.c.l.b16 %v2892
      %v2912 = vunpack.c.l.b16 %v2893
      %v2913 = vunpack.c.l.b16 %v2894
      %v2914 = vunpack.c.l.b16 %v2895
      %v2915 = vunpack.c.l.b16 %v2896
      %v2916 = vunpack.c.l.b16 %v2897
      %v2917 = vpack.c.b16 %v2909, %v2908
      %v2918 = vpack.c.b16 %v2911, %v2910
      %v2919 = vpack.c.b16 %v2913, %v2912
      %v2920 = vpack.c.b16 %v2915, %v2914
      %v2921 = vpack.c.b16 %v2916, %v2916
      %v2923 = vunpack.c.l.b16 %v2898
      %v2924 = vpack.c.b16 %v2923, %v2923
      %v2925 = vrot.slane %v2924, 2
      %v2927 = vsel %vm215, %v2917, 0
      %v2930 = vsel %vm215, %v2918, 0
      %v2933 = vsel %vm215, %v2919, 0
      %v2936 = vsel %vm215, %v2920, 0
      %v2939 = vsel %vm215, %v2921, 0
      %v2942 = vsel %vm231, %v2925, 0
      %2944 = vmatprep.subr.bf16.mxu0 0
      %2945 = vmatpush1.bf16.msra.mxu0 %v2942
      %2946 = vmatprep.subr.bf16.mxu0 0
      %2947 = vmatpush1.bf16.msra.mxu0 0
      %2948 = vmatprep.subr.bf16.mxu0 0
      %2949 = vmatpush1.bf16.msra.mxu0 0
      %2950 = vmatprep.subr.bf16.mxu0 0
      %2951 = vmatpush1.bf16.msra.mxu0 0
      %2952 = vmatprep.subr.bf16.mxu0 0
      %2953 = vmatpush1.bf16.msra.mxu0 0
      %2954 = vmatprep.subr.bf16.mxu0 0
      %2955 = vmatpush1.bf16.msra.mxu0 0
      %2956 = vmatprep.subr.bf16.mxu0 0
      %2957 = vmatpush1.bf16.msra.mxu0 0
      %2958 = vmatprep.subr.bf16.mxu0 0
      %2959 = vmatpush1.bf16.msra.mxu0 0
      %2960 = vmatprep.subr.bf16.mxu0 0
      %2961 = vmatpush1.bf16.msra.mxu0 0
      %2962 = vmatprep.subr.bf16.mxu0 0
      %2963 = vmatpush1.bf16.msra.mxu0 0
      %2964 = vmatprep.subr.bf16.mxu0 0
      %2965 = vmatpush1.bf16.msra.mxu0 0
      %2966 = vmatprep.subr.bf16.mxu0 0
      %2967 = vmatpush1.bf16.msra.mxu0 0
      %2968 = vmatprep.subr.bf16.mxu0 0
      %2969 = vmatpush1.bf16.msra.mxu0 0
      %2970 = vmatprep.subr.bf16.mxu0 0
      %2971 = vmatpush1.bf16.msra.mxu0 0
      %2972 = vmatprep.subr.bf16.mxu0 0
      %2973 = vmatpush1.bf16.msra.mxu0 0
      %2974 = vmatprep.subr.bf16.mxu0 0
      %2975 = vmatpush1.bf16.msra.mxu0 0
      %2976 = vmatprep.mubr.bf16.mxu0 0
      %2977 = vmatmul.mubr.bf16.gmra.mrb[0].mxu0 %v2927
      %v2978 = vpop.f32.mrb[0].mxu0
      %v2979 = vadd.f32 0.0, %v2978
      %v2980 = vpop.f32.mrb[0].mxu0
      %v2981 = vpop.f32.mrb[0].mxu0
      %v2982 = vadd.f32 0.0, %v2981
      %v2983 = vpop.f32.mrb[0].mxu0
      %2984 = vmatprep.mubr.bf16.mxu0 0
      %2985 = vmatmul.mubr.bf16.gmra.mrb[0].mxu0 %v2930
      %v2986 = vpop.f32.mrb[0].mxu0
      %v2987 = vadd.f32 0.0, %v2986
      %v2988 = vpop.f32.mrb[0].mxu0
      %v2989 = vpop.f32.mrb[0].mxu0
      %v2990 = vadd.f32 0.0, %v2989
      %v2991 = vpop.f32.mrb[0].mxu0
      %2992 = vmatprep.mubr.bf16.mxu0 0
      %2993 = vmatmul.mubr.bf16.gmra.mrb[0].mxu0 %v2933
      %v2994 = vpop.f32.mrb[0].mxu0
      %v2995 = vadd.f32 0.0, %v2994
      %v2996 = vpop.f32.mrb[0].mxu0
      %v2997 = vpop.f32.mrb[0].mxu0
      %v2998 = vadd.f32 0.0, %v2997
      %v2999 = vpop.f32.mrb[0].mxu0
      %3000 = vmatprep.mubr.bf16.mxu0 0
      %3001 = vmatmul.mubr.bf16.gmra.mrb[0].mxu0 %v2936
      %v3002 = vpop.f32.mrb[0].mxu0
      %v3003 = vadd.f32 0.0, %v3002
      %v3004 = vpop.f32.mrb[0].mxu0
      %v3005 = vpop.f32.mrb[0].mxu0
      %v3006 = vadd.f32 0.0, %v3005
      %v3007 = vpop.f32.mrb[0].mxu0
      %3008 = vmatprep.mubr.bf16.mxu0 0
      %3009 = vmatmul.mubr.bf16.gmra.mrb[0].mxu0 %v2939
      %v3010 = vpop.f32.mrb[0].mxu0
      %v3011 = vadd.f32 0.0, %v3010
      %v3012 = vpop.f32.mrb[0].mxu0
      %v3013 = vpop.f32.mrb[0].mxu0
      %v3014 = vpop.f32.mrb[0].mxu0
      %3015 = vdwg.mxu0
      %v3016 = vld [vmem:[#allocation2] sm:$0xff]
      %v3017 = vld [vmem:[#allocation2 + $0x8] sm:$0xff]
      %v3018 = vld [vmem:[#allocation2 + $0x10] sm:$0xff]
      %v3019 = vld [vmem:[#allocation2 + $0x18] sm:$0xff]
      %v3020 = vld [vmem:[#allocation2 + $0x20] sm:$0xff]
      %v3021 = vld [vmem:[#allocation2 + $0x28] sm:$0xff]
      %v3022 = vld [vmem:[#allocation2 + $0x30] sm:$0xff]
      %v3023 = vld [vmem:[#allocation2 + $0x38] sm:$0xff]
      %v3024 = vld [vmem:[#allocation2 + $0x40] sm:$0xff]
      %v3025 = vadd.f32 %v3016, %v2979
      %v3026 = vadd.f32 %v3017, %v2982
      %v3027 = vadd.f32 %v3018, %v2987
      %v3028 = vadd.f32 %v3019, %v2990
      %v3029 = vadd.f32 %v3020, %v2995
      %v3030 = vadd.f32 %v3021, %v2998
      %v3031 = vadd.f32 %v3022, %v3003
      %v3032 = vadd.f32 %v3023, %v3006
      %v3033 = vadd.f32 %v3024, %v3011
      %3034 = vst [vmem:[#allocation2] sm:$0xff] %v3025
      %3035 = vst [vmem:[#allocation2 + $0x8] sm:$0xff] %v3026
      %3036 = vst [vmem:[#allocation2 + $0x10] sm:$0xff] %v3027
      %3037 = vst [vmem:[#allocation2 + $0x18] sm:$0xff] %v3028
      %3038 = vst [vmem:[#allocation2 + $0x20] sm:$0xff] %v3029
      %3039 = vst [vmem:[#allocation2 + $0x28] sm:$0xff] %v3030
      %3040 = vst [vmem:[#allocation2 + $0x30] sm:$0xff] %v3031
      %3041 = vst [vmem:[#allocation2 + $0x38] sm:$0xff] %v3032
      %3042 = vst [vmem:[#allocation2 + $0x40] sm:$0xff] %v3033
      %v3043 = vld [vmem:[#allocation2] sm:$0xff]
      %v3044 = vld [vmem:[#allocation2 + $0x8] sm:$0xff]
      %v3045 = vld [vmem:[#allocation2 + $0x10] sm:$0xff]
      %v3046 = vld [vmem:[#allocation2 + $0x18] sm:$0xff]
      %v3047 = vld [vmem:[#allocation2 + $0x20] sm:$0xff]
      %v3048 = vld [vmem:[#allocation2 + $0x28] sm:$0xff]
      %v3049 = vld [vmem:[#allocation2 + $0x30] sm:$0xff]
      %v3050 = vld [vmem:[#allocation2 + $0x38] sm:$0xff]
      %v3051 = vld [vmem:[#allocation2 + $0x40] sm:$0xff]
      %v3052 = vlaneseq
      %v3053 = vshrl.u32 %v3052, 7
      %v3054 = vadd.s32 %v3053, 8
      %v3055 = vadd.s32 %v3053, 16
      %v3056 = vadd.s32 %v3053, 24
      %v3057 = vadd.s32 %v3053, 32
      %v3058 = vadd.s32 %v3053, 40
      %v3059 = vadd.s32 %v3053, 48
      %v3060 = vadd.s32 %v3053, 56
      %v3061 = vadd.s32 %v3053, 64
      %vm3062 = vcmp.lt.s32.totalorder %v3053, 0
      %v3063 = vsub.s32 0, %v3053
      %v3064 = vsel %vm3062, %v3063, %v3053
      %v3065 = vmul.u32.u64.compose %v3064, 3817748708
      %v3066 = vextract.low.u32 %v3065
      %v3067 = vextract.high.u32 %v3065
      %v3068 = vshrl.u32 %v3067, 3
      %v3069 = vmul.u32 %v3068, 9
      %v3070 = vsub.s32 %v3064, %v3069
      %v3071 = vsub.s32 0, %v3070
      %v3072 = vsel %vm3062, %v3071, %v3070
      %vm3073 = vcmp.lt.s32.totalorder %v3054, 0
      %v3074 = vsub.s32 0, %v3054
      %v3075 = vsel %vm3073, %v3074, %v3054
      %v3076 = vmul.u32.u64.compose %v3075, 3817748708
      %v3077 = vextract.low.u32 %v3076
      %v3078 = vextract.high.u32 %v3076
      %v3079 = vshrl.u32 %v3078, 3
      %v3080 = vmul.u32 %v3079, 9
      %v3081 = vsub.s32 %v3075, %v3080
      %v3082 = vsub.s32 0, %v3081
      %v3083 = vsel %vm3073, %v3082, %v3081
      %vm3084 = vcmp.lt.s32.totalorder %v3055, 0
      %v3085 = vsub.s32 0, %v3055
      %v3086 = vsel %vm3084, %v3085, %v3055
      %v3087 = vmul.u32.u64.compose %v3086, 3817748708
      %v3088 = vextract.low.u32 %v3087
      %v3089 = vextract.high.u32 %v3087
      %v3090 = vshrl.u32 %v3089, 3
      %v3091 = vmul.u32 %v3090, 9
      %v3092 = vsub.s32 %v3086, %v3091
      %v3093 = vsub.s32 0, %v3092
      %v3094 = vsel %vm3084, %v3093, %v3092
      %vm3095 = vcmp.lt.s32.totalorder %v3056, 0
      %v3096 = vsub.s32 0, %v3056
      %v3097 = vsel %vm3095, %v3096, %v3056
      %v3098 = vmul.u32.u64.compose %v3097, 3817748708
      %v3099 = vextract.low.u32 %v3098
      %v3100 = vextract.high.u32 %v3098
      %v3101 = vshrl.u32 %v3100, 3
      %v3102 = vmul.u32 %v3101, 9
      %v3103 = vsub.s32 %v3097, %v3102
      %v3104 = vsub.s32 0, %v3103
      %v3105 = vsel %vm3095, %v3104, %v3103
      %vm3106 = vcmp.lt.s32.totalorder %v3057, 0
      %v3107 = vsub.s32 0, %v3057
      %v3108 = vsel %vm3106, %v3107, %v3057
      %v3109 = vmul.u32.u64.compose %v3108, 3817748708
      %v3110 = vextract.low.u32 %v3109
      %v3111 = vextract.high.u32 %v3109
      %v3112 = vshrl.u32 %v3111, 3
      %v3113 = vmul.u32 %v3112, 9
      %v3114 = vsub.s32 %v3108, %v3113
      %v3115 = vsub.s32 0, %v3114
      %v3116 = vsel %vm3106, %v3115, %v3114
      %vm3117 = vcmp.lt.s32.totalorder %v3058, 0
      %v3118 = vsub.s32 0, %v3058
      %v3119 = vsel %vm3117, %v3118, %v3058
      %v3120 = vmul.u32.u64.compose %v3119, 3817748708
      %v3121 = vextract.low.u32 %v3120
      %v3122 = vextract.high.u32 %v3120
      %v3123 = vshrl.u32 %v3122, 3
      %v3124 = vmul.u32 %v3123, 9
      %v3125 = vsub.s32 %v3119, %v3124
      %v3126 = vsub.s32 0, %v3125
      %v3127 = vsel %vm3117, %v3126, %v3125
      %vm3128 = vcmp.lt.s32.totalorder %v3059, 0
      %v3129 = vsub.s32 0, %v3059
      %v3130 = vsel %vm3128, %v3129, %v3059
      %v3131 = vmul.u32.u64.compose %v3130, 3817748708
      %v3132 = vextract.low.u32 %v3131
      %v3133 = vextract.high.u32 %v3131
      %v3134 = vshrl.u32 %v3133, 3
      %v3135 = vmul.u32 %v3134, 9
      %v3136 = vsub.s32 %v3130, %v3135
      %v3137 = vsub.s32 0, %v3136
      %v3138 = vsel %vm3128, %v3137, %v3136
      %vm3139 = vcmp.lt.s32.totalorder %v3060, 0
      %v3140 = vsub.s32 0, %v3060
      %v3141 = vsel %vm3139, %v3140, %v3060
      %v3142 = vmul.u32.u64.compose %v3141, 3817748708
      %v3143 = vextract.low.u32 %v3142
      %v3144 = vextract.high.u32 %v3142
      %v3145 = vshrl.u32 %v3144, 3
      %v3146 = vmul.u32 %v3145, 9
      %v3147 = vsub.s32 %v3141, %v3146
      %v3148 = vsub.s32 0, %v3147
      %v3149 = vsel %vm3139, %v3148, %v3147
      %vm3150 = vcmp.lt.s32.totalorder %v3061, 0
      %v3151 = vsub.s32 0, %v3061
      %v3152 = vsel %vm3150, %v3151, %v3061
      %v3153 = vmul.u32.u64.compose %v3152, 3817748708
      %v3154 = vextract.low.u32 %v3153
      %v3155 = vextract.high.u32 %v3153
      %v3156 = vshrl.u32 %v3155, 3
      %v3157 = vmul.u32 %v3156, 9
      %v3158 = vsub.s32 %v3152, %v3157
      %v3159 = vsub.s32 0, %v3158
      %v3160 = vsel %vm3150, %v3159, %v3158
      %vm3161 = vcmp.ne.s32.totalorder %v3072, 0
      %vm3162 = vcmp.ne.s32.totalorder %v3083, 0
      %vm3163 = vcmp.ne.s32.totalorder %v3094, 0
      %vm3164 = vcmp.ne.s32.totalorder %v3105, 0
      %vm3165 = vcmp.ne.s32.totalorder %v3116, 0
      %vm3166 = vcmp.ne.s32.totalorder %v3127, 0
      %vm3167 = vcmp.ne.s32.totalorder %v3138, 0
      %vm3168 = vcmp.ne.s32.totalorder %v3149, 0
      %vm3169 = vcmp.ne.s32.totalorder %v3160, 0
      %vm3170 = vcmp.lt.s32.totalorder %v3072, 0
      %vm3171 = vcmp.lt.s32.totalorder %v3083, 0
      %vm3172 = vcmp.lt.s32.totalorder %v3094, 0
      %vm3173 = vcmp.lt.s32.totalorder %v3105, 0
      %vm3174 = vcmp.lt.s32.totalorder %v3116, 0
      %vm3175 = vcmp.lt.s32.totalorder %v3127, 0
      %vm3176 = vcmp.lt.s32.totalorder %v3138, 0
      %vm3177 = vcmp.lt.s32.totalorder %v3149, 0
      %vm3178 = vcmp.lt.s32.totalorder %v3160, 0
      %vm3179 = vmand %vm3170, %vm3161
      %vm3180 = vmand %vm3171, %vm3162
      %vm3181 = vmand %vm3172, %vm3163
      %vm3182 = vmand %vm3173, %vm3164
      %vm3183 = vmand %vm3174, %vm3165
      %vm3184 = vmand %vm3175, %vm3166
      %vm3185 = vmand %vm3176, %vm3167
      %vm3186 = vmand %vm3177, %vm3168
      %vm3187 = vmand %vm3178, %vm3169
      %v3188 = vadd.s32 %v3072, 9
      %v3189 = vadd.s32 %v3083, 9
      %v3190 = vadd.s32 %v3094, 9
      %v3191 = vadd.s32 %v3105, 9
      %v3192 = vadd.s32 %v3116, 9
      %v3193 = vadd.s32 %v3127, 9
      %v3194 = vadd.s32 %v3138, 9
      %v3195 = vadd.s32 %v3149, 9
      %v3196 = vadd.s32 %v3160, 9
      %v3197 = vsel %vm3179, %v3188, %v3072
      %v3198 = vsel %vm3180, %v3189, %v3083
      %v3199 = vsel %vm3181, %v3190, %v3094
      %v3200 = vsel %vm3182, %v3191, %v3105
      %v3201 = vsel %vm3183, %v3192, %v3116
      %v3202 = vsel %vm3184, %v3193, %v3127
      %v3203 = vsel %vm3185, %v3194, %v3138
      %v3204 = vsel %vm3186, %v3195, %v3149
      %v3205 = vsel %vm3187, %v3196, %v3160
      %vm3206 = vcmp.lt.s32.totalorder %v3197, 8
      %vm3207 = vcmp.lt.s32.totalorder %v3198, 8
      %vm3208 = vcmp.lt.s32.totalorder %v3199, 8
      %vm3209 = vcmp.lt.s32.totalorder %v3200, 8
      %vm3210 = vcmp.lt.s32.totalorder %v3201, 8
      %vm3211 = vcmp.lt.s32.totalorder %v3202, 8
      %vm3212 = vcmp.lt.s32.totalorder %v3203, 8
      %vm3213 = vcmp.lt.s32.totalorder %v3204, 8
      %vm3214 = vcmp.lt.s32.totalorder %v3205, 8
      %v3215 = vsel %vm3206, 1, 0
      %v3216 = vsel %vm3207, 1, 0
      %v3217 = vsel %vm3208, 1, 0
      %v3218 = vsel %vm3209, 1, 0
      %v3219 = vsel %vm3210, 1, 0
      %v3220 = vsel %vm3211, 1, 0
      %v3221 = vsel %vm3212, 1, 0
      %v3222 = vsel %vm3213, 1, 0
      %v3223 = vsel %vm3214, 1, 0
      %vm3224 = vcmp.eq.s32.totalorder %v3215, 1
      %vm3225 = vcmp.eq.s32.totalorder %v3216, 1
      %vm3226 = vcmp.eq.s32.totalorder %v3217, 1
      %vm3227 = vcmp.eq.s32.totalorder %v3218, 1
      %vm3228 = vcmp.eq.s32.totalorder %v3219, 1
      %vm3229 = vcmp.eq.s32.totalorder %v3220, 1
      %vm3230 = vcmp.eq.s32.totalorder %v3221, 1
      %vm3231 = vcmp.eq.s32.totalorder %v3222, 1
      %vm3232 = vcmp.eq.s32.totalorder %v3223, 1
      %v3233 = vsel %vm3224, %v3043, 0.0
      %v3234 = vsel %vm3225, %v3044, 0.0
      %v3235 = vsel %vm3226, %v3045, 0.0
      %v3236 = vsel %vm3227, %v3046, 0.0
      %v3237 = vsel %vm3228, %v3047, 0.0
      %v3238 = vsel %vm3229, %v3048, 0.0
      %v3239 = vsel %vm3230, %v3049, 0.0
      %v3240 = vsel %vm3231, %v3050, 0.0
      %v3241 = vsel %vm3232, %v3051, 0.0
      %v3242 = vadd.f32 %v3233, %v3234
      %v3243 = vadd.f32 %v3242, %v3235
      %v3244 = vadd.f32 %v3243, %v3236
      %v3245 = vadd.f32 %v3244, %v3237
      %v3246 = vadd.f32 %v3245, %v3238
      %v3247 = vadd.f32 %v3246, %v3239
      %v3248 = vadd.f32 %v3247, %v3240
      %v3249 = vadd.f32 %v3248, %v3241
      %v3250 = vrot.slane %v3249, 4
      %v3251 = vadd.f32 %v3249, %v3250
      %v3252 = vrot.slane %v3251, 2
      %v3253 = vadd.f32 %v3251, %v3252
      %v3254 = vrot.slane %v3253, 1
      %v3255 = vadd.f32 %v3253, %v3254
      %v3256 = vmul.f32 %v3255, 0.015625
      %v3257 = vsub.f32 %v3043, %v3256
      %v3258 = vsub.f32 %v3044, %v3256
      %v3259 = vsub.f32 %v3045, %v3256
      %v3260 = vsub.f32 %v3046, %v3256
      %v3261 = vsub.f32 %v3047, %v3256
      %v3262 = vsub.f32 %v3048, %v3256
      %v3263 = vsub.f32 %v3049, %v3256
      %v3264 = vsub.f32 %v3050, %v3256
      %v3265 = vsub.f32 %v3051, %v3256
      %v3266 = vmul.f32 %v3257, %v3257
      %v3267 = vmul.f32 %v3258, %v3258
      %v3268 = vmul.f32 %v3259, %v3259
      %v3269 = vmul.f32 %v3260, %v3260
      %v3270 = vmul.f32 %v3261, %v3261
      %v3271 = vmul.f32 %v3262, %v3262
      %v3272 = vmul.f32 %v3263, %v3263
      %v3273 = vmul.f32 %v3264, %v3264
      %v3274 = vmul.f32 %v3265, %v3265
      %v3275 = vsel %vm3224, %v3266, 0.0
      %v3276 = vsel %vm3225, %v3267, 0.0
      %v3277 = vsel %vm3226, %v3268, 0.0
      %v3278 = vsel %vm3227, %v3269, 0.0
      %v3279 = vsel %vm3228, %v3270, 0.0
      %v3280 = vsel %vm3229, %v3271, 0.0
      %v3281 = vsel %vm3230, %v3272, 0.0
      %v3282 = vsel %vm3231, %v3273, 0.0
      %v3283 = vsel %vm3232, %v3274, 0.0
      %v3284 = vadd.f32 %v3275, %v3276
      %v3285 = vadd.f32 %v3284, %v3277
      %v3286 = vadd.f32 %v3285, %v3278
      %v3287 = vadd.f32 %v3286, %v3279
      %v3288 = vadd.f32 %v3287, %v3280
      %v3289 = vadd.f32 %v3288, %v3281
      %v3290 = vadd.f32 %v3289, %v3282
      %v3291 = vadd.f32 %v3290, %v3283
      %v3292 = vrot.slane %v3291, 4
      %v3293 = vadd.f32 %v3291, %v3292
      %v3294 = vrot.slane %v3293, 2
      %v3295 = vadd.f32 %v3293, %v3294
      %v3296 = vrot.slane %v3295, 1
      %v3297 = vadd.f32 %v3295, %v3296
      %v3298 = vmul.f32 %v3297, 0.015625
      %v3299 = vadd.f32 %v3298, 1e-05
      %v3300 = vrsqrt.pop %v3299
      %v3301 = vmul.f32 %v3257, %v3300
      %v3302 = vmul.f32 %v3258, %v3300
      %v3303 = vmul.f32 %v3259, %v3300
      %v3304 = vmul.f32 %v3260, %v3300
      %v3305 = vmul.f32 %v3261, %v3300
      %v3306 = vmul.f32 %v3262, %v3300
      %v3307 = vmul.f32 %v3263, %v3300
      %v3308 = vmul.f32 %v3264, %v3300
      %v3309 = vmul.f32 %v3265, %v3300
      %vm3310 = vcmp.ge.f32.partialorder %v3301, 0.0
      %vm3311 = vcmp.ge.f32.partialorder %v3302, 0.0
      %vm3312 = vcmp.ge.f32.partialorder %v3303, 0.0
      %vm3313 = vcmp.ge.f32.partialorder %v3304, 0.0
      %vm3314 = vcmp.ge.f32.partialorder %v3305, 0.0
      %vm3315 = vcmp.ge.f32.partialorder %v3306, 0.0
      %vm3316 = vcmp.ge.f32.partialorder %v3307, 0.0
      %vm3317 = vcmp.ge.f32.partialorder %v3308, 0.0
      %vm3318 = vcmp.ge.f32.partialorder %v3309, 0.0
      %v3319 = vmul.f32 %v3301, 0.2
      %v3320 = vmul.f32 %v3302, 0.2
      %v3321 = vmul.f32 %v3303, 0.2
      %v3322 = vmul.f32 %v3304, 0.2
      %v3323 = vmul.f32 %v3305, 0.2
      %v3324 = vmul.f32 %v3306, 0.2
      %v3325 = vmul.f32 %v3307, 0.2
      %v3326 = vmul.f32 %v3308, 0.2
      %v3327 = vmul.f32 %v3309, 0.2
      %v3328 = vsel %vm3310, %v3301, %v3319
      %v3329 = vsel %vm3311, %v3302, %v3320
      %v3330 = vsel %vm3312, %v3303, %v3321
      %v3331 = vsel %vm3313, %v3304, %v3322
      %v3332 = vsel %vm3314, %v3305, %v3323
      %v3333 = vsel %vm3315, %v3306, %v3324
      %v3334 = vsel %vm3316, %v3307, %v3325
      %v3335 = vsel %vm3317, %v3308, %v3326
      %v3336 = vsel %vm3318, %v3309, %v3327
      %v3337 = vpack.c.bf16 %v3329, %v3328
      %v3338 = vpack.c.bf16 %v3331, %v3330
      %v3339 = vpack.c.bf16 %v3333, %v3332
      %v3340 = vpack.c.bf16 %v3335, %v3334
      %v3341 = vpack.c.bf16 %v3336, %v3336
      %v3347 = vunpack.c.l.b16 %v3337
      %v3348 = vunpack.c.h.b16 %v3337
      %v3349 = vunpack.c.l.b16 %v3338
      %v3350 = vunpack.c.h.b16 %v3338
      %v3351 = vunpack.c.l.b16 %v3339
      %v3352 = vunpack.c.h.b16 %v3339
      %v3353 = vunpack.c.l.b16 %v3340
      %v3354 = vunpack.c.h.b16 %v3340
      %v3355 = vunpack.c.l.b16 %v3341
      %v3356 = vpack.c.b16 %v3347, %v3347
      %v3357 = vpack.c.b16 %v3348, %v3348
      %v3358 = vpack.c.b16 %v3349, %v3349
      %v3359 = vpack.c.b16 %v3350, %v3350
      %v3360 = vpack.c.b16 %v3351, %v3351
      %v3361 = vpack.c.b16 %v3352, %v3352
      %v3362 = vpack.c.b16 %v3353, %v3353
      %v3363 = vpack.c.b16 %v3354, %v3354
      %v3364 = vpack.c.b16 %v3355, %v3355
      %3374 = vst [vmem:[%s180] sm:$0xf] %v3356
      %3375 = vst [vmem:[%s180 + $0x4] sm:$0xf] %v3357
      %3376 = vst [vmem:[%s180 + $0x8] sm:$0xf] %v3358
      %3377 = vst [vmem:[%s180 + $0xc] sm:$0xf] %v3359
      %3378 = vst [vmem:[%s180 + $0x10] sm:$0xf] %v3360
      %3379 = vst [vmem:[%s180 + $0x14] sm:$0xf] %v3361
      %3380 = vst [vmem:[%s180 + $0x18] sm:$0xf] %v3362
      %3381 = vst [vmem:[%s180 + $0x1c] sm:$0xf] %v3363
      %3382 = vst [vmem:[%s180 + $0x20] sm:$0xf] %v3364
      %p3383 = scmp.lt.s32.totalorder %s18, 1
      %s3384 = scalar_select %p3383, %s18, 1
      %p3385 = scmp.lt.s32.totalorder %s17, 0
      %s3386 = scalar_select %p3385, %s17, 0
      %s3387 = smul.addr %s3384, 9
      %s3388 = sadd.s32 %s3386, %s3387
      %s3389 = smul.addr %s3388, 4
      %s3390 = scalar_lea.vmem %s2, %s3389
      // Predicated region
      $region29: #{block_forward.1} parent=27 // pred_check
        %p3391 = pneg %p97
      $region30: #{block_forward.1} parent=27 // pred_check_branch
        %3393 = sbr.rel (%p3391) target = $region32
      $region31: #{block_forward.1} parent=27 // pred_region
        _
      $region32: #{block_forward.1} parent=27 // pred_fallthru
        _
    $region28: #{block_forward.1} parent=5 // pred_fallthru
      _
    %p3394 = scmp.le.s32.totalorder 2, %s8
    // Predicated region
    $region33: #{block_forward.1} parent=5 // pred_check
      %p3395 = pneg %p3394
    $region34: #{block_forward.1} parent=5 // pred_check_branch
      %3397 = sbr.rel (%p3395) target = $region36
    $region35: #{block_forward.1} parent=5 // pred_region
      %s3398 = ssub.s32 %s8, 2
      // Predicated region
      $region37: #{block_forward.1} parent=35 // pred_check
        %p3399 = pneg %p103
      $region38: #{block_forward.1} parent=35 // pred_check_branch
        %3401 = sbr.rel (%p3399) target = $region40
      $region39: #{block_forward.1} parent=35 // pred_region
        %p3402 = scmp.lt.s32.totalorder %s20, 1
        %s3403 = scalar_select %p3402, %s20, 1
        %p3404 = scmp.lt.s32.totalorder %s19, 0
        %s3405 = scalar_select %p3404, %s19, 0
        %s3406 = smul.addr %s3403, 9
        %s3407 = sadd.s32 %s3405, %s3406
        %s3408 = smul.addr %s3407, 4
        %s3409 = scalar_lea.vmem %s2, %s3408
      $region40: #{block_forward.1} parent=35 // pred_fallthru
        _
    $region36: #{block_forward.1} parent=5 // pred_fallthru
      _
  $region6: #{block_forward.1} parent=0 // loop_footer
    %s12 = sadd.s32 1, %s8
  $region7: #{block_forward.1} parent=0 // loop_footer_branch
    %7 = sbr.rel target = $region3
  $region8: #{block_forward.1} parent=0 // loop_exit
    _

</llo_original>
